<compile_context>
chip_gen: v6e
topology: v6e:2x2x1
jax: 0.10.0
libtpu: 0.0.40
codegen_flags: <defaults>
</compile_context>

<pallas_src>
import functools

import jax
import jax.numpy as jnp
from jax import lax
from jax.experimental import pallas as pl
from jax.experimental.pallas import tpu as pltpu

_EPS = 1e-5  # PyTorch BatchNorm2d default


# ----------------------------------------------------------------------------
# Fused Pallas kernel
# ----------------------------------------------------------------------------
def _bottleneck_kernel(x_ref, w1_ref, w2_ref, w3_ref,
                       s1_ref, b1_ref, s2_ref, b2_ref, s3_ref, b3_ref,
                       o_ref, y1p_ref, *, atrous, width):
    M = x_ref.shape[1]              # H * W (flat, lane-dense rows)
    planes = w1_ref.shape[1]
    a = atrous
    W = width
    G = ((a + 7) // 8) * 8          # sublane-aligned guard rows (>= atrous)
    top = G + a * W                 # rows before the y1 interior in the scratch

    # ---- conv1 (1x1) + bn1 + relu ------------------------------------------
    # x is already bf16 and already flat (M, Cin); no in-kernel reshape needed.
    y1 = jnp.dot(x_ref[0], w1_ref[...], preferred_element_type=jnp.float32)
    y1 = jnp.maximum(y1 * s1_ref[...] + b1_ref[...], 0.0)

    # Flat H-padded bf16 scratch layout:
    #   [G guard | a*W zero pad | H*W y1 rows | a*W zero pad | G guard]
    # Only rows [G-a, top) and [top+M, top+M+a*W+a) are ever read by the taps,
    # so only those are zeroed (re-done every step: the scratch persists
    # per-core and megacore may never hand grid step 0 to the second core).
    pad_rows = a * W + a
    zeros_pad = jnp.zeros((pad_rows, planes), jnp.bfloat16)
    y1p_ref[G - a:top, :] = zeros_pad
    y1p_ref[top + M:top + M + pad_rows, :] = zeros_pad
    y1p_ref[top:top + M, :] = y1.astype(jnp.bfloat16)   # single bf16 cast/store

    # ---- conv2 (3x3, dilation=a, padding=a) + bn2 + relu ---------------------
    # A +-a shift inside the flat (H*W) view crosses W-row boundaries exactly at
    # the positions that must read the (implicit) zero W-padding -> mask them.
    # Masks / zero slab hoisted out of the unrolled tap loop at full shape
    # (JAX does not CSE broadcast_in_dim).
    col = lax.broadcasted_iota(jnp.int32, (M, planes), 0) % W
    mask_l = col >= a               # kw=0 tap reads column w - a
    mask_r = col < (W - a)          # kw=2 tap reads column w + a
    zero_slab = jnp.zeros((M, planes), jnp.bfloat16)

    acc = None                      # pure value chain; no VMEM accumulator
    for kh in range(3):
        for kw in range(3):
            start = G + kh * a * W + (kw - 1) * a
            xs = y1p_ref[start:start + M, :]             # contiguous bf16 slab
            if kw == 0:
                xs = jnp.where(mask_l, xs, zero_slab)
            elif kw == 2:
                xs = jnp.where(mask_r, xs, zero_slab)
            t = jnp.dot(xs, w2_ref[kh, kw], preferred_element_type=jnp.float32)
            acc = t if acc is None else acc + t

    y2 = jnp.maximum(acc * s2_ref[...] + b2_ref[...], 0.0)

    # ---- conv3 (1x1) + bn3 + identity residual + relu ------------------------
    y3 = jnp.dot(y2.astype(jnp.bfloat16), w3_ref[...],
                 preferred_element_type=jnp.float32)
    # Re-read x from its input buffer for the residual (no long-lived copy).
    y3 = y3 * s3_ref[...] + b3_ref[...] + x_ref[0].astype(jnp.float32)
    o_ref[0] = jnp.maximum(y3, 0.0).astype(o_ref.dtype)


# ----------------------------------------------------------------------------
# pallas_call wrapper
# ----------------------------------------------------------------------------
def _bottleneck_pallas(x, w1, w2, w3, s1, b1, s2, b2, s3, b3, atrous, width):
    N, M, Cin = x.shape             # x is flat (N, H*W, Cin), bf16
    planes = w1.shape[1]
    Cout = w3.shape[1]
    a = atrous
    G = ((a + 7) // 8) * 8
    R = M + 2 * (G + a * width)

    # Explicit VMEM budget: double-buffered bf16 x/out tiles + (double-buffered)
    # bf16 weights + bf16 y1p scratch + f32 value-chain temporaries, 2x
    # headroom, capped by the actual chip's VMEM (generation-aware).
    weight_bytes = 2 * (Cin * planes + 9 * planes * planes + planes * Cout)  # bf16
    act_bytes = 2 * M * (Cin + Cout)                                         # bf16
    scratch_bytes = 2 * R * planes                                           # bf16
    temp_bytes = 4 * M * (2 * planes + Cout)                                 # f32 temps
    sb_bytes = 4 * (4 * planes + 2 * Cout)
    tile_bytes = (2 * act_bytes + 2 * weight_bytes + scratch_bytes
                  + temp_bytes + sb_bytes)
    try:
        vmem_cap = int(getattr(pltpu.get_tpu_info(), "vmem_capacity_bytes",
                               64 * 2 ** 20))
    except Exception:
        vmem_cap = 64 * 2 ** 20
    vmem_limit = int(min(max(2 * tile_bytes, 32 * 2 ** 20), int(0.9 * vmem_cap)))

    kernel = functools.partial(_bottleneck_kernel, atrous=a, width=width)
    return pl.pallas_call(
        kernel,
        out_shape=jax.ShapeDtypeStruct((N, M, Cout), jnp.bfloat16),
        grid_spec=pltpu.PrefetchScalarGridSpec(
            num_scalar_prefetch=0,
            grid=(N,),
            in_specs=[
                pl.BlockSpec((1, M, Cin), lambda n: (n, 0, 0)),            # x
                pl.BlockSpec((Cin, planes), lambda n: (0, 0)),             # w1 (resident)
                pl.BlockSpec((3, 3, planes, planes), lambda n: (0, 0, 0, 0)),  # w2
                pl.BlockSpec((planes, Cout), lambda n: (0, 0)),            # w3
                pl.BlockSpec((1, planes), lambda n: (0, 0)),               # s1
                pl.BlockSpec((1, planes), lambda n: (0, 0)),               # b1
                pl.BlockSpec((1, planes), lambda n: (0, 0)),               # s2
                pl.BlockSpec((1, planes), lambda n: (0, 0)),               # b2
                pl.BlockSpec((1, Cout), lambda n: (0, 0)),                 # s3
                pl.BlockSpec((1, Cout), lambda n: (0, 0)),                 # b3
            ],
            out_specs=pl.BlockSpec((1, M, Cout), lambda n: (n, 0, 0)),
            scratch_shapes=[
                pltpu.VMEM((R, planes), jnp.bfloat16),   # flat H-padded y1 (bf16)
            ],
        ),
        compiler_params=pltpu.CompilerParams(
            dimension_semantics=("parallel",),
            vmem_limit_bytes=vmem_limit,
        ),
    )(x, w1, w2, w3, s1, b1, s2, b2, s3, b3)


# ----------------------------------------------------------------------------
# Bottleneck forward (NCHW in / NCHW out, like the PyTorch module)
# ----------------------------------------------------------------------------
def _fold_bn(g, b, m, v):
    s = g / jnp.sqrt(v + _EPS)
    return (s.reshape(1, -1).astype(jnp.float32),
            (b - m * s).reshape(1, -1).astype(jnp.float32))


@functools.partial(jax.jit, static_argnames=("atrous",))
def bottleneck_forward(x_nchw, p, atrous=1):
    N, Cin, H, W = x_nchw.shape
    Cout = p["w3"].shape[1]
    assert Cin == Cout, "identity residual requires inplanes == planes*4"

    # NCHW -> NHWC -> flat lane-dense (N, H*W, C); bf16 through HBM (the kernel
    # is HBM-bound once weights are resident).
    x = jnp.transpose(x_nchw, (0, 2, 3, 1)).astype(jnp.bfloat16).reshape(N, H * W, Cin)

    s1, b1 = _fold_bn(p["g1"], p["b1"], p["m1"], p["v1"])
    s2, b2 = _fold_bn(p["g2"], p["b2"], p["m2"], p["v2"])
    s3, b3 = _fold_bn(p["g3"], p["b3"], p["m3"], p["v3"])

    out = _bottleneck_pallas(
        x,
        p["w1"].astype(jnp.bfloat16),
        p["w2"].astype(jnp.bfloat16),
        p["w3"].astype(jnp.bfloat16),
        s1, b1, s2, b2, s3, b3, atrous, W)          # (N, H*W, Cout) bf16
    out = out.reshape(N, H, W, Cout)
    return jnp.transpose(out, (0, 3, 1, 2))          # NHWC -> NCHW (bf16)


# ----------------------------------------------------------------------------
# Deterministic parameter init (matches the module's __init__ shapes)
# ----------------------------------------------------------------------------
def init_params(key, inplanes, planes):
    exp = 4
    ks = jax.random.split(key, 15)
    p = {
        # conv weights stored matmul/HWIO-ready
        "w1": 0.1 * jax.random.normal(ks[0], (inplanes, planes), jnp.float32),
        "w2": 0.1 * jax.random.normal(ks[1], (3, 3, planes, planes), jnp.float32),
        "w3": 0.1 * jax.random.normal(ks[2], (planes, planes * exp), jnp.float32),
    }
    for i, c in zip((1, 2, 3), (planes, planes, planes * exp)):
        p[f"g{i}"] = 1.0 + 0.1 * jax.random.normal(ks[2 + i], (c,), jnp.float32)
        p[f"b{i}"] = 0.1 * jax.random.normal(ks[5 + i], (c,), jnp.float32)
        p[f"m{i}"] = 0.1 * jax.random.normal(ks[8 + i], (c,), jnp.float32)
        p[f"v{i}"] = 0.5 + jax.nn.sigmoid(
            jax.random.normal(ks[11 + i], (c,), jnp.float32))
    return p


# ----------------------------------------------------------------------------
# Pure-JAX f32 reference (matches the PyTorch forward in eval mode)
# ----------------------------------------------------------------------------
def bottleneck_ref(x_nchw, p, atrous=1):
    x = jnp.transpose(x_nchw, (0, 2, 3, 1)).astype(jnp.float32)
    dn = ("NHWC", "HWIO", "NHWC")

    def bn(y, i):
        return (y - p[f"m{i}"]) / jnp.sqrt(p[f"v{i}"] + _EPS) * p[f"g{i}"] + p[f"b{i}"]

    y = lax.conv_general_dilated(
        x, p["w1"].reshape(1, 1, *p["w1"].shape), (1, 1), "VALID",
        dimension_numbers=dn)
    y = jax.nn.relu(bn(y, 1))
    y = lax.conv_general_dilated(
        y, p["w2"], (1, 1), [(atrous, atrous), (atrous, atrous)],
        rhs_dilation=(atrous, atrous), dimension_numbers=dn)
    y = jax.nn.relu(bn(y, 2))
    y = lax.conv_general_dilated(
        y, p["w3"].reshape(1, 1, *p["w3"].shape), (1, 1), "VALID",
        dimension_numbers=dn)
    y = jax.nn.relu(bn(y, 3) + x)
    return jnp.transpose(y, (0, 3, 1, 2))


if __name__ == "__main__":
    key = jax.random.PRNGKey(0)
    k_x, k_p = jax.random.split(key)

    # NOTE: demo shapes are deliberately tiny; real tuning should use
    # lane-dense channel counts (multiples of 128) per the perf review.
    N, H, W = 2, 16, 16
    planes = 4
    inplanes = planes * 4  # identity-residual (downsample=None) configuration

    x_nchw = jax.random.normal(k_x, (N, inplanes, H, W), jnp.float32)
    params = init_params(k_p, inplanes, planes)

    for atrous in (1, 2):
        out = jax.block_until_ready(bottleneck_forward(x_nchw, params, atrous=atrous))
        ref = bottleneck_ref(x_nchw, params, atrous=atrous)
        assert out.shape == (N, inplanes, H, W)
        # bf16 MXU inputs / bf16 activation I/O vs f32 reference -> relaxed
        # tolerance; a real indexing bug would produce O(1) errors.
        assert jnp.allclose(out.astype(jnp.float32), ref, atol=5e-2, rtol=5e-2), \
            f"mismatch (atrous={atrous})"

    print("KERNEL_OK")
</pallas_src>

<mosaic_0001>
module attributes {stable_mosaic.version = 11 : i64} {
  func.func @_bottleneck_kernel(%arg0: i32, %arg1: memref<1x256x16xbf16, #tpu.memory_space<vmem>>, %arg2: memref<16x4xbf16, #tpu.memory_space<vmem>>, %arg3: memref<3x3x4x4xbf16, #tpu.memory_space<vmem>>, %arg4: memref<4x16xbf16, #tpu.memory_space<vmem>>, %arg5: memref<1x4xf32, #tpu.memory_space<vmem>>, %arg6: memref<1x4xf32, #tpu.memory_space<vmem>>, %arg7: memref<1x4xf32, #tpu.memory_space<vmem>>, %arg8: memref<1x4xf32, #tpu.memory_space<vmem>>, %arg9: memref<1x16xf32, #tpu.memory_space<vmem>>, %arg10: memref<1x16xf32, #tpu.memory_space<vmem>>, %arg11: memref<1x256x16xbf16, #tpu.memory_space<vmem>>, %arg12: memref<304x4xbf16, #tpu.memory_space<vmem>>) attributes {dimension_semantics = [#tpu.dimension_semantics<parallel>], iteration_bounds = array<i64: 2>, scalar_prefetch = 0 : i64, scratch_operands = 1 : i64, tpu.core_type = #tpu.core_type<tc>, window_params = [{transform_indices = @transform_0, window_bounds = array<i64: 1, 256, 16>}, {pipeline_mode = #tpu.pipeline_mode<synchronous>, transform_indices = @transform_1, window_bounds = array<i64: 16, 4>}, {pipeline_mode = #tpu.pipeline_mode<synchronous>, transform_indices = @transform_2, window_bounds = array<i64: 3, 3, 4, 4>}, {pipeline_mode = #tpu.pipeline_mode<synchronous>, transform_indices = @transform_3, window_bounds = array<i64: 4, 16>}, {pipeline_mode = #tpu.pipeline_mode<synchronous>, transform_indices = @transform_4, window_bounds = array<i64: 1, 4>}, {pipeline_mode = #tpu.pipeline_mode<synchronous>, transform_indices = @transform_5, window_bounds = array<i64: 1, 4>}, {pipeline_mode = #tpu.pipeline_mode<synchronous>, transform_indices = @transform_6, window_bounds = array<i64: 1, 4>}, {pipeline_mode = #tpu.pipeline_mode<synchronous>, transform_indices = @transform_7, window_bounds = array<i64: 1, 4>}, {pipeline_mode = #tpu.pipeline_mode<synchronous>, transform_indices = @transform_8, window_bounds = array<i64: 1, 16>}, {pipeline_mode = #tpu.pipeline_mode<synchronous>, transform_indices = @transform_9, window_bounds = array<i64: 1, 16>}, {transform_indices = @transform_10, window_bounds = array<i64: 1, 256, 16>}]} {
    %c0 = arith.constant 0 : index
    %c0_0 = arith.constant 0 : index
    %c0_1 = arith.constant 0 : index
    %0 = vector.load %arg1[%c0, %c0_0, %c0_1] : memref<1x256x16xbf16, #tpu.memory_space<vmem>>, vector<1x256x16xbf16>
    %1 = vector.shape_cast %0 : vector<1x256x16xbf16> to vector<256x16xbf16>
    %c0_2 = arith.constant 0 : index
    %c0_3 = arith.constant 0 : index
    %2 = vector.load %arg2[%c0_2, %c0_3] : memref<16x4xbf16, #tpu.memory_space<vmem>>, vector<16x4xbf16>
    %cst = arith.constant dense<0.000000e+00> : vector<256x4xf32>
    %3 = tpu.matmul %1, %2, %cst {dimension_numbers = #tpu.dot_dimension_numbers<[1], [0], [0], [1], [0, 0, 1, 1], [], []>} : vector<256x16xbf16>, vector<16x4xbf16>, vector<256x4xf32> -> vector<256x4xf32>
    %c0_4 = arith.constant 0 : index
    %c0_5 = arith.constant 0 : index
    %4 = vector.load %arg5[%c0_4, %c0_5] : memref<1x4xf32, #tpu.memory_space<vmem>>, vector<1x4xf32>
    %5 = vector.broadcast %4 : vector<1x4xf32> to vector<256x4xf32>
    %6 = arith.mulf %3, %5 : vector<256x4xf32>
    %c0_6 = arith.constant 0 : index
    %c0_7 = arith.constant 0 : index
    %7 = vector.load %arg6[%c0_6, %c0_7] : memref<1x4xf32, #tpu.memory_space<vmem>>, vector<1x4xf32>
    %8 = vector.broadcast %7 : vector<1x4xf32> to vector<256x4xf32>
    %9 = arith.addf %6, %8 : vector<256x4xf32>
    %cst_8 = arith.constant 0.000000e+00 : f32
    %10 = vector.broadcast %cst_8 : f32 to vector<256x4xf32>
    %11 = arith.maximumf %9, %10 : vector<256x4xf32>
    %cst_9 = arith.constant 0.000000e+00 : bf16
    %12 = vector.broadcast %cst_9 : bf16 to vector<17x4xbf16>
    %c7 = arith.constant 7 : index
    %c0_10 = arith.constant 0 : index
    %13 = vector.load %arg12[%c7, %c0_10] : memref<304x4xbf16, #tpu.memory_space<vmem>>, vector<17x4xbf16>
    tpu.vector_store %arg12[%c7, %c0_10], %12 {strides = array<i32>} : memref<304x4xbf16, #tpu.memory_space<vmem>>, vector<17x4xbf16>,
    %c280 = arith.constant 280 : index
    %c0_11 = arith.constant 0 : index
    %14 = vector.load %arg12[%c280, %c0_11] : memref<304x4xbf16, #tpu.memory_space<vmem>>, vector<17x4xbf16>
    tpu.vector_store %arg12[%c280, %c0_11], %12 {strides = array<i32>} : memref<304x4xbf16, #tpu.memory_space<vmem>>, vector<17x4xbf16>,
    %15 = arith.truncf %11 : vector<256x4xf32> to vector<256x4xbf16>
    %c24 = arith.constant 24 : index
    %c0_12 = arith.constant 0 : index
    %16 = vector.load %arg12[%c24, %c0_12] : memref<304x4xbf16, #tpu.memory_space<vmem>>, vector<256x4xbf16>
    tpu.vector_store %arg12[%c24, %c0_12], %15 {strides = array<i32>} : memref<304x4xbf16, #tpu.memory_space<vmem>>, vector<256x4xbf16>,
    %17 = tpu.iota {dimensions = array<i32: 0>} : vector<256x4xi32>
    %c16_i32 = arith.constant 16 : i32
    %c0_i32 = arith.constant 0 : i32
    %18 = arith.cmpi eq, %c16_i32, %c0_i32 : i32
    %c1_i32 = arith.constant 1 : i32
    %19 = arith.select %18, %c1_i32, %c16_i32 : i32
    %20 = vector.broadcast %19 : i32 to vector<256x4xi32>
    %21 = arith.remsi %17, %20 : vector<256x4xi32>
    %c0_i32_13 = arith.constant 0 : i32
    %22 = vector.broadcast %c0_i32_13 : i32 to vector<256x4xi32>
    %23 = arith.cmpi ne, %21, %22 : vector<256x4xi32>
    %c0_i32_14 = arith.constant 0 : i32
    %24 = vector.broadcast %c0_i32_14 : i32 to vector<256x4xi32>
    %25 = arith.cmpi slt, %21, %24 : vector<256x4xi32>
    %c0_i32_15 = arith.constant 0 : i32
    %26 = arith.cmpi slt, %19, %c0_i32_15 : i32
    %27 = vector.broadcast %26 : i1 to vector<256x4xi1>
    %28 = vector.broadcast %27 : vector<256x4xi1> to vector<256x4xi1>
    %29 = arith.xori %25, %28 : vector<256x4xi1>
    %30 = arith.andi %29, %23 : vector<256x4xi1>
    %31 = vector.broadcast %19 : i32 to vector<256x4xi32>
    %32 = arith.addi %21, %31 : vector<256x4xi32>
    %33 = arith.select %30, %32, %21 : vector<256x4xi1>, vector<256x4xi32>
    %c1_i32_16 = arith.constant 1 : i32
    %34 = vector.broadcast %c1_i32_16 : i32 to vector<256x4xi32>
    %35 = arith.cmpi sge, %33, %34 : vector<256x4xi32>
    %c15_i32 = arith.constant 15 : i32
    %36 = vector.broadcast %c15_i32 : i32 to vector<256x4xi32>
    %37 = arith.cmpi slt, %33, %36 : vector<256x4xi32>
    %cst_17 = arith.constant 0.000000e+00 : bf16
    %38 = vector.broadcast %cst_17 : bf16 to vector<256x4xbf16>
    %c7_18 = arith.constant 7 : index
    %c0_19 = arith.constant 0 : index
    %39 = vector.load %arg12[%c7_18, %c0_19] : memref<304x4xbf16, #tpu.memory_space<vmem>>, vector<256x4xbf16>
    %40 = arith.select %35, %39, %38 : vector<256x4xi1>, vector<256x4xbf16>
    %c0_20 = arith.constant 0 : index
    %c0_21 = arith.constant 0 : index
    %c0_22 = arith.constant 0 : index
    %c0_23 = arith.constant 0 : index
    %41 = vector.load %arg3[%c0_20, %c0_21, %c0_22, %c0_23] : memref<3x3x4x4xbf16, #tpu.memory_space<vmem>>, vector<1x1x4x4xbf16>
    %42 = vector.shape_cast %41 : vector<1x1x4x4xbf16> to vector<4x4xbf16>
    %cst_24 = arith.constant dense<0.000000e+00> : vector<256x4xf32>
    %43 = tpu.matmul %40, %42, %cst_24 {dimension_numbers = #tpu.dot_dimension_numbers<[1], [0], [0], [1], [0, 0, 1, 1], [], []>} : vector<256x4xbf16>, vector<4x4xbf16>, vector<256x4xf32> -> vector<256x4xf32>
    %c8 = arith.constant 8 : index
    %c0_25 = arith.constant 0 : index
    %44 = vector.load %arg12[%c8, %c0_25] : memref<304x4xbf16, #tpu.memory_space<vmem>>, vector<256x4xbf16>
    %c0_26 = arith.constant 0 : index
    %c1 = arith.constant 1 : index
    %c0_27 = arith.constant 0 : index
    %c0_28 = arith.constant 0 : index
    %45 = vector.load %arg3[%c0_26, %c1, %c0_27, %c0_28] : memref<3x3x4x4xbf16, #tpu.memory_space<vmem>>, vector<1x1x4x4xbf16>
    %46 = vector.shape_cast %45 : vector<1x1x4x4xbf16> to vector<4x4xbf16>
    %cst_29 = arith.constant dense<0.000000e+00> : vector<256x4xf32>
    %47 = tpu.matmul %44, %46, %cst_29 {dimension_numbers = #tpu.dot_dimension_numbers<[1], [0], [0], [1], [0, 0, 1, 1], [], []>} : vector<256x4xbf16>, vector<4x4xbf16>, vector<256x4xf32> -> vector<256x4xf32>
    %48 = arith.addf %43, %47 : vector<256x4xf32>
    %c9 = arith.constant 9 : index
    %c0_30 = arith.constant 0 : index
    %49 = vector.load %arg12[%c9, %c0_30] : memref<304x4xbf16, #tpu.memory_space<vmem>>, vector<256x4xbf16>
    %50 = arith.select %37, %49, %38 : vector<256x4xi1>, vector<256x4xbf16>
    %c0_31 = arith.constant 0 : index
    %c2 = arith.constant 2 : index
    %c0_32 = arith.constant 0 : index
    %c0_33 = arith.constant 0 : index
    %51 = vector.load %arg3[%c0_31, %c2, %c0_32, %c0_33] : memref<3x3x4x4xbf16, #tpu.memory_space<vmem>>, vector<1x1x4x4xbf16>
    %52 = vector.shape_cast %51 : vector<1x1x4x4xbf16> to vector<4x4xbf16>
    %cst_34 = arith.constant dense<0.000000e+00> : vector<256x4xf32>
    %53 = tpu.matmul %50, %52, %cst_34 {dimension_numbers = #tpu.dot_dimension_numbers<[1], [0], [0], [1], [0, 0, 1, 1], [], []>} : vector<256x4xbf16>, vector<4x4xbf16>, vector<256x4xf32> -> vector<256x4xf32>
    %54 = arith.addf %48, %53 : vector<256x4xf32>
    %c23 = arith.constant 23 : index
    %c0_35 = arith.constant 0 : index
    %55 = vector.load %arg12[%c23, %c0_35] : memref<304x4xbf16, #tpu.memory_space<vmem>>, vector<256x4xbf16>
    %56 = arith.select %35, %55, %38 : vector<256x4xi1>, vector<256x4xbf16>
    %c1_36 = arith.constant 1 : index
    %c0_37 = arith.constant 0 : index
    %c0_38 = arith.constant 0 : index
    %c0_39 = arith.constant 0 : index
    %57 = vector.load %arg3[%c1_36, %c0_37, %c0_38, %c0_39] : memref<3x3x4x4xbf16, #tpu.memory_space<vmem>>, vector<1x1x4x4xbf16>
    %58 = vector.shape_cast %57 : vector<1x1x4x4xbf16> to vector<4x4xbf16>
    %cst_40 = arith.constant dense<0.000000e+00> : vector<256x4xf32>
    %59 = tpu.matmul %56, %58, %cst_40 {dimension_numbers = #tpu.dot_dimension_numbers<[1], [0], [0], [1], [0, 0, 1, 1], [], []>} : vector<256x4xbf16>, vector<4x4xbf16>, vector<256x4xf32> -> vector<256x4xf32>
    %60 = arith.addf %54, %59 : vector<256x4xf32>
    %c24_41 = arith.constant 24 : index
    %c0_42 = arith.constant 0 : index
    %61 = vector.load %arg12[%c24_41, %c0_42] : memref<304x4xbf16, #tpu.memory_space<vmem>>, vector<256x4xbf16>
    %c1_43 = arith.constant 1 : index
    %c1_44 = arith.constant 1 : index
    %c0_45 = arith.constant 0 : index
    %c0_46 = arith.constant 0 : index
    %62 = vector.load %arg3[%c1_43, %c1_44, %c0_45, %c0_46] : memref<3x3x4x4xbf16, #tpu.memory_space<vmem>>, vector<1x1x4x4xbf16>
    %63 = vector.shape_cast %62 : vector<1x1x4x4xbf16> to vector<4x4xbf16>
    %cst_47 = arith.constant dense<0.000000e+00> : vector<256x4xf32>
    %64 = tpu.matmul %61, %63, %cst_47 {dimension_numbers = #tpu.dot_dimension_numbers<[1], [0], [0], [1], [0, 0, 1, 1], [], []>} : vector<256x4xbf16>, vector<4x4xbf16>, vector<256x4xf32> -> vector<256x4xf32>
    %65 = arith.addf %60, %64 : vector<256x4xf32>
    %c25 = arith.constant 25 : index
    %c0_48 = arith.constant 0 : index
    %66 = vector.load %arg12[%c25, %c0_48] : memref<304x4xbf16, #tpu.memory_space<vmem>>, vector<256x4xbf16>
    %67 = arith.select %37, %66, %38 : vector<256x4xi1>, vector<256x4xbf16>
    %c1_49 = arith.constant 1 : index
    %c2_50 = arith.constant 2 : index
    %c0_51 = arith.constant 0 : index
    %c0_52 = arith.constant 0 : index
    %68 = vector.load %arg3[%c1_49, %c2_50, %c0_51, %c0_52] : memref<3x3x4x4xbf16, #tpu.memory_space<vmem>>, vector<1x1x4x4xbf16>
    %69 = vector.shape_cast %68 : vector<1x1x4x4xbf16> to vector<4x4xbf16>
    %cst_53 = arith.constant dense<0.000000e+00> : vector<256x4xf32>
    %70 = tpu.matmul %67, %69, %cst_53 {dimension_numbers = #tpu.dot_dimension_numbers<[1], [0], [0], [1], [0, 0, 1, 1], [], []>} : vector<256x4xbf16>, vector<4x4xbf16>, vector<256x4xf32> -> vector<256x4xf32>
    %71 = arith.addf %65, %70 : vector<256x4xf32>
    %c39 = arith.constant 39 : index
    %c0_54 = arith.constant 0 : index
    %72 = vector.load %arg12[%c39, %c0_54] : memref<304x4xbf16, #tpu.memory_space<vmem>>, vector<256x4xbf16>
    %73 = arith.select %35, %72, %38 : vector<256x4xi1>, vector<256x4xbf16>
    %c2_55 = arith.constant 2 : index
    %c0_56 = arith.constant 0 : index
    %c0_57 = arith.constant 0 : index
    %c0_58 = arith.constant 0 : index
    %74 = vector.load %arg3[%c2_55, %c0_56, %c0_57, %c0_58] : memref<3x3x4x4xbf16, #tpu.memory_space<vmem>>, vector<1x1x4x4xbf16>
    %75 = vector.shape_cast %74 : vector<1x1x4x4xbf16> to vector<4x4xbf16>
    %cst_59 = arith.constant dense<0.000000e+00> : vector<256x4xf32>
    %76 = tpu.matmul %73, %75, %cst_59 {dimension_numbers = #tpu.dot_dimension_numbers<[1], [0], [0], [1], [0, 0, 1, 1], [], []>} : vector<256x4xbf16>, vector<4x4xbf16>, vector<256x4xf32> -> vector<256x4xf32>
    %77 = arith.addf %71, %76 : vector<256x4xf32>
    %c40 = arith.constant 40 : index
    %c0_60 = arith.constant 0 : index
    %78 = vector.load %arg12[%c40, %c0_60] : memref<304x4xbf16, #tpu.memory_space<vmem>>, vector<256x4xbf16>
    %c2_61 = arith.constant 2 : index
    %c1_62 = arith.constant 1 : index
    %c0_63 = arith.constant 0 : index
    %c0_64 = arith.constant 0 : index
    %79 = vector.load %arg3[%c2_61, %c1_62, %c0_63, %c0_64] : memref<3x3x4x4xbf16, #tpu.memory_space<vmem>>, vector<1x1x4x4xbf16>
    %80 = vector.shape_cast %79 : vector<1x1x4x4xbf16> to vector<4x4xbf16>
    %cst_65 = arith.constant dense<0.000000e+00> : vector<256x4xf32>
    %81 = tpu.matmul %78, %80, %cst_65 {dimension_numbers = #tpu.dot_dimension_numbers<[1], [0], [0], [1], [0, 0, 1, 1], [], []>} : vector<256x4xbf16>, vector<4x4xbf16>, vector<256x4xf32> -> vector<256x4xf32>
    %82 = arith.addf %77, %81 : vector<256x4xf32>
    %c41 = arith.constant 41 : index
    %c0_66 = arith.constant 0 : index
    %83 = vector.load %arg12[%c41, %c0_66] : memref<304x4xbf16, #tpu.memory_space<vmem>>, vector<256x4xbf16>
    %84 = arith.select %37, %83, %38 : vector<256x4xi1>, vector<256x4xbf16>
    %c2_67 = arith.constant 2 : index
    %c2_68 = arith.constant 2 : index
    %c0_69 = arith.constant 0 : index
    %c0_70 = arith.constant 0 : index
    %85 = vector.load %arg3[%c2_67, %c2_68, %c0_69, %c0_70] : memref<3x3x4x4xbf16, #tpu.memory_space<vmem>>, vector<1x1x4x4xbf16>
    %86 = vector.shape_cast %85 : vector<1x1x4x4xbf16> to vector<4x4xbf16>
    %cst_71 = arith.constant dense<0.000000e+00> : vector<256x4xf32>
    %87 = tpu.matmul %84, %86, %cst_71 {dimension_numbers = #tpu.dot_dimension_numbers<[1], [0], [0], [1], [0, 0, 1, 1], [], []>} : vector<256x4xbf16>, vector<4x4xbf16>, vector<256x4xf32> -> vector<256x4xf32>
    %88 = arith.addf %82, %87 : vector<256x4xf32>
    %c0_72 = arith.constant 0 : index
    %c0_73 = arith.constant 0 : index
    %89 = vector.load %arg7[%c0_72, %c0_73] : memref<1x4xf32, #tpu.memory_space<vmem>>, vector<1x4xf32>
    %90 = vector.broadcast %89 : vector<1x4xf32> to vector<256x4xf32>
    %91 = arith.mulf %88, %90 : vector<256x4xf32>
    %c0_74 = arith.constant 0 : index
    %c0_75 = arith.constant 0 : index
    %92 = vector.load %arg8[%c0_74, %c0_75] : memref<1x4xf32, #tpu.memory_space<vmem>>, vector<1x4xf32>
    %93 = vector.broadcast %92 : vector<1x4xf32> to vector<256x4xf32>
    %94 = arith.addf %91, %93 : vector<256x4xf32>
    %cst_76 = arith.constant 0.000000e+00 : f32
    %95 = vector.broadcast %cst_76 : f32 to vector<256x4xf32>
    %96 = arith.maximumf %94, %95 : vector<256x4xf32>
    %97 = arith.truncf %96 : vector<256x4xf32> to vector<256x4xbf16>
    %c0_77 = arith.constant 0 : index
    %c0_78 = arith.constant 0 : index
    %98 = vector.load %arg4[%c0_77, %c0_78] : memref<4x16xbf16, #tpu.memory_space<vmem>>, vector<4x16xbf16>
    %cst_79 = arith.constant dense<0.000000e+00> : vector<256x16xf32>
    %99 = tpu.matmul %97, %98, %cst_79 {dimension_numbers = #tpu.dot_dimension_numbers<[1], [0], [0], [1], [0, 0, 1, 1], [], []>} : vector<256x4xbf16>, vector<4x16xbf16>, vector<256x16xf32> -> vector<256x16xf32>
    %c0_80 = arith.constant 0 : index
    %c0_81 = arith.constant 0 : index
    %100 = vector.load %arg9[%c0_80, %c0_81] : memref<1x16xf32, #tpu.memory_space<vmem>>, vector<1x16xf32>
    %101 = vector.broadcast %100 : vector<1x16xf32> to vector<256x16xf32>
    %102 = arith.mulf %99, %101 : vector<256x16xf32>
    %c0_82 = arith.constant 0 : index
    %c0_83 = arith.constant 0 : index
    %103 = vector.load %arg10[%c0_82, %c0_83] : memref<1x16xf32, #tpu.memory_space<vmem>>, vector<1x16xf32>
    %104 = vector.broadcast %103 : vector<1x16xf32> to vector<256x16xf32>
    %105 = arith.addf %102, %104 : vector<256x16xf32>
    %c0_84 = arith.constant 0 : index
    %c0_85 = arith.constant 0 : index
    %c0_86 = arith.constant 0 : index
    %106 = vector.load %arg1[%c0_84, %c0_85, %c0_86] : memref<1x256x16xbf16, #tpu.memory_space<vmem>>, vector<1x256x16xbf16>
    %107 = vector.shape_cast %106 : vector<1x256x16xbf16> to vector<256x16xbf16>
    %108 = arith.extf %107 : vector<256x16xbf16> to vector<256x16xf32>
    %109 = arith.addf %105, %108 : vector<256x16xf32>
    %cst_87 = arith.constant 0.000000e+00 : f32
    %110 = vector.broadcast %cst_87 : f32 to vector<256x16xf32>
    %111 = arith.maximumf %109, %110 : vector<256x16xf32>
    %112 = arith.truncf %111 : vector<256x16xf32> to vector<256x16xbf16>
    %c0_88 = arith.constant 0 : index
    %c0_89 = arith.constant 0 : index
    %c0_90 = arith.constant 0 : index
    %113 = vector.load %arg11[%c0_88, %c0_89, %c0_90] : memref<1x256x16xbf16, #tpu.memory_space<vmem>>, vector<1x256x16xbf16>
    %114 = vector.shape_cast %113 : vector<1x256x16xbf16> to vector<256x16xbf16>
    %115 = vector.shape_cast %112 : vector<256x16xbf16> to vector<1x256x16xbf16>
    tpu.vector_store %arg11[%c0_88, %c0_89, %c0_90], %115 {strides = array<i32>} : memref<1x256x16xbf16, #tpu.memory_space<vmem>>, vector<1x256x16xbf16>,
    return
  }
  func.func @transform_0(%arg0: i32) -> (i32, i32, i32) {
    %c0_i32 = arith.constant 0 : i32
    %c0_i32_0 = arith.constant 0 : i32
    %c0_i32_1 = arith.constant 0 : i32
    return %arg0, %c0_i32, %c0_i32_0 : i32, i32, i32
  }
  func.func @transform_1(%arg0: i32) -> (i32, i32) {
    %c0_i32 = arith.constant 0 : i32
    %c0_i32_0 = arith.constant 0 : i32
    %c0_i32_1 = arith.constant 0 : i32
    return %c0_i32, %c0_i32_0 : i32, i32
  }
  func.func @transform_2(%arg0: i32) -> (i32, i32, i32, i32) {
    %c0_i32 = arith.constant 0 : i32
    %c0_i32_0 = arith.constant 0 : i32
    %c0_i32_1 = arith.constant 0 : i32
    %c0_i32_2 = arith.constant 0 : i32
    %c0_i32_3 = arith.constant 0 : i32
    return %c0_i32, %c0_i32_0, %c0_i32_1, %c0_i32_2 : i32, i32, i32, i32
  }
  func.func @transform_3(%arg0: i32) -> (i32, i32) {
    %c0_i32 = arith.constant 0 : i32
    %c0_i32_0 = arith.constant 0 : i32
    %c0_i32_1 = arith.constant 0 : i32
    return %c0_i32, %c0_i32_0 : i32, i32
  }
  func.func @transform_4(%arg0: i32) -> (i32, i32) {
    %c0_i32 = arith.constant 0 : i32
    %c0_i32_0 = arith.constant 0 : i32
    %c0_i32_1 = arith.constant 0 : i32
    return %c0_i32, %c0_i32_0 : i32, i32
  }
  func.func @transform_5(%arg0: i32) -> (i32, i32) {
    %c0_i32 = arith.constant 0 : i32
    %c0_i32_0 = arith.constant 0 : i32
    %c0_i32_1 = arith.constant 0 : i32
    return %c0_i32, %c0_i32_0 : i32, i32
  }
  func.func @transform_6(%arg0: i32) -> (i32, i32) {
    %c0_i32 = arith.constant 0 : i32
    %c0_i32_0 = arith.constant 0 : i32
    %c0_i32_1 = arith.constant 0 : i32
    return %c0_i32, %c0_i32_0 : i32, i32
  }
  func.func @transform_7(%arg0: i32) -> (i32, i32) {
    %c0_i32 = arith.constant 0 : i32
    %c0_i32_0 = arith.constant 0 : i32
    %c0_i32_1 = arith.constant 0 : i32
    return %c0_i32, %c0_i32_0 : i32, i32
  }
  func.func @transform_8(%arg0: i32) -> (i32, i32) {
    %c0_i32 = arith.constant 0 : i32
    %c0_i32_0 = arith.constant 0 : i32
    %c0_i32_1 = arith.constant 0 : i32
    return %c0_i32, %c0_i32_0 : i32, i32
  }
  func.func @transform_9(%arg0: i32) -> (i32, i32) {
    %c0_i32 = arith.constant 0 : i32
    %c0_i32_0 = arith.constant 0 : i32
    %c0_i32_1 = arith.constant 0 : i32
    return %c0_i32, %c0_i32_0 : i32, i32
  }
  func.func @transform_10(%arg0: i32) -> (i32, i32, i32) {
    %c0_i32 = arith.constant 0 : i32
    %c0_i32_0 = arith.constant 0 : i32
    %c0_i32_1 = arith.constant 0 : i32
    return %arg0, %c0_i32, %c0_i32_0 : i32, i32, i32
  }
}

</mosaic_0001>

<llo_original>
// kernel: bottleneck_forward.1
$region0: #{bottleneck_forward.1}
  #allocation0 [shape = 'u32[]', space=smem, size = 0x4, offset = 0x4, fixed_abs, tag = 'smem constant byte address 0x4 - core index']
  #allocation1 [shape = 'u32[144,128]{1,0:T(1,128)}', space=vmem, size = 0x12000, scoped, tag = 'internal scratch']
  #allocation2 [shape = 'bf16[304,4]{1,0:T(8,128)(2,1)}', space=vmem, size = 0x13000, scoped, tag = 'scratch operand']
  %s0 = inlined_call_operand.vmem [shape: bf16[2,256,16], index: 0, kind: input, shape index: {}]
  %s1 = inlined_call_operand.vmem [shape: bf16[16,4], index: 1, kind: input, shape index: {}]
  %s2 = inlined_call_operand.vmem [shape: bf16[3,3,4,4], index: 2, kind: input, shape index: {}]
  %s3 = inlined_call_operand.vmem [shape: bf16[4,16], index: 3, kind: input, shape index: {}]
  %s4 = inlined_call_operand.vmem [shape: f32[1,4], index: 4, kind: input, shape index: {}]
  %s5 = inlined_call_operand.vmem [shape: f32[1,4], index: 5, kind: input, shape index: {}]
  %s6 = inlined_call_operand.vmem [shape: f32[1,4], index: 6, kind: input, shape index: {}]
  %s7 = inlined_call_operand.vmem [shape: f32[1,4], index: 7, kind: input, shape index: {}]
  %s8 = inlined_call_operand.vmem [shape: f32[1,16], index: 8, kind: input, shape index: {}]
  %s9 = inlined_call_operand.vmem [shape: f32[1,16], index: 9, kind: input, shape index: {}]
  %s10 = inlined_call_operand.vmem [shape: bf16[2,256,16], index: 10, kind: output, shape index: {}]
  %s11 = sld [smem:[#allocation0]]
  $region73: #{bottleneck_forward.1} parent=0
    _
  %s13 = ssub.s32 1, %s11
  %s14 = scalar_select 0, %s13, %s11
  loop: start=0, step=1, limit=4
  $region2: #{bottleneck_forward.1} parent=0 // loop_pre_header
    _
  $region3: #{bottleneck_forward.1} parent=0 // loop_header
    %s16 = sphi 0, %s20
    %p17 = scmp.ge.s32.totalorder %s16, 4
    %s26 = sphi 0, %s28
    %s29 = sphi 0, %s26
    %s30 = sphi 0, %s29
    %s46 = sphi 0, %s30
    %s50 = sphi 0, %s50
    %s52 = sphi 0, %s50
    %s53 = sphi 0, %s52
    %s67 = sphi 0, %s53
    %s71 = sphi 0, %s71
    %s73 = sphi 0, %s71
    %s74 = sphi 0, %s73
    %s88 = sphi 0, %s74
    %s92 = sphi 0, %s92
    %s94 = sphi 0, %s92
    %s95 = sphi 0, %s94
    %s109 = sphi 0, %s95
    %s113 = sphi 0, %s113
    %s115 = sphi 0, %s113
    %s116 = sphi 0, %s115
    %s130 = sphi 0, %s116
    %s134 = sphi 0, %s134
    %s136 = sphi 0, %s134
    %s137 = sphi 0, %s136
    %s151 = sphi 0, %s137
    %s155 = sphi 0, %s155
    %s157 = sphi 0, %s155
    %s158 = sphi 0, %s157
    %s172 = sphi 0, %s158
    %s176 = sphi 0, %s176
    %s178 = sphi 0, %s176
    %s179 = sphi 0, %s178
    %s193 = sphi 0, %s179
    %s197 = sphi 0, %s197
    %s199 = sphi 0, %s197
    %s200 = sphi 0, %s199
    %s214 = sphi 0, %s200
    %s218 = sphi 0, %s218
    %s220 = sphi 0, %s218
    %s221 = sphi 0, %s220
    %s235 = sphi 0, %s221
    %s241 = sphi 0, %s243
    %s244 = sphi 0, %s241
    %s245 = sphi 0, %s244
    %s261 = sphi 0, %s245
  $region4: #{bottleneck_forward.1} parent=0 // loop_header_branch
    %19 = sbr.rel (%p17) target = $region8
  $region5: #{bottleneck_forward.1} parent=0 // loop_body
    %s21 = ssub.s32 %s16, 1
    %s22 = ssub.s32 %s16, 2
    %s23 = sadd.s32 %s16, 1
    %s24 = ssub.s32 %s16, %s23
    %p25 = scmp.eq.s32.totalorder %s24, 0
    %s27 = sadd.s32 %s26, 1
    %s28 = scalar_select %p25, %s26, %s27
    %p31 = pneg %p25
    %p32 = scmp.eq.s32.totalorder %s16, 1
    %p33 = por %p31, %p32
    %p34 = scmp.ne.s32.totalorder %s26, %s29
    %p35 = scmp.eq.s32.totalorder %s16, 0
    %p36 = por %p34, %p35
    %p37 = scmp.ne.s32.totalorder %s26, %s29
    %p38 = scmp.eq.s32.totalorder %s21, 1
    %p39 = por %p37, %p38
    %p40 = scmp.ne.s32.totalorder %s29, %s30
    %p41 = scmp.eq.s32.totalorder %s21, 0
    %p42 = por %p40, %p41
    %p43 = scmp.ne.s32.totalorder %s29, %s30
    %p44 = scmp.eq.s32.totalorder %s22, 1
    %p45 = por %p43, %p44
    %p47 = scmp.ne.s32.totalorder %s30, %s46
    %p48 = scmp.eq.s32.totalorder %s22, 0
    %p49 = por %p47, %p48
    %s51 = sadd.s32 %s50, 1
    %p54 = scmp.eq.s32.totalorder %s16, 1
    %p55 = scmp.ne.s32.totalorder %s50, %s52
    %p56 = scmp.eq.s32.totalorder %s16, 0
    %p57 = por %p55, %p56
    %p58 = scmp.ne.s32.totalorder %s50, %s52
    %p59 = scmp.eq.s32.totalorder %s21, 1
    %p60 = por %p58, %p59
    %p61 = scmp.ne.s32.totalorder %s52, %s53
    %p62 = scmp.eq.s32.totalorder %s21, 0
    %p63 = por %p61, %p62
    %p64 = scmp.ne.s32.totalorder %s52, %s53
    %p65 = scmp.eq.s32.totalorder %s22, 1
    %p66 = por %p64, %p65
    %p68 = scmp.ne.s32.totalorder %s53, %s67
    %p69 = scmp.eq.s32.totalorder %s22, 0
    %p70 = por %p68, %p69
    %s72 = sadd.s32 %s71, 1
    %p75 = scmp.eq.s32.totalorder %s16, 1
    %p76 = scmp.ne.s32.totalorder %s71, %s73
    %p77 = scmp.eq.s32.totalorder %s16, 0
    %p78 = por %p76, %p77
    %p79 = scmp.ne.s32.totalorder %s71, %s73
    %p80 = scmp.eq.s32.totalorder %s21, 1
    %p81 = por %p79, %p80
    %p82 = scmp.ne.s32.totalorder %s73, %s74
    %p83 = scmp.eq.s32.totalorder %s21, 0
    %p84 = por %p82, %p83
    %p85 = scmp.ne.s32.totalorder %s73, %s74
    %p86 = scmp.eq.s32.totalorder %s22, 1
    %p87 = por %p85, %p86
    %p89 = scmp.ne.s32.totalorder %s74, %s88
    %p90 = scmp.eq.s32.totalorder %s22, 0
    %p91 = por %p89, %p90
    %s93 = sadd.s32 %s92, 1
    %p96 = scmp.eq.s32.totalorder %s16, 1
    %p97 = scmp.ne.s32.totalorder %s92, %s94
    %p98 = scmp.eq.s32.totalorder %s16, 0
    %p99 = por %p97, %p98
    %p100 = scmp.ne.s32.totalorder %s92, %s94
    %p101 = scmp.eq.s32.totalorder %s21, 1
    %p102 = por %p100, %p101
    %p103 = scmp.ne.s32.totalorder %s94, %s95
    %p104 = scmp.eq.s32.totalorder %s21, 0
    %p105 = por %p103, %p104
    %p106 = scmp.ne.s32.totalorder %s94, %s95
    %p107 = scmp.eq.s32.totalorder %s22, 1
    %p108 = por %p106, %p107
    %p110 = scmp.ne.s32.totalorder %s95, %s109
    %p111 = scmp.eq.s32.totalorder %s22, 0
    %p112 = por %p110, %p111
    %s114 = sadd.s32 %s113, 1
    %p117 = scmp.eq.s32.totalorder %s16, 1
    %p118 = scmp.ne.s32.totalorder %s113, %s115
    %p119 = scmp.eq.s32.totalorder %s16, 0
    %p120 = por %p118, %p119
    %p121 = scmp.ne.s32.totalorder %s113, %s115
    %p122 = scmp.eq.s32.totalorder %s21, 1
    %p123 = por %p121, %p122
    %p124 = scmp.ne.s32.totalorder %s115, %s116
    %p125 = scmp.eq.s32.totalorder %s21, 0
    %p126 = por %p124, %p125
    %p127 = scmp.ne.s32.totalorder %s115, %s116
    %p128 = scmp.eq.s32.totalorder %s22, 1
    %p129 = por %p127, %p128
    %p131 = scmp.ne.s32.totalorder %s116, %s130
    %p132 = scmp.eq.s32.totalorder %s22, 0
    %p133 = por %p131, %p132
    %s135 = sadd.s32 %s134, 1
    %p138 = scmp.eq.s32.totalorder %s16, 1
    %p139 = scmp.ne.s32.totalorder %s134, %s136
    %p140 = scmp.eq.s32.totalorder %s16, 0
    %p141 = por %p139, %p140
    %p142 = scmp.ne.s32.totalorder %s134, %s136
    %p143 = scmp.eq.s32.totalorder %s21, 1
    %p144 = por %p142, %p143
    %p145 = scmp.ne.s32.totalorder %s136, %s137
    %p146 = scmp.eq.s32.totalorder %s21, 0
    %p147 = por %p145, %p146
    %p148 = scmp.ne.s32.totalorder %s136, %s137
    %p149 = scmp.eq.s32.totalorder %s22, 1
    %p150 = por %p148, %p149
    %p152 = scmp.ne.s32.totalorder %s137, %s151
    %p153 = scmp.eq.s32.totalorder %s22, 0
    %p154 = por %p152, %p153
    %s156 = sadd.s32 %s155, 1
    %p159 = scmp.eq.s32.totalorder %s16, 1
    %p160 = scmp.ne.s32.totalorder %s155, %s157
    %p161 = scmp.eq.s32.totalorder %s16, 0
    %p162 = por %p160, %p161
    %p163 = scmp.ne.s32.totalorder %s155, %s157
    %p164 = scmp.eq.s32.totalorder %s21, 1
    %p165 = por %p163, %p164
    %p166 = scmp.ne.s32.totalorder %s157, %s158
    %p167 = scmp.eq.s32.totalorder %s21, 0
    %p168 = por %p166, %p167
    %p169 = scmp.ne.s32.totalorder %s157, %s158
    %p170 = scmp.eq.s32.totalorder %s22, 1
    %p171 = por %p169, %p170
    %p173 = scmp.ne.s32.totalorder %s158, %s172
    %p174 = scmp.eq.s32.totalorder %s22, 0
    %p175 = por %p173, %p174
    %s177 = sadd.s32 %s176, 1
    %p180 = scmp.eq.s32.totalorder %s16, 1
    %p181 = scmp.ne.s32.totalorder %s176, %s178
    %p182 = scmp.eq.s32.totalorder %s16, 0
    %p183 = por %p181, %p182
    %p184 = scmp.ne.s32.totalorder %s176, %s178
    %p185 = scmp.eq.s32.totalorder %s21, 1
    %p186 = por %p184, %p185
    %p187 = scmp.ne.s32.totalorder %s178, %s179
    %p188 = scmp.eq.s32.totalorder %s21, 0
    %p189 = por %p187, %p188
    %p190 = scmp.ne.s32.totalorder %s178, %s179
    %p191 = scmp.eq.s32.totalorder %s22, 1
    %p192 = por %p190, %p191
    %p194 = scmp.ne.s32.totalorder %s179, %s193
    %p195 = scmp.eq.s32.totalorder %s22, 0
    %p196 = por %p194, %p195
    %s198 = sadd.s32 %s197, 1
    %p201 = scmp.eq.s32.totalorder %s16, 1
    %p202 = scmp.ne.s32.totalorder %s197, %s199
    %p203 = scmp.eq.s32.totalorder %s16, 0
    %p204 = por %p202, %p203
    %p205 = scmp.ne.s32.totalorder %s197, %s199
    %p206 = scmp.eq.s32.totalorder %s21, 1
    %p207 = por %p205, %p206
    %p208 = scmp.ne.s32.totalorder %s199, %s200
    %p209 = scmp.eq.s32.totalorder %s21, 0
    %p210 = por %p208, %p209
    %p211 = scmp.ne.s32.totalorder %s199, %s200
    %p212 = scmp.eq.s32.totalorder %s22, 1
    %p213 = por %p211, %p212
    %p215 = scmp.ne.s32.totalorder %s200, %s214
    %p216 = scmp.eq.s32.totalorder %s22, 0
    %p217 = por %p215, %p216
    %s219 = sadd.s32 %s218, 1
    %p222 = scmp.eq.s32.totalorder %s16, 1
    %p223 = scmp.ne.s32.totalorder %s218, %s220
    %p224 = scmp.eq.s32.totalorder %s16, 0
    %p225 = por %p223, %p224
    %p226 = scmp.ne.s32.totalorder %s218, %s220
    %p227 = scmp.eq.s32.totalorder %s21, 1
    %p228 = por %p226, %p227
    %p229 = scmp.ne.s32.totalorder %s220, %s221
    %p230 = scmp.eq.s32.totalorder %s21, 0
    %p231 = por %p229, %p230
    %p232 = scmp.ne.s32.totalorder %s220, %s221
    %p233 = scmp.eq.s32.totalorder %s22, 1
    %p234 = por %p232, %p233
    %p236 = scmp.ne.s32.totalorder %s221, %s235
    %p237 = scmp.eq.s32.totalorder %s22, 0
    %p238 = por %p236, %p237
    %s239 = ssub.s32 %s16, %s23
    %p240 = scmp.eq.s32.totalorder %s239, 0
    %s242 = sadd.s32 %s241, 1
    %s243 = scalar_select %p240, %s241, %s242
    %p246 = pneg %p240
    %p247 = scmp.eq.s32.totalorder %s16, 1
    %p248 = por %p246, %p247
    %p249 = scmp.ne.s32.totalorder %s241, %s244
    %p250 = scmp.eq.s32.totalorder %s16, 0
    %p251 = por %p249, %p250
    %p252 = scmp.ne.s32.totalorder %s241, %s244
    %p253 = scmp.eq.s32.totalorder %s21, 1
    %p254 = por %p252, %p253
    %p255 = scmp.ne.s32.totalorder %s244, %s245
    %p256 = scmp.eq.s32.totalorder %s21, 0
    %p257 = por %p255, %p256
    %p258 = scmp.ne.s32.totalorder %s244, %s245
    %p259 = scmp.eq.s32.totalorder %s22, 1
    %p260 = por %p258, %p259
    %p262 = scmp.ne.s32.totalorder %s245, %s261
    %p263 = scmp.eq.s32.totalorder %s22, 0
    %p264 = por %p262, %p263
    %p265 = scmp.le.s32.totalorder 1, %s16
    %p266 = scmp.lt.s32.totalorder %s16, 3
    %p267 = pnand %p265, %p266
    %p268 = pneg %p267
    // Predicated region
    $region9: #{bottleneck_forward.1} parent=5 // pred_check
      _
    $region10: #{bottleneck_forward.1} parent=5 // pred_check_branch
      %270 = sbr.rel (%p267) target = $region12
    $region11: #{bottleneck_forward.1} parent=5 // pred_region
      %s271 = ssub.s32 %s16, 1
      // Predicated region
      $region13: #{bottleneck_forward.1} parent=11 // pred_check
        %p272 = pneg %p63
      $region14: #{bottleneck_forward.1} parent=11 // pred_check_branch
        %274 = sbr.rel (%p272) target = $region16
      $region15: #{bottleneck_forward.1} parent=11 // pred_region
        _
      $region16: #{bottleneck_forward.1} parent=11 // pred_fallthru
        _
      // Predicated region
      $region17: #{bottleneck_forward.1} parent=11 // pred_check
        %p275 = pneg %p84
      $region18: #{bottleneck_forward.1} parent=11 // pred_check_branch
        %277 = sbr.rel (%p275) target = $region20
      $region19: #{bottleneck_forward.1} parent=11 // pred_region
        _
      $region20: #{bottleneck_forward.1} parent=11 // pred_fallthru
        _
      // Predicated region
      $region21: #{bottleneck_forward.1} parent=11 // pred_check
        %p278 = pneg %p105
      $region22: #{bottleneck_forward.1} parent=11 // pred_check_branch
        %280 = sbr.rel (%p278) target = $region24
      $region23: #{bottleneck_forward.1} parent=11 // pred_region
        _
      $region24: #{bottleneck_forward.1} parent=11 // pred_fallthru
        _
      // Predicated region
      $region25: #{bottleneck_forward.1} parent=11 // pred_check
        %p281 = pneg %p126
      $region26: #{bottleneck_forward.1} parent=11 // pred_check_branch
        %283 = sbr.rel (%p281) target = $region28
      $region27: #{bottleneck_forward.1} parent=11 // pred_region
        _
      $region28: #{bottleneck_forward.1} parent=11 // pred_fallthru
        _
      // Predicated region
      $region29: #{bottleneck_forward.1} parent=11 // pred_check
        %p284 = pneg %p147
      $region30: #{bottleneck_forward.1} parent=11 // pred_check_branch
        %286 = sbr.rel (%p284) target = $region32
      $region31: #{bottleneck_forward.1} parent=11 // pred_region
        _
      $region32: #{bottleneck_forward.1} parent=11 // pred_fallthru
        _
      // Predicated region
      $region33: #{bottleneck_forward.1} parent=11 // pred_check
        %p287 = pneg %p168
      $region34: #{bottleneck_forward.1} parent=11 // pred_check_branch
        %289 = sbr.rel (%p287) target = $region36
      $region35: #{bottleneck_forward.1} parent=11 // pred_region
        _
      $region36: #{bottleneck_forward.1} parent=11 // pred_fallthru
        _
      // Predicated region
      $region37: #{bottleneck_forward.1} parent=11 // pred_check
        %p290 = pneg %p189
      $region38: #{bottleneck_forward.1} parent=11 // pred_check_branch
        %292 = sbr.rel (%p290) target = $region40
      $region39: #{bottleneck_forward.1} parent=11 // pred_region
        _
      $region40: #{bottleneck_forward.1} parent=11 // pred_fallthru
        _
      // Predicated region
      $region41: #{bottleneck_forward.1} parent=11 // pred_check
        %p293 = pneg %p210
      $region42: #{bottleneck_forward.1} parent=11 // pred_check_branch
        %295 = sbr.rel (%p293) target = $region44
      $region43: #{bottleneck_forward.1} parent=11 // pred_region
        _
      $region44: #{bottleneck_forward.1} parent=11 // pred_fallthru
        _
      // Predicated region
      $region45: #{bottleneck_forward.1} parent=11 // pred_check
        %p296 = pneg %p231
      $region46: #{bottleneck_forward.1} parent=11 // pred_check_branch
        %298 = sbr.rel (%p296) target = $region48
      $region47: #{bottleneck_forward.1} parent=11 // pred_region
        _
      $region48: #{bottleneck_forward.1} parent=11 // pred_fallthru
        _
    $region12: #{bottleneck_forward.1} parent=5 // pred_fallthru
      _
    %p299 = scmp.lt.s32.totalorder %s16, 2
    // Predicated region
    $region49: #{bottleneck_forward.1} parent=5 // pred_check
      %p300 = pneg %p299
    $region50: #{bottleneck_forward.1} parent=5 // pred_check_branch
      %302 = sbr.rel (%p300) target = $region52
    $region51: #{bottleneck_forward.1} parent=5 // pred_region
      // Predicated region
      $region53: #{bottleneck_forward.1} parent=51 // pred_check
        %p303 = pneg %p36
      $region54: #{bottleneck_forward.1} parent=51 // pred_check_branch
        %305 = sbr.rel (%p303) target = $region56
      $region55: #{bottleneck_forward.1} parent=51 // pred_region
        %p306 = scmp.lt.s32.totalorder %s16, 1
        %s307 = scalar_select %p306, %s16, 1
        %s308 = smul.addr %s307, 32
        %s309 = smul.addr %s308, 4
        %s310 = scalar_lea.vmem %s0, %s309
      $region56: #{bottleneck_forward.1} parent=51 // pred_fallthru
        _
    $region52: #{bottleneck_forward.1} parent=5 // pred_fallthru
      _
    %p311 = scmp.le.s32.totalorder 1, %s16
    %p312 = scmp.lt.s32.totalorder %s16, 3
    %p313 = pnand %p311, %p312
    %p314 = pneg %p313
    // Predicated region
    $region57: #{bottleneck_forward.1} parent=5 // pred_check
      _
    $region58: #{bottleneck_forward.1} parent=5 // pred_check_branch
      %316 = sbr.rel (%p313) target = $region60
    $region59: #{bottleneck_forward.1} parent=5 // pred_region
      %s317 = ssub.s32 %s16, 1
      %p318 = scmp.lt.s32.totalorder %s21, 1
      %s319 = scalar_select %p318, %s21, 1
      %s320 = smul.addr %s319, 32
      %s321 = smul.addr %s320, 4
      %s322 = scalar_lea.vmem %s0, %s321
      %p323 = pneg %p42
      %p324 = pneg %p39
      %p325 = pneg %p63
      %p326 = pneg %p60
      %p327 = pneg %p84
      %p328 = pneg %p81
      %p329 = pneg %p105
      %p330 = pneg %p102
      %p331 = pneg %p126
      %p332 = pneg %p123
      %p333 = pneg %p147
      %p334 = pneg %p144
      %p335 = pneg %p168
      %p336 = pneg %p165
      %p337 = pneg %p189
      %p338 = pneg %p186
      %p339 = pneg %p210
      %p340 = pneg %p207
      %p341 = pneg %p231
      %p342 = pneg %p228
      %p343 = pneg %p257
      %p344 = pneg %p254
      %p345 = scmp.lt.s32.totalorder %s21, 1
      %s346 = scalar_select %p345, %s21, 1
      %s347 = smul.addr %s346, 32
      %s348 = smul.addr %s347, 4
      %s349 = scalar_lea.vmem %s10, %s348
      %p350 = scmp.lt.s32.totalorder %s21, 1
      %s351 = scalar_select %p350, %s21, 1
      %s352 = smul.addr %s351, 32
      %s353 = smul.addr %s352, 4
      %s354 = scalar_lea.vmem %s0, %s353
      %p355 = scmp.lt.s32.totalorder %s21, 1
      %s356 = scalar_select %p355, %s21, 1
      %s357 = smul.addr %s356, 32
      %s358 = smul.addr %s357, 4
      %s359 = scalar_lea.vmem %s10, %s358
      %v363 = vld [vmem:[%s354] sm:$0xf]
      %v364 = vld [vmem:[%s354 + $0x4] sm:$0xf]
      %v365 = vld [vmem:[%s354 + $0x8] sm:$0xf]
      %v366 = vld [vmem:[%s354 + $0xc] sm:$0xf]
      %v367 = vld [vmem:[%s354 + $0x10] sm:$0xf]
      %v368 = vld [vmem:[%s354 + $0x14] sm:$0xf]
      %v369 = vld [vmem:[%s354 + $0x18] sm:$0xf]
      %v370 = vld [vmem:[%s354 + $0x1c] sm:$0xf]
      %v371 = vld [vmem:[%s354 + $0x20] sm:$0xf]
      %v372 = vld [vmem:[%s354 + $0x24] sm:$0xf]
      %v373 = vld [vmem:[%s354 + $0x28] sm:$0xf]
      %v374 = vld [vmem:[%s354 + $0x2c] sm:$0xf]
      %v375 = vld [vmem:[%s354 + $0x30] sm:$0xf]
      %v376 = vld [vmem:[%s354 + $0x34] sm:$0xf]
      %v377 = vld [vmem:[%s354 + $0x38] sm:$0xf]
      %v378 = vld [vmem:[%s354 + $0x3c] sm:$0xf]
      %v379 = vld [vmem:[%s354 + $0x40] sm:$0xf]
      %v380 = vld [vmem:[%s354 + $0x44] sm:$0xf]
      %v381 = vld [vmem:[%s354 + $0x48] sm:$0xf]
      %v382 = vld [vmem:[%s354 + $0x4c] sm:$0xf]
      %v383 = vld [vmem:[%s354 + $0x50] sm:$0xf]
      %v384 = vld [vmem:[%s354 + $0x54] sm:$0xf]
      %v385 = vld [vmem:[%s354 + $0x58] sm:$0xf]
      %v386 = vld [vmem:[%s354 + $0x5c] sm:$0xf]
      %v387 = vld [vmem:[%s354 + $0x60] sm:$0xf]
      %v388 = vld [vmem:[%s354 + $0x64] sm:$0xf]
      %v389 = vld [vmem:[%s354 + $0x68] sm:$0xf]
      %v390 = vld [vmem:[%s354 + $0x6c] sm:$0xf]
      %v391 = vld [vmem:[%s354 + $0x70] sm:$0xf]
      %v392 = vld [vmem:[%s354 + $0x74] sm:$0xf]
      %v393 = vld [vmem:[%s354 + $0x78] sm:$0xf]
      %v394 = vld [vmem:[%s354 + $0x7c] sm:$0xf]
      %v395 = vld [vmem:[%s1] sm:$0xf]
      %v396 = vld [vmem:[%s1 + $0x4] sm:$0xf]
      %v429 = vunpack.c.l.b16 %v363
      %v430 = vunpack.c.l.b16 %v364
      %v431 = vunpack.c.l.b16 %v365
      %v432 = vunpack.c.l.b16 %v366
      %v433 = vunpack.c.l.b16 %v367
      %v434 = vunpack.c.l.b16 %v368
      %v435 = vunpack.c.l.b16 %v369
      %v436 = vunpack.c.l.b16 %v370
      %v437 = vunpack.c.l.b16 %v371
      %v438 = vunpack.c.l.b16 %v372
      %v439 = vunpack.c.l.b16 %v373
      %v440 = vunpack.c.l.b16 %v374
      %v441 = vunpack.c.l.b16 %v375
      %v442 = vunpack.c.l.b16 %v376
      %v443 = vunpack.c.l.b16 %v377
      %v444 = vunpack.c.l.b16 %v378
      %v445 = vunpack.c.l.b16 %v379
      %v446 = vunpack.c.l.b16 %v380
      %v447 = vunpack.c.l.b16 %v381
      %v448 = vunpack.c.l.b16 %v382
      %v449 = vunpack.c.l.b16 %v383
      %v450 = vunpack.c.l.b16 %v384
      %v451 = vunpack.c.l.b16 %v385
      %v452 = vunpack.c.l.b16 %v386
      %v453 = vunpack.c.l.b16 %v387
      %v454 = vunpack.c.l.b16 %v388
      %v455 = vunpack.c.l.b16 %v389
      %v456 = vunpack.c.l.b16 %v390
      %v457 = vunpack.c.l.b16 %v391
      %v458 = vunpack.c.l.b16 %v392
      %v459 = vunpack.c.l.b16 %v393
      %v460 = vunpack.c.l.b16 %v394
      %v461 = vpack.c.b16 %v430, %v429
      %v462 = vpack.c.b16 %v432, %v431
      %v463 = vpack.c.b16 %v434, %v433
      %v464 = vpack.c.b16 %v436, %v435
      %v465 = vpack.c.b16 %v438, %v437
      %v466 = vpack.c.b16 %v440, %v439
      %v467 = vpack.c.b16 %v442, %v441
      %v468 = vpack.c.b16 %v444, %v443
      %v469 = vpack.c.b16 %v446, %v445
      %v470 = vpack.c.b16 %v448, %v447
      %v471 = vpack.c.b16 %v450, %v449
      %v472 = vpack.c.b16 %v452, %v451
      %v473 = vpack.c.b16 %v454, %v453
      %v474 = vpack.c.b16 %v456, %v455
      %v475 = vpack.c.b16 %v458, %v457
      %v476 = vpack.c.b16 %v460, %v459
      %v479 = vunpack.c.l.b16 %v395
      %v480 = vunpack.c.l.b16 %v396
      %v481 = vpack.c.b16 %v480, %v479
      %vm483 = vcmask 130048
      %v485 = vsel %vm483, %v461, 0
      %v488 = vsel %vm483, %v462, 0
      %v491 = vsel %vm483, %v463, 0
      %v494 = vsel %vm483, %v464, 0
      %v497 = vsel %vm483, %v465, 0
      %v500 = vsel %vm483, %v466, 0
      %v503 = vsel %vm483, %v467, 0
      %v506 = vsel %vm483, %v468, 0
      %v509 = vsel %vm483, %v469, 0
      %v512 = vsel %vm483, %v470, 0
      %v515 = vsel %vm483, %v471, 0
      %v518 = vsel %vm483, %v472, 0
      %v521 = vsel %vm483, %v473, 0
      %v524 = vsel %vm483, %v474, 0
      %v527 = vsel %vm483, %v475, 0
      %v530 = vsel %vm483, %v476, 0
      %532 = vmatprep.subr.bf16.mxu0 0
      %533 = vmatpush1.bf16.msra.mxu0 0
      %534 = vmatprep.subr.bf16.mxu0 0
      %535 = vmatpush1.bf16.msra.mxu0 0
      %536 = vmatprep.subr.bf16.mxu0 0
      %537 = vmatpush1.bf16.msra.mxu0 0
      %538 = vmatprep.subr.bf16.mxu0 0
      %539 = vmatpush1.bf16.msra.mxu0 0
      %540 = vmatprep.subr.bf16.mxu0 0
      %541 = vmatpush1.bf16.msra.mxu0 0
      %542 = vmatprep.subr.bf16.mxu0 0
      %543 = vmatpush1.bf16.msra.mxu0 0
      %544 = vmatprep.subr.bf16.mxu0 0
      %545 = vmatpush1.bf16.msra.mxu0 0
      %546 = vmatprep.subr.bf16.mxu0 0
      %547 = vmatpush1.bf16.msra.mxu0 %v481
      %548 = vmatprep.subr.bf16.mxu0 0
      %549 = vmatpush2.bf16.msra.mxu0 0
      %550 = vmatprep.subr.bf16.mxu0 0
      %551 = vmatpush2.bf16.msra.mxu0 0
      %552 = vmatprep.subr.bf16.mxu0 0
      %553 = vmatpush2.bf16.msra.mxu0 0
      %554 = vmatprep.subr.bf16.mxu0 0
      %555 = vmatpush2.bf16.msra.mxu0 0
      %556 = vmatprep.subr.bf16.mxu0 0
      %557 = vmatpush2.bf16.msra.mxu0 0
      %558 = vmatprep.subr.bf16.mxu0 0
      %559 = vmatpush2.bf16.msra.mxu0 0
      %560 = vmatprep.subr.bf16.mxu0 0
      %561 = vmatpush2.bf16.msra.mxu0 0
      %562 = vmatprep.subr.bf16.mxu0 0
      %563 = vmatpush2.bf16.msra.mxu0 0
      %564 = vmatprep.mubr.bf16.mxu0 0
      %565 = vmatmul.mubr.bf16.gmra.mxu0 %v485
      %v566 = vpop.f32.mrf.mxu0
      %v567 = vadd.f32 0.0, %v566
      %v568 = vpop.f32.mrf.mxu0
      %v569 = vpop.f32.mrf.mxu0
      %v570 = vadd.f32 0.0, %v569
      %v571 = vpop.f32.mrf.mxu0
      %572 = vmatprep.mubr.bf16.mxu0 0
      %573 = vmatmul.mubr.bf16.gmra.mxu0 %v488
      %v574 = vpop.f32.mrf.mxu0
      %v575 = vadd.f32 0.0, %v574
      %v576 = vpop.f32.mrf.mxu0
      %v577 = vpop.f32.mrf.mxu0
      %v578 = vadd.f32 0.0, %v577
      %v579 = vpop.f32.mrf.mxu0
      %580 = vmatprep.mubr.bf16.mxu0 0
      %581 = vmatmul.mubr.bf16.gmra.mxu0 %v491
      %v582 = vpop.f32.mrf.mxu0
      %v583 = vadd.f32 0.0, %v582
      %v584 = vpop.f32.mrf.mxu0
      %v585 = vpop.f32.mrf.mxu0
      %v586 = vadd.f32 0.0, %v585
      %v587 = vpop.f32.mrf.mxu0
      %588 = vmatprep.mubr.bf16.mxu0 0
      %589 = vmatmul.mubr.bf16.gmra.mxu0 %v494
      %v590 = vpop.f32.mrf.mxu0
      %v591 = vadd.f32 0.0, %v590
      %v592 = vpop.f32.mrf.mxu0
      %v593 = vpop.f32.mrf.mxu0
      %v594 = vadd.f32 0.0, %v593
      %v595 = vpop.f32.mrf.mxu0
      %596 = vmatprep.mubr.bf16.mxu0 0
      %597 = vmatmul.mubr.bf16.gmra.mxu0 %v497
      %v598 = vpop.f32.mrf.mxu0
      %v599 = vadd.f32 0.0, %v598
      %v600 = vpop.f32.mrf.mxu0
      %v601 = vpop.f32.mrf.mxu0
      %v602 = vadd.f32 0.0, %v601
      %v603 = vpop.f32.mrf.mxu0
      %604 = vmatprep.mubr.bf16.mxu0 0
      %605 = vmatmul.mubr.bf16.gmra.mxu0 %v500
      %v606 = vpop.f32.mrf.mxu0
      %v607 = vadd.f32 0.0, %v606
      %v608 = vpop.f32.mrf.mxu0
      %v609 = vpop.f32.mrf.mxu0
      %v610 = vadd.f32 0.0, %v609
      %v611 = vpop.f32.mrf.mxu0
      %612 = vmatprep.mubr.bf16.mxu0 0
      %613 = vmatmul.mubr.bf16.gmra.mxu0 %v503
      %v614 = vpop.f32.mrf.mxu0
      %v615 = vadd.f32 0.0, %v614
      %v616 = vpop.f32.mrf.mxu0
      %v617 = vpop.f32.mrf.mxu0
      %v618 = vadd.f32 0.0, %v617
      %v619 = vpop.f32.mrf.mxu0
      %620 = vmatprep.mubr.bf16.mxu0 0
      %621 = vmatmul.mubr.bf16.gmra.mxu0 %v506
      %v622 = vpop.f32.mrf.mxu0
      %v623 = vadd.f32 0.0, %v622
      %v624 = vpop.f32.mrf.mxu0
      %v625 = vpop.f32.mrf.mxu0
      %v626 = vadd.f32 0.0, %v625
      %v627 = vpop.f32.mrf.mxu0
      %628 = vmatprep.mubr.bf16.mxu0 0
      %629 = vmatmul.mubr.bf16.gmra.mxu0 %v509
      %v630 = vpop.f32.mrf.mxu0
      %v631 = vadd.f32 0.0, %v630
      %v632 = vpop.f32.mrf.mxu0
      %v633 = vpop.f32.mrf.mxu0
      %v634 = vadd.f32 0.0, %v633
      %v635 = vpop.f32.mrf.mxu0
      %636 = vmatprep.mubr.bf16.mxu0 0
      %637 = vmatmul.mubr.bf16.gmra.mxu0 %v512
      %v638 = vpop.f32.mrf.mxu0
      %v639 = vadd.f32 0.0, %v638
      %v640 = vpop.f32.mrf.mxu0
      %v641 = vpop.f32.mrf.mxu0
      %v642 = vadd.f32 0.0, %v641
      %v643 = vpop.f32.mrf.mxu0
      %644 = vmatprep.mubr.bf16.mxu0 0
      %645 = vmatmul.mubr.bf16.gmra.mxu0 %v515
      %v646 = vpop.f32.mrf.mxu0
      %v647 = vadd.f32 0.0, %v646
      %v648 = vpop.f32.mrf.mxu0
      %v649 = vpop.f32.mrf.mxu0
      %v650 = vadd.f32 0.0, %v649
      %v651 = vpop.f32.mrf.mxu0
      %652 = vmatprep.mubr.bf16.mxu0 0
      %653 = vmatmul.mubr.bf16.gmra.mxu0 %v518
      %v654 = vpop.f32.mrf.mxu0
      %v655 = vadd.f32 0.0, %v654
      %v656 = vpop.f32.mrf.mxu0
      %v657 = vpop.f32.mrf.mxu0
      %v658 = vadd.f32 0.0, %v657
      %v659 = vpop.f32.mrf.mxu0
      %660 = vmatprep.mubr.bf16.mxu0 0
      %661 = vmatmul.mubr.bf16.gmra.mxu0 %v521
      %v662 = vpop.f32.mrf.mxu0
      %v663 = vadd.f32 0.0, %v662
      %v664 = vpop.f32.mrf.mxu0
      %v665 = vpop.f32.mrf.mxu0
      %v666 = vadd.f32 0.0, %v665
      %v667 = vpop.f32.mrf.mxu0
      %668 = vmatprep.mubr.bf16.mxu0 0
      %669 = vmatmul.mubr.bf16.gmra.mxu0 %v524
      %v670 = vpop.f32.mrf.mxu0
      %v671 = vadd.f32 0.0, %v670
      %v672 = vpop.f32.mrf.mxu0
      %v673 = vpop.f32.mrf.mxu0
      %v674 = vadd.f32 0.0, %v673
      %v675 = vpop.f32.mrf.mxu0
      %676 = vmatprep.mubr.bf16.mxu0 0
      %677 = vmatmul.mubr.bf16.gmra.mxu0 %v527
      %v678 = vpop.f32.mrf.mxu0
      %v679 = vadd.f32 0.0, %v678
      %v680 = vpop.f32.mrf.mxu0
      %v681 = vpop.f32.mrf.mxu0
      %v682 = vadd.f32 0.0, %v681
      %v683 = vpop.f32.mrf.mxu0
      %684 = vmatprep.mubr.bf16.mxu0 0
      %685 = vmatmul.mubr.bf16.gmra.mxu0 %v530
      %v686 = vpop.f32.mrf.mxu0
      %v687 = vadd.f32 0.0, %v686
      %v688 = vpop.f32.mrf.mxu0
      %v689 = vpop.f32.mrf.mxu0
      %v690 = vadd.f32 0.0, %v689
      %v691 = vpop.f32.mrf.mxu0
      %692 = vdwg.mxu0
      %v693 = vld [vmem:[%s4] sm:$0x1]
      %v695 = vlaneseq
      %v696 = vshrl.u32 %v695, 7
      %v697 = vsub.s32 0, %v696
      %v698 = vrot.slane %v693, %v697
      %v700 = vmul.f32 %v567, %v698
      %v701 = vmul.f32 %v570, %v698
      %v702 = vmul.f32 %v575, %v698
      %v703 = vmul.f32 %v578, %v698
      %v704 = vmul.f32 %v583, %v698
      %v705 = vmul.f32 %v586, %v698
      %v706 = vmul.f32 %v591, %v698
      %v707 = vmul.f32 %v594, %v698
      %v708 = vmul.f32 %v599, %v698
      %v709 = vmul.f32 %v602, %v698
      %v710 = vmul.f32 %v607, %v698
      %v711 = vmul.f32 %v610, %v698
      %v712 = vmul.f32 %v615, %v698
      %v713 = vmul.f32 %v618, %v698
      %v714 = vmul.f32 %v623, %v698
      %v715 = vmul.f32 %v626, %v698
      %v716 = vmul.f32 %v631, %v698
      %v717 = vmul.f32 %v634, %v698
      %v718 = vmul.f32 %v639, %v698
      %v719 = vmul.f32 %v642, %v698
      %v720 = vmul.f32 %v647, %v698
      %v721 = vmul.f32 %v650, %v698
      %v722 = vmul.f32 %v655, %v698
      %v723 = vmul.f32 %v658, %v698
      %v724 = vmul.f32 %v663, %v698
      %v725 = vmul.f32 %v666, %v698
      %v726 = vmul.f32 %v671, %v698
      %v727 = vmul.f32 %v674, %v698
      %v728 = vmul.f32 %v679, %v698
      %v729 = vmul.f32 %v682, %v698
      %v730 = vmul.f32 %v687, %v698
      %v731 = vmul.f32 %v690, %v698
      %v732 = vld [vmem:[%s5] sm:$0x1]
      %v734 = vlaneseq
      %v735 = vshrl.u32 %v734, 7
      %v736 = vsub.s32 0, %v735
      %v737 = vrot.slane %v732, %v736
      %v739 = vadd.f32 %v700, %v737
      %v740 = vadd.f32 %v701, %v737
      %v741 = vadd.f32 %v702, %v737
      %v742 = vadd.f32 %v703, %v737
      %v743 = vadd.f32 %v704, %v737
      %v744 = vadd.f32 %v705, %v737
      %v745 = vadd.f32 %v706, %v737
      %v746 = vadd.f32 %v707, %v737
      %v747 = vadd.f32 %v708, %v737
      %v748 = vadd.f32 %v709, %v737
      %v749 = vadd.f32 %v710, %v737
      %v750 = vadd.f32 %v711, %v737
      %v751 = vadd.f32 %v712, %v737
      %v752 = vadd.f32 %v713, %v737
      %v753 = vadd.f32 %v714, %v737
      %v754 = vadd.f32 %v715, %v737
      %v755 = vadd.f32 %v716, %v737
      %v756 = vadd.f32 %v717, %v737
      %v757 = vadd.f32 %v718, %v737
      %v758 = vadd.f32 %v719, %v737
      %v759 = vadd.f32 %v720, %v737
      %v760 = vadd.f32 %v721, %v737
      %v761 = vadd.f32 %v722, %v737
      %v762 = vadd.f32 %v723, %v737
      %v763 = vadd.f32 %v724, %v737
      %v764 = vadd.f32 %v725, %v737
      %v765 = vadd.f32 %v726, %v737
      %v766 = vadd.f32 %v727, %v737
      %v767 = vadd.f32 %v728, %v737
      %v768 = vadd.f32 %v729, %v737
      %v769 = vadd.f32 %v730, %v737
      %v770 = vadd.f32 %v731, %v737
      %v771 = vmax.f32 %v739, 0.0
      %v772 = vmax.f32 %v740, 0.0
      %v773 = vmax.f32 %v741, 0.0
      %v774 = vmax.f32 %v742, 0.0
      %v775 = vmax.f32 %v743, 0.0
      %v776 = vmax.f32 %v744, 0.0
      %v777 = vmax.f32 %v745, 0.0
      %v778 = vmax.f32 %v746, 0.0
      %v779 = vmax.f32 %v747, 0.0
      %v780 = vmax.f32 %v748, 0.0
      %v781 = vmax.f32 %v749, 0.0
      %v782 = vmax.f32 %v750, 0.0
      %v783 = vmax.f32 %v751, 0.0
      %v784 = vmax.f32 %v752, 0.0
      %v785 = vmax.f32 %v753, 0.0
      %v786 = vmax.f32 %v754, 0.0
      %v787 = vmax.f32 %v755, 0.0
      %v788 = vmax.f32 %v756, 0.0
      %v789 = vmax.f32 %v757, 0.0
      %v790 = vmax.f32 %v758, 0.0
      %v791 = vmax.f32 %v759, 0.0
      %v792 = vmax.f32 %v760, 0.0
      %v793 = vmax.f32 %v761, 0.0
      %v794 = vmax.f32 %v762, 0.0
      %v795 = vmax.f32 %v763, 0.0
      %v796 = vmax.f32 %v764, 0.0
      %v797 = vmax.f32 %v765, 0.0
      %v798 = vmax.f32 %v766, 0.0
      %v799 = vmax.f32 %v767, 0.0
      %v800 = vmax.f32 %v768, 0.0
      %v801 = vmax.f32 %v769, 0.0
      %v802 = vmax.f32 %v770, 0.0
      %vm803 = vcmask 27651
      %vm804 = vsmask.f32 7950
      %vm805 = vmand %vm803, %vm804
      %v806 = vld [vmem:[#allocation2] sm:$0x8]
      %v807 = vsel %vm805, 0, %v806
      %808 = vst [vmem:[#allocation2] sm:$0x8] %v807
      %vm809 = vcmask 27648
      %810 = vst.msk [vmem:[#allocation2 + $0x4] sm:$0xf] %vm809, 0
      %811 = vst.msk [vmem:[#allocation2 + $0x8] sm:$0xf] %vm809, 0
      %812 = vst.msk [vmem:[#allocation2 + $0x8c] sm:$0xf] %vm809, 0
      %813 = vst.msk [vmem:[#allocation2 + $0x90] sm:$0xf] %vm809, 0
      %vm814 = vcmask 24576
      %vm815 = vsmask.f32 256
      %vm816 = vmand %vm814, %vm815
      %v817 = vld [vmem:[#allocation2 + $0x94] sm:$0x1]
      %v818 = vsel %vm816, 0, %v817
      %819 = vst [vmem:[#allocation2 + $0x94] sm:$0x1] %v818
      %v820 = vpack.c.bf16 %v772, %v771
      %v821 = vpack.c.bf16 %v774, %v773
      %v822 = vpack.c.bf16 %v776, %v775
      %v823 = vpack.c.bf16 %v778, %v777
      %v824 = vpack.c.bf16 %v780, %v779
      %v825 = vpack.c.bf16 %v782, %v781
      %v826 = vpack.c.bf16 %v784, %v783
      %v827 = vpack.c.bf16 %v786, %v785
      %v828 = vpack.c.bf16 %v788, %v787
      %v829 = vpack.c.bf16 %v790, %v789
      %v830 = vpack.c.bf16 %v792, %v791
      %v831 = vpack.c.bf16 %v794, %v793
      %v832 = vpack.c.bf16 %v796, %v795
      %v833 = vpack.c.bf16 %v798, %v797
      %v834 = vpack.c.bf16 %v800, %v799
      %v835 = vpack.c.bf16 %v802, %v801
      %v852 = vunpack.c.l.b16 %v820
      %v853 = vunpack.c.h.b16 %v820
      %v854 = vunpack.c.l.b16 %v821
      %v855 = vunpack.c.h.b16 %v821
      %v856 = vunpack.c.l.b16 %v822
      %v857 = vunpack.c.h.b16 %v822
      %v858 = vunpack.c.l.b16 %v823
      %v859 = vunpack.c.h.b16 %v823
      %v860 = vunpack.c.l.b16 %v824
      %v861 = vunpack.c.h.b16 %v824
      %v862 = vunpack.c.l.b16 %v825
      %v863 = vunpack.c.h.b16 %v825
      %v864 = vunpack.c.l.b16 %v826
      %v865 = vunpack.c.h.b16 %v826
      %v866 = vunpack.c.l.b16 %v827
      %v867 = vunpack.c.h.b16 %v827
      %v868 = vunpack.c.l.b16 %v828
      %v869 = vunpack.c.h.b16 %v828
      %v870 = vunpack.c.l.b16 %v829
      %v871 = vunpack.c.h.b16 %v829
      %v872 = vunpack.c.l.b16 %v830
      %v873 = vunpack.c.h.b16 %v830
      %v874 = vunpack.c.l.b16 %v831
      %v875 = vunpack.c.h.b16 %v831
      %v876 = vunpack.c.l.b16 %v832
      %v877 = vunpack.c.h.b16 %v832
      %v878 = vunpack.c.l.b16 %v833
      %v879 = vunpack.c.h.b16 %v833
      %v880 = vunpack.c.l.b16 %v834
      %v881 = vunpack.c.h.b16 %v834
      %v882 = vunpack.c.l.b16 %v835
      %v883 = vunpack.c.h.b16 %v835
      %v884 = vpack.c.b16 %v852, %v852
      %v885 = vpack.c.b16 %v853, %v853
      %v886 = vpack.c.b16 %v854, %v854
      %v887 = vpack.c.b16 %v855, %v855
      %v888 = vpack.c.b16 %v856, %v856
      %v889 = vpack.c.b16 %v857, %v857
      %v890 = vpack.c.b16 %v858, %v858
      %v891 = vpack.c.b16 %v859, %v859
      %v892 = vpack.c.b16 %v860, %v860
      %v893 = vpack.c.b16 %v861, %v861
      %v894 = vpack.c.b16 %v862, %v862
      %v895 = vpack.c.b16 %v863, %v863
      %v896 = vpack.c.b16 %v864, %v864
      %v897 = vpack.c.b16 %v865, %v865
      %v898 = vpack.c.b16 %v866, %v866
      %v899 = vpack.c.b16 %v867, %v867
      %v900 = vpack.c.b16 %v868, %v868
      %v901 = vpack.c.b16 %v869, %v869
      %v902 = vpack.c.b16 %v870, %v870
      %v903 = vpack.c.b16 %v871, %v871
      %v904 = vpack.c.b16 %v872, %v872
      %v905 = vpack.c.b16 %v873, %v873
      %v906 = vpack.c.b16 %v874, %v874
      %v907 = vpack.c.b16 %v875, %v875
      %v908 = vpack.c.b16 %v876, %v876
      %v909 = vpack.c.b16 %v877, %v877
      %v910 = vpack.c.b16 %v878, %v878
      %v911 = vpack.c.b16 %v879, %v879
      %v912 = vpack.c.b16 %v880, %v880
      %v913 = vpack.c.b16 %v881, %v881
      %v914 = vpack.c.b16 %v882, %v882
      %v915 = vpack.c.b16 %v883, %v883
      %948 = vst.msk [vmem:[#allocation2 + $0xc] sm:$0xf] %vm809, %v884
      %949 = vst.msk [vmem:[#allocation2 + $0x10] sm:$0xf] %vm809, %v885
      %950 = vst.msk [vmem:[#allocation2 + $0x14] sm:$0xf] %vm809, %v886
      %951 = vst.msk [vmem:[#allocation2 + $0x18] sm:$0xf] %vm809, %v887
      %952 = vst.msk [vmem:[#allocation2 + $0x1c] sm:$0xf] %vm809, %v888
      %953 = vst.msk [vmem:[#allocation2 + $0x20] sm:$0xf] %vm809, %v889
      %954 = vst.msk [vmem:[#allocation2 + $0x24] sm:$0xf] %vm809, %v890
      %955 = vst.msk [vmem:[#allocation2 + $0x28] sm:$0xf] %vm809, %v891
      %956 = vst.msk [vmem:[#allocation2 + $0x2c] sm:$0xf] %vm809, %v892
      %957 = vst.msk [vmem:[#allocation2 + $0x30] sm:$0xf] %vm809, %v893
      %958 = vst.msk [vmem:[#allocation2 + $0x34] sm:$0xf] %vm809, %v894
      %959 = vst.msk [vmem:[#allocation2 + $0x38] sm:$0xf] %vm809, %v895
      %960 = vst.msk [vmem:[#allocation2 + $0x3c] sm:$0xf] %vm809, %v896
      %961 = vst.msk [vmem:[#allocation2 + $0x40] sm:$0xf] %vm809, %v897
      %962 = vst.msk [vmem:[#allocation2 + $0x44] sm:$0xf] %vm809, %v898
      %963 = vst.msk [vmem:[#allocation2 + $0x48] sm:$0xf] %vm809, %v899
      %964 = vst.msk [vmem:[#allocation2 + $0x4c] sm:$0xf] %vm809, %v900
      %965 = vst.msk [vmem:[#allocation2 + $0x50] sm:$0xf] %vm809, %v901
      %966 = vst.msk [vmem:[#allocation2 + $0x54] sm:$0xf] %vm809, %v902
      %967 = vst.msk [vmem:[#allocation2 + $0x58] sm:$0xf] %vm809, %v903
      %968 = vst.msk [vmem:[#allocation2 + $0x5c] sm:$0xf] %vm809, %v904
      %969 = vst.msk [vmem:[#allocation2 + $0x60] sm:$0xf] %vm809, %v905
      %970 = vst.msk [vmem:[#allocation2 + $0x64] sm:$0xf] %vm809, %v906
      %971 = vst.msk [vmem:[#allocation2 + $0x68] sm:$0xf] %vm809, %v907
      %972 = vst.msk [vmem:[#allocation2 + $0x6c] sm:$0xf] %vm809, %v908
      %973 = vst.msk [vmem:[#allocation2 + $0x70] sm:$0xf] %vm809, %v909
      %974 = vst.msk [vmem:[#allocation2 + $0x74] sm:$0xf] %vm809, %v910
      %975 = vst.msk [vmem:[#allocation2 + $0x78] sm:$0xf] %vm809, %v911
      %976 = vst.msk [vmem:[#allocation2 + $0x7c] sm:$0xf] %vm809, %v912
      %977 = vst.msk [vmem:[#allocation2 + $0x80] sm:$0xf] %vm809, %v913
      %978 = vst.msk [vmem:[#allocation2 + $0x84] sm:$0xf] %vm809, %v914
      %979 = vst.msk [vmem:[#allocation2 + $0x88] sm:$0xf] %vm809, %v915
      %v980 = vlaneseq
      %v981 = vshrl.u32 %v980, 7
      %v982 = vadd.s32 %v981, 8
      %v983 = vadd.s32 %v981, 16
      %v984 = vadd.s32 %v981, 24
      %v985 = vadd.s32 %v981, 32
      %v986 = vadd.s32 %v981, 40
      %v987 = vadd.s32 %v981, 48
      %v988 = vadd.s32 %v981, 56
      %v989 = vadd.s32 %v981, 64
      %v990 = vadd.s32 %v981, 72
      %v991 = vadd.s32 %v981, 80
      %v992 = vadd.s32 %v981, 88
      %v993 = vadd.s32 %v981, 96
      %v994 = vadd.s32 %v981, 104
      %v995 = vadd.s32 %v981, 112
      %v996 = vadd.s32 %v981, 120
      %v997 = vadd.s32 %v981, 128
      %v998 = vadd.s32 %v981, 136
      %v999 = vadd.s32 %v981, 144
      %v1000 = vadd.s32 %v981, 152
      %v1001 = vadd.s32 %v981, 160
      %v1002 = vadd.s32 %v981, 168
      %v1003 = vadd.s32 %v981, 176
      %v1004 = vadd.s32 %v981, 184
      %v1005 = vadd.s32 %v981, 192
      %v1006 = vadd.s32 %v981, 200
      %v1007 = vadd.s32 %v981, 208
      %v1008 = vadd.s32 %v981, 216
      %v1009 = vadd.s32 %v981, 224
      %v1010 = vadd.s32 %v981, 232
      %v1011 = vadd.s32 %v981, 240
      %v1012 = vadd.s32 %v981, 248
      %vm1013 = vcmp.lt.s32.totalorder %v981, 0
      %v1014 = vsub.s32 0, %v981
      %v1015 = vsel %vm1013, %v1014, %v981
      %v1016 = vshrl.u32 %v1015, 4
      %v1017 = vand.u32 %v1015, 15
      %v1018 = vsub.s32 0, %v1017
      %v1019 = vsel %vm1013, %v1018, %v1017
      %vm1020 = vcmp.lt.s32.totalorder %v982, 0
      %v1021 = vsub.s32 0, %v982
      %v1022 = vsel %vm1020, %v1021, %v982
      %v1023 = vshrl.u32 %v1022, 4
      %v1024 = vand.u32 %v1022, 15
      %v1025 = vsub.s32 0, %v1024
      %v1026 = vsel %vm1020, %v1025, %v1024
      %vm1027 = vcmp.lt.s32.totalorder %v983, 0
      %v1028 = vsub.s32 0, %v983
      %v1029 = vsel %vm1027, %v1028, %v983
      %v1030 = vshrl.u32 %v1029, 4
      %v1031 = vand.u32 %v1029, 15
      %v1032 = vsub.s32 0, %v1031
      %v1033 = vsel %vm1027, %v1032, %v1031
      %vm1034 = vcmp.lt.s32.totalorder %v984, 0
      %v1035 = vsub.s32 0, %v984
      %v1036 = vsel %vm1034, %v1035, %v984
      %v1037 = vshrl.u32 %v1036, 4
      %v1038 = vand.u32 %v1036, 15
      %v1039 = vsub.s32 0, %v1038
      %v1040 = vsel %vm1034, %v1039, %v1038
      %vm1041 = vcmp.lt.s32.totalorder %v985, 0
      %v1042 = vsub.s32 0, %v985
      %v1043 = vsel %vm1041, %v1042, %v985
      %v1044 = vshrl.u32 %v1043, 4
      %v1045 = vand.u32 %v1043, 15
      %v1046 = vsub.s32 0, %v1045
      %v1047 = vsel %vm1041, %v1046, %v1045
      %vm1048 = vcmp.lt.s32.totalorder %v986, 0
      %v1049 = vsub.s32 0, %v986
      %v1050 = vsel %vm1048, %v1049, %v986
      %v1051 = vshrl.u32 %v1050, 4
      %v1052 = vand.u32 %v1050, 15
      %v1053 = vsub.s32 0, %v1052
      %v1054 = vsel %vm1048, %v1053, %v1052
      %vm1055 = vcmp.lt.s32.totalorder %v987, 0
      %v1056 = vsub.s32 0, %v987
      %v1057 = vsel %vm1055, %v1056, %v987
      %v1058 = vshrl.u32 %v1057, 4
      %v1059 = vand.u32 %v1057, 15
      %v1060 = vsub.s32 0, %v1059
      %v1061 = vsel %vm1055, %v1060, %v1059
      %vm1062 = vcmp.lt.s32.totalorder %v988, 0
      %v1063 = vsub.s32 0, %v988
      %v1064 = vsel %vm1062, %v1063, %v988
      %v1065 = vshrl.u32 %v1064, 4
      %v1066 = vand.u32 %v1064, 15
      %v1067 = vsub.s32 0, %v1066
      %v1068 = vsel %vm1062, %v1067, %v1066
      %vm1069 = vcmp.lt.s32.totalorder %v989, 0
      %v1070 = vsub.s32 0, %v989
      %v1071 = vsel %vm1069, %v1070, %v989
      %v1072 = vshrl.u32 %v1071, 4
      %v1073 = vand.u32 %v1071, 15
      %v1074 = vsub.s32 0, %v1073
      %v1075 = vsel %vm1069, %v1074, %v1073
      %vm1076 = vcmp.lt.s32.totalorder %v990, 0
      %v1077 = vsub.s32 0, %v990
      %v1078 = vsel %vm1076, %v1077, %v990
      %v1079 = vshrl.u32 %v1078, 4
      %v1080 = vand.u32 %v1078, 15
      %v1081 = vsub.s32 0, %v1080
      %v1082 = vsel %vm1076, %v1081, %v1080
      %vm1083 = vcmp.lt.s32.totalorder %v991, 0
      %v1084 = vsub.s32 0, %v991
      %v1085 = vsel %vm1083, %v1084, %v991
      %v1086 = vshrl.u32 %v1085, 4
      %v1087 = vand.u32 %v1085, 15
      %v1088 = vsub.s32 0, %v1087
      %v1089 = vsel %vm1083, %v1088, %v1087
      %vm1090 = vcmp.lt.s32.totalorder %v992, 0
      %v1091 = vsub.s32 0, %v992
      %v1092 = vsel %vm1090, %v1091, %v992
      %v1093 = vshrl.u32 %v1092, 4
      %v1094 = vand.u32 %v1092, 15
      %v1095 = vsub.s32 0, %v1094
      %v1096 = vsel %vm1090, %v1095, %v1094
      %vm1097 = vcmp.lt.s32.totalorder %v993, 0
      %v1098 = vsub.s32 0, %v993
      %v1099 = vsel %vm1097, %v1098, %v993
      %v1100 = vshrl.u32 %v1099, 4
      %v1101 = vand.u32 %v1099, 15
      %v1102 = vsub.s32 0, %v1101
      %v1103 = vsel %vm1097, %v1102, %v1101
      %vm1104 = vcmp.lt.s32.totalorder %v994, 0
      %v1105 = vsub.s32 0, %v994
      %v1106 = vsel %vm1104, %v1105, %v994
      %v1107 = vshrl.u32 %v1106, 4
      %v1108 = vand.u32 %v1106, 15
      %v1109 = vsub.s32 0, %v1108
      %v1110 = vsel %vm1104, %v1109, %v1108
      %vm1111 = vcmp.lt.s32.totalorder %v995, 0
      %v1112 = vsub.s32 0, %v995
      %v1113 = vsel %vm1111, %v1112, %v995
      %v1114 = vshrl.u32 %v1113, 4
      %v1115 = vand.u32 %v1113, 15
      %v1116 = vsub.s32 0, %v1115
      %v1117 = vsel %vm1111, %v1116, %v1115
      %vm1118 = vcmp.lt.s32.totalorder %v996, 0
      %v1119 = vsub.s32 0, %v996
      %v1120 = vsel %vm1118, %v1119, %v996
      %v1121 = vshrl.u32 %v1120, 4
      %v1122 = vand.u32 %v1120, 15
      %v1123 = vsub.s32 0, %v1122
      %v1124 = vsel %vm1118, %v1123, %v1122
      %vm1125 = vcmp.lt.s32.totalorder %v997, 0
      %v1126 = vsub.s32 0, %v997
      %v1127 = vsel %vm1125, %v1126, %v997
      %v1128 = vshrl.u32 %v1127, 4
      %v1129 = vand.u32 %v1127, 15
      %v1130 = vsub.s32 0, %v1129
      %v1131 = vsel %vm1125, %v1130, %v1129
      %vm1132 = vcmp.lt.s32.totalorder %v998, 0
      %v1133 = vsub.s32 0, %v998
      %v1134 = vsel %vm1132, %v1133, %v998
      %v1135 = vshrl.u32 %v1134, 4
      %v1136 = vand.u32 %v1134, 15
      %v1137 = vsub.s32 0, %v1136
      %v1138 = vsel %vm1132, %v1137, %v1136
      %vm1139 = vcmp.lt.s32.totalorder %v999, 0
      %v1140 = vsub.s32 0, %v999
      %v1141 = vsel %vm1139, %v1140, %v999
      %v1142 = vshrl.u32 %v1141, 4
      %v1143 = vand.u32 %v1141, 15
      %v1144 = vsub.s32 0, %v1143
      %v1145 = vsel %vm1139, %v1144, %v1143
      %vm1146 = vcmp.lt.s32.totalorder %v1000, 0
      %v1147 = vsub.s32 0, %v1000
      %v1148 = vsel %vm1146, %v1147, %v1000
      %v1149 = vshrl.u32 %v1148, 4
      %v1150 = vand.u32 %v1148, 15
      %v1151 = vsub.s32 0, %v1150
      %v1152 = vsel %vm1146, %v1151, %v1150
      %vm1153 = vcmp.lt.s32.totalorder %v1001, 0
      %v1154 = vsub.s32 0, %v1001
      %v1155 = vsel %vm1153, %v1154, %v1001
      %v1156 = vshrl.u32 %v1155, 4
      %v1157 = vand.u32 %v1155, 15
      %v1158 = vsub.s32 0, %v1157
      %v1159 = vsel %vm1153, %v1158, %v1157
      %vm1160 = vcmp.lt.s32.totalorder %v1002, 0
      %v1161 = vsub.s32 0, %v1002
      %v1162 = vsel %vm1160, %v1161, %v1002
      %v1163 = vshrl.u32 %v1162, 4
      %v1164 = vand.u32 %v1162, 15
      %v1165 = vsub.s32 0, %v1164
      %v1166 = vsel %vm1160, %v1165, %v1164
      %vm1167 = vcmp.lt.s32.totalorder %v1003, 0
      %v1168 = vsub.s32 0, %v1003
      %v1169 = vsel %vm1167, %v1168, %v1003
      %v1170 = vshrl.u32 %v1169, 4
      %v1171 = vand.u32 %v1169, 15
      %v1172 = vsub.s32 0, %v1171
      %v1173 = vsel %vm1167, %v1172, %v1171
      %vm1174 = vcmp.lt.s32.totalorder %v1004, 0
      %v1175 = vsub.s32 0, %v1004
      %v1176 = vsel %vm1174, %v1175, %v1004
      %v1177 = vshrl.u32 %v1176, 4
      %v1178 = vand.u32 %v1176, 15
      %v1179 = vsub.s32 0, %v1178
      %v1180 = vsel %vm1174, %v1179, %v1178
      %vm1181 = vcmp.lt.s32.totalorder %v1005, 0
      %v1182 = vsub.s32 0, %v1005
      %v1183 = vsel %vm1181, %v1182, %v1005
      %v1184 = vshrl.u32 %v1183, 4
      %v1185 = vand.u32 %v1183, 15
      %v1186 = vsub.s32 0, %v1185
      %v1187 = vsel %vm1181, %v1186, %v1185
      %vm1188 = vcmp.lt.s32.totalorder %v1006, 0
      %v1189 = vsub.s32 0, %v1006
      %v1190 = vsel %vm1188, %v1189, %v1006
      %v1191 = vshrl.u32 %v1190, 4
      %v1192 = vand.u32 %v1190, 15
      %v1193 = vsub.s32 0, %v1192
      %v1194 = vsel %vm1188, %v1193, %v1192
      %vm1195 = vcmp.lt.s32.totalorder %v1007, 0
      %v1196 = vsub.s32 0, %v1007
      %v1197 = vsel %vm1195, %v1196, %v1007
      %v1198 = vshrl.u32 %v1197, 4
      %v1199 = vand.u32 %v1197, 15
      %v1200 = vsub.s32 0, %v1199
      %v1201 = vsel %vm1195, %v1200, %v1199
      %vm1202 = vcmp.lt.s32.totalorder %v1008, 0
      %v1203 = vsub.s32 0, %v1008
      %v1204 = vsel %vm1202, %v1203, %v1008
      %v1205 = vshrl.u32 %v1204, 4
      %v1206 = vand.u32 %v1204, 15
      %v1207 = vsub.s32 0, %v1206
      %v1208 = vsel %vm1202, %v1207, %v1206
      %vm1209 = vcmp.lt.s32.totalorder %v1009, 0
      %v1210 = vsub.s32 0, %v1009
      %v1211 = vsel %vm1209, %v1210, %v1009
      %v1212 = vshrl.u32 %v1211, 4
      %v1213 = vand.u32 %v1211, 15
      %v1214 = vsub.s32 0, %v1213
      %v1215 = vsel %vm1209, %v1214, %v1213
      %vm1216 = vcmp.lt.s32.totalorder %v1010, 0
      %v1217 = vsub.s32 0, %v1010
      %v1218 = vsel %vm1216, %v1217, %v1010
      %v1219 = vshrl.u32 %v1218, 4
      %v1220 = vand.u32 %v1218, 15
      %v1221 = vsub.s32 0, %v1220
      %v1222 = vsel %vm1216, %v1221, %v1220
      %vm1223 = vcmp.lt.s32.totalorder %v1011, 0
      %v1224 = vsub.s32 0, %v1011
      %v1225 = vsel %vm1223, %v1224, %v1011
      %v1226 = vshrl.u32 %v1225, 4
      %v1227 = vand.u32 %v1225, 15
      %v1228 = vsub.s32 0, %v1227
      %v1229 = vsel %vm1223, %v1228, %v1227
      %vm1230 = vcmp.lt.s32.totalorder %v1012, 0
      %v1231 = vsub.s32 0, %v1012
      %v1232 = vsel %vm1230, %v1231, %v1012
      %v1233 = vshrl.u32 %v1232, 4
      %v1234 = vand.u32 %v1232, 15
      %v1235 = vsub.s32 0, %v1234
      %v1236 = vsel %vm1230, %v1235, %v1234
      %vm1237 = vcmp.ne.s32.totalorder %v1019, 0
      %vm1238 = vcmp.ne.s32.totalorder %v1026, 0
      %vm1239 = vcmp.ne.s32.totalorder %v1033, 0
      %vm1240 = vcmp.ne.s32.totalorder %v1040, 0
      %vm1241 = vcmp.ne.s32.totalorder %v1047, 0
      %vm1242 = vcmp.ne.s32.totalorder %v1054, 0
      %vm1243 = vcmp.ne.s32.totalorder %v1061, 0
      %vm1244 = vcmp.ne.s32.totalorder %v1068, 0
      %vm1245 = vcmp.ne.s32.totalorder %v1075, 0
      %vm1246 = vcmp.ne.s32.totalorder %v1082, 0
      %vm1247 = vcmp.ne.s32.totalorder %v1089, 0
      %vm1248 = vcmp.ne.s32.totalorder %v1096, 0
      %vm1249 = vcmp.ne.s32.totalorder %v1103, 0
      %vm1250 = vcmp.ne.s32.totalorder %v1110, 0
      %vm1251 = vcmp.ne.s32.totalorder %v1117, 0
      %vm1252 = vcmp.ne.s32.totalorder %v1124, 0
      %vm1253 = vcmp.ne.s32.totalorder %v1131, 0
      %vm1254 = vcmp.ne.s32.totalorder %v1138, 0
      %vm1255 = vcmp.ne.s32.totalorder %v1145, 0
      %vm1256 = vcmp.ne.s32.totalorder %v1152, 0
      %vm1257 = vcmp.ne.s32.totalorder %v1159, 0
      %vm1258 = vcmp.ne.s32.totalorder %v1166, 0
      %vm1259 = vcmp.ne.s32.totalorder %v1173, 0
      %vm1260 = vcmp.ne.s32.totalorder %v1180, 0
      %vm1261 = vcmp.ne.s32.totalorder %v1187, 0
      %vm1262 = vcmp.ne.s32.totalorder %v1194, 0
      %vm1263 = vcmp.ne.s32.totalorder %v1201, 0
      %vm1264 = vcmp.ne.s32.totalorder %v1208, 0
      %vm1265 = vcmp.ne.s32.totalorder %v1215, 0
      %vm1266 = vcmp.ne.s32.totalorder %v1222, 0
      %vm1267 = vcmp.ne.s32.totalorder %v1229, 0
      %vm1268 = vcmp.ne.s32.totalorder %v1236, 0
      %vm1269 = vcmp.lt.s32.totalorder %v1019, 0
      %vm1270 = vcmp.lt.s32.totalorder %v1026, 0
      %vm1271 = vcmp.lt.s32.totalorder %v1033, 0
      %vm1272 = vcmp.lt.s32.totalorder %v1040, 0
      %vm1273 = vcmp.lt.s32.totalorder %v1047, 0
      %vm1274 = vcmp.lt.s32.totalorder %v1054, 0
      %vm1275 = vcmp.lt.s32.totalorder %v1061, 0
      %vm1276 = vcmp.lt.s32.totalorder %v1068, 0
      %vm1277 = vcmp.lt.s32.totalorder %v1075, 0
      %vm1278 = vcmp.lt.s32.totalorder %v1082, 0
      %vm1279 = vcmp.lt.s32.totalorder %v1089, 0
      %vm1280 = vcmp.lt.s32.totalorder %v1096, 0
      %vm1281 = vcmp.lt.s32.totalorder %v1103, 0
      %vm1282 = vcmp.lt.s32.totalorder %v1110, 0
      %vm1283 = vcmp.lt.s32.totalorder %v1117, 0
      %vm1284 = vcmp.lt.s32.totalorder %v1124, 0
      %vm1285 = vcmp.lt.s32.totalorder %v1131, 0
      %vm1286 = vcmp.lt.s32.totalorder %v1138, 0
      %vm1287 = vcmp.lt.s32.totalorder %v1145, 0
      %vm1288 = vcmp.lt.s32.totalorder %v1152, 0
      %vm1289 = vcmp.lt.s32.totalorder %v1159, 0
      %vm1290 = vcmp.lt.s32.totalorder %v1166, 0
      %vm1291 = vcmp.lt.s32.totalorder %v1173, 0
      %vm1292 = vcmp.lt.s32.totalorder %v1180, 0
      %vm1293 = vcmp.lt.s32.totalorder %v1187, 0
      %vm1294 = vcmp.lt.s32.totalorder %v1194, 0
      %vm1295 = vcmp.lt.s32.totalorder %v1201, 0
      %vm1296 = vcmp.lt.s32.totalorder %v1208, 0
      %vm1297 = vcmp.lt.s32.totalorder %v1215, 0
      %vm1298 = vcmp.lt.s32.totalorder %v1222, 0
      %vm1299 = vcmp.lt.s32.totalorder %v1229, 0
      %vm1300 = vcmp.lt.s32.totalorder %v1236, 0
      %vm1301 = vmand %vm1269, %vm1237
      %vm1302 = vmand %vm1270, %vm1238
      %vm1303 = vmand %vm1271, %vm1239
      %vm1304 = vmand %vm1272, %vm1240
      %vm1305 = vmand %vm1273, %vm1241
      %vm1306 = vmand %vm1274, %vm1242
      %vm1307 = vmand %vm1275, %vm1243
      %vm1308 = vmand %vm1276, %vm1244
      %vm1309 = vmand %vm1277, %vm1245
      %vm1310 = vmand %vm1278, %vm1246
      %vm1311 = vmand %vm1279, %vm1247
      %vm1312 = vmand %vm1280, %vm1248
      %vm1313 = vmand %vm1281, %vm1249
      %vm1314 = vmand %vm1282, %vm1250
      %vm1315 = vmand %vm1283, %vm1251
      %vm1316 = vmand %vm1284, %vm1252
      %vm1317 = vmand %vm1285, %vm1253
      %vm1318 = vmand %vm1286, %vm1254
      %vm1319 = vmand %vm1287, %vm1255
      %vm1320 = vmand %vm1288, %vm1256
      %vm1321 = vmand %vm1289, %vm1257
      %vm1322 = vmand %vm1290, %vm1258
      %vm1323 = vmand %vm1291, %vm1259
      %vm1324 = vmand %vm1292, %vm1260
      %vm1325 = vmand %vm1293, %vm1261
      %vm1326 = vmand %vm1294, %vm1262
      %vm1327 = vmand %vm1295, %vm1263
      %vm1328 = vmand %vm1296, %vm1264
      %vm1329 = vmand %vm1297, %vm1265
      %vm1330 = vmand %vm1298, %vm1266
      %vm1331 = vmand %vm1299, %vm1267
      %vm1332 = vmand %vm1300, %vm1268
      %v1333 = vadd.s32 %v1019, 16
      %v1334 = vadd.s32 %v1026, 16
      %v1335 = vadd.s32 %v1033, 16
      %v1336 = vadd.s32 %v1040, 16
      %v1337 = vadd.s32 %v1047, 16
      %v1338 = vadd.s32 %v1054, 16
      %v1339 = vadd.s32 %v1061, 16
      %v1340 = vadd.s32 %v1068, 16
      %v1341 = vadd.s32 %v1075, 16
      %v1342 = vadd.s32 %v1082, 16
      %v1343 = vadd.s32 %v1089, 16
      %v1344 = vadd.s32 %v1096, 16
      %v1345 = vadd.s32 %v1103, 16
      %v1346 = vadd.s32 %v1110, 16
      %v1347 = vadd.s32 %v1117, 16
      %v1348 = vadd.s32 %v1124, 16
      %v1349 = vadd.s32 %v1131, 16
      %v1350 = vadd.s32 %v1138, 16
      %v1351 = vadd.s32 %v1145, 16
      %v1352 = vadd.s32 %v1152, 16
      %v1353 = vadd.s32 %v1159, 16
      %v1354 = vadd.s32 %v1166, 16
      %v1355 = vadd.s32 %v1173, 16
      %v1356 = vadd.s32 %v1180, 16
      %v1357 = vadd.s32 %v1187, 16
      %v1358 = vadd.s32 %v1194, 16
      %v1359 = vadd.s32 %v1201, 16
      %v1360 = vadd.s32 %v1208, 16
      %v1361 = vadd.s32 %v1215, 16
      %v1362 = vadd.s32 %v1222, 16
      %v1363 = vadd.s32 %v1229, 16
      %v1364 = vadd.s32 %v1236, 16
      %v1365 = vsel %vm1301, %v1333, %v1019
      %v1366 = vsel %vm1302, %v1334, %v1026
      %v1367 = vsel %vm1303, %v1335, %v1033
      %v1368 = vsel %vm1304, %v1336, %v1040
      %v1369 = vsel %vm1305, %v1337, %v1047
      %v1370 = vsel %vm1306, %v1338, %v1054
      %v1371 = vsel %vm1307, %v1339, %v1061
      %v1372 = vsel %vm1308, %v1340, %v1068
      %v1373 = vsel %vm1309, %v1341, %v1075
      %v1374 = vsel %vm1310, %v1342, %v1082
      %v1375 = vsel %vm1311, %v1343, %v1089
      %v1376 = vsel %vm1312, %v1344, %v1096
      %v1377 = vsel %vm1313, %v1345, %v1103
      %v1378 = vsel %vm1314, %v1346, %v1110
      %v1379 = vsel %vm1315, %v1347, %v1117
      %v1380 = vsel %vm1316, %v1348, %v1124
      %v1381 = vsel %vm1317, %v1349, %v1131
      %v1382 = vsel %vm1318, %v1350, %v1138
      %v1383 = vsel %vm1319, %v1351, %v1145
      %v1384 = vsel %vm1320, %v1352, %v1152
      %v1385 = vsel %vm1321, %v1353, %v1159
      %v1386 = vsel %vm1322, %v1354, %v1166
      %v1387 = vsel %vm1323, %v1355, %v1173
      %v1388 = vsel %vm1324, %v1356, %v1180
      %v1389 = vsel %vm1325, %v1357, %v1187
      %v1390 = vsel %vm1326, %v1358, %v1194
      %v1391 = vsel %vm1327, %v1359, %v1201
      %v1392 = vsel %vm1328, %v1360, %v1208
      %v1393 = vsel %vm1329, %v1361, %v1215
      %v1394 = vsel %vm1330, %v1362, %v1222
      %v1395 = vsel %vm1331, %v1363, %v1229
      %v1396 = vsel %vm1332, %v1364, %v1236
      %vm1397 = vcmp.ge.s32.totalorder %v1365, 1
      %vm1398 = vcmp.ge.s32.totalorder %v1366, 1
      %vm1399 = vcmp.ge.s32.totalorder %v1367, 1
      %vm1400 = vcmp.ge.s32.totalorder %v1368, 1
      %vm1401 = vcmp.ge.s32.totalorder %v1369, 1
      %vm1402 = vcmp.ge.s32.totalorder %v1370, 1
      %vm1403 = vcmp.ge.s32.totalorder %v1371, 1
      %vm1404 = vcmp.ge.s32.totalorder %v1372, 1
      %vm1405 = vcmp.ge.s32.totalorder %v1373, 1
      %vm1406 = vcmp.ge.s32.totalorder %v1374, 1
      %vm1407 = vcmp.ge.s32.totalorder %v1375, 1
      %vm1408 = vcmp.ge.s32.totalorder %v1376, 1
      %vm1409 = vcmp.ge.s32.totalorder %v1377, 1
      %vm1410 = vcmp.ge.s32.totalorder %v1378, 1
      %vm1411 = vcmp.ge.s32.totalorder %v1379, 1
      %vm1412 = vcmp.ge.s32.totalorder %v1380, 1
      %vm1413 = vcmp.ge.s32.totalorder %v1381, 1
      %vm1414 = vcmp.ge.s32.totalorder %v1382, 1
      %vm1415 = vcmp.ge.s32.totalorder %v1383, 1
      %vm1416 = vcmp.ge.s32.totalorder %v1384, 1
      %vm1417 = vcmp.ge.s32.totalorder %v1385, 1
      %vm1418 = vcmp.ge.s32.totalorder %v1386, 1
      %vm1419 = vcmp.ge.s32.totalorder %v1387, 1
      %vm1420 = vcmp.ge.s32.totalorder %v1388, 1
      %vm1421 = vcmp.ge.s32.totalorder %v1389, 1
      %vm1422 = vcmp.ge.s32.totalorder %v1390, 1
      %vm1423 = vcmp.ge.s32.totalorder %v1391, 1
      %vm1424 = vcmp.ge.s32.totalorder %v1392, 1
      %vm1425 = vcmp.ge.s32.totalorder %v1393, 1
      %vm1426 = vcmp.ge.s32.totalorder %v1394, 1
      %vm1427 = vcmp.ge.s32.totalorder %v1395, 1
      %vm1428 = vcmp.ge.s32.totalorder %v1396, 1
      %vm1429 = vcmp.lt.s32.totalorder %v1365, 15
      %vm1430 = vcmp.lt.s32.totalorder %v1366, 15
      %vm1431 = vcmp.lt.s32.totalorder %v1367, 15
      %vm1432 = vcmp.lt.s32.totalorder %v1368, 15
      %vm1433 = vcmp.lt.s32.totalorder %v1369, 15
      %vm1434 = vcmp.lt.s32.totalorder %v1370, 15
      %vm1435 = vcmp.lt.s32.totalorder %v1371, 15
      %vm1436 = vcmp.lt.s32.totalorder %v1372, 15
      %vm1437 = vcmp.lt.s32.totalorder %v1373, 15
      %vm1438 = vcmp.lt.s32.totalorder %v1374, 15
      %vm1439 = vcmp.lt.s32.totalorder %v1375, 15
      %vm1440 = vcmp.lt.s32.totalorder %v1376, 15
      %vm1441 = vcmp.lt.s32.totalorder %v1377, 15
      %vm1442 = vcmp.lt.s32.totalorder %v1378, 15
      %vm1443 = vcmp.lt.s32.totalorder %v1379, 15
      %vm1444 = vcmp.lt.s32.totalorder %v1380, 15
      %vm1445 = vcmp.lt.s32.totalorder %v1381, 15
      %vm1446 = vcmp.lt.s32.totalorder %v1382, 15
      %vm1447 = vcmp.lt.s32.totalorder %v1383, 15
      %vm1448 = vcmp.lt.s32.totalorder %v1384, 15
      %vm1449 = vcmp.lt.s32.totalorder %v1385, 15
      %vm1450 = vcmp.lt.s32.totalorder %v1386, 15
      %vm1451 = vcmp.lt.s32.totalorder %v1387, 15
      %vm1452 = vcmp.lt.s32.totalorder %v1388, 15
      %vm1453 = vcmp.lt.s32.totalorder %v1389, 15
      %vm1454 = vcmp.lt.s32.totalorder %v1390, 15
      %vm1455 = vcmp.lt.s32.totalorder %v1391, 15
      %vm1456 = vcmp.lt.s32.totalorder %v1392, 15
      %vm1457 = vcmp.lt.s32.totalorder %v1393, 15
      %vm1458 = vcmp.lt.s32.totalorder %v1394, 15
      %vm1459 = vcmp.lt.s32.totalorder %v1395, 15
      %vm1460 = vcmp.lt.s32.totalorder %v1396, 15
      %v1461 = vld [vmem:[#allocation2] sm:$0x8]
      %v1462 = vld [vmem:[#allocation2 + $0x4] sm:$0xf]
      %v1463 = vld [vmem:[#allocation2 + $0x8] sm:$0xf]
      %v1464 = vld [vmem:[#allocation2 + $0xc] sm:$0xf]
      %v1465 = vld [vmem:[#allocation2 + $0x10] sm:$0xf]
      %v1466 = vld [vmem:[#allocation2 + $0x14] sm:$0xf]
      %v1467 = vld [vmem:[#allocation2 + $0x18] sm:$0xf]
      %v1468 = vld [vmem:[#allocation2 + $0x1c] sm:$0xf]
      %v1469 = vld [vmem:[#allocation2 + $0x20] sm:$0xf]
      %v1470 = vld [vmem:[#allocation2 + $0x24] sm:$0xf]
      %v1471 = vld [vmem:[#allocation2 + $0x28] sm:$0xf]
      %v1472 = vld [vmem:[#allocation2 + $0x2c] sm:$0xf]
      %v1473 = vld [vmem:[#allocation2 + $0x30] sm:$0xf]
      %v1474 = vld [vmem:[#allocation2 + $0x34] sm:$0xf]
      %v1475 = vld [vmem:[#allocation2 + $0x38] sm:$0xf]
      %v1476 = vld [vmem:[#allocation2 + $0x3c] sm:$0xf]
      %v1477 = vld [vmem:[#allocation2 + $0x40] sm:$0xf]
      %v1478 = vld [vmem:[#allocation2 + $0x44] sm:$0xf]
      %v1479 = vld [vmem:[#allocation2 + $0x48] sm:$0xf]
      %v1480 = vld [vmem:[#allocation2 + $0x4c] sm:$0xf]
      %v1481 = vld [vmem:[#allocation2 + $0x50] sm:$0xf]
      %v1482 = vld [vmem:[#allocation2 + $0x54] sm:$0xf]
      %v1483 = vld [vmem:[#allocation2 + $0x58] sm:$0xf]
      %v1484 = vld [vmem:[#allocation2 + $0x5c] sm:$0xf]
      %v1485 = vld [vmem:[#allocation2 + $0x60] sm:$0xf]
      %v1486 = vld [vmem:[#allocation2 + $0x64] sm:$0xf]
      %v1487 = vld [vmem:[#allocation2 + $0x68] sm:$0xf]
      %v1488 = vld [vmem:[#allocation2 + $0x6c] sm:$0xf]
      %v1489 = vld [vmem:[#allocation2 + $0x70] sm:$0xf]
      %v1490 = vld [vmem:[#allocation2 + $0x74] sm:$0xf]
      %v1491 = vld [vmem:[#allocation2 + $0x78] sm:$0xf]
      %v1492 = vld [vmem:[#allocation2 + $0x7c] sm:$0xf]
      %v1493 = vld [vmem:[#allocation2 + $0x80] sm:$0xf]
      %vm1494 = vmpackc.low %vm1397, %vm1397
      %vm1495 = vmpackc.low %vm1398, %vm1398
      %vm1496 = vmpackc.low %vm1399, %vm1399
      %vm1497 = vmpackc.low %vm1400, %vm1400
      %vm1498 = vmpackc.low %vm1401, %vm1401
      %vm1499 = vmpackc.low %vm1402, %vm1402
      %vm1500 = vmpackc.low %vm1403, %vm1403
      %vm1501 = vmpackc.low %vm1404, %vm1404
      %vm1502 = vmpackc.low %vm1405, %vm1405
      %vm1503 = vmpackc.low %vm1406, %vm1406
      %vm1504 = vmpackc.low %vm1407, %vm1407
      %vm1505 = vmpackc.low %vm1408, %vm1408
      %vm1506 = vmpackc.low %vm1409, %vm1409
      %vm1507 = vmpackc.low %vm1410, %vm1410
      %vm1508 = vmpackc.low %vm1411, %vm1411
      %vm1509 = vmpackc.low %vm1412, %vm1412
      %vm1510 = vmpackc.low %vm1413, %vm1413
      %vm1511 = vmpackc.low %vm1414, %vm1414
      %vm1512 = vmpackc.low %vm1415, %vm1415
      %vm1513 = vmpackc.low %vm1416, %vm1416
      %vm1514 = vmpackc.low %vm1417, %vm1417
      %vm1515 = vmpackc.low %vm1418, %vm1418
      %vm1516 = vmpackc.low %vm1419, %vm1419
      %vm1517 = vmpackc.low %vm1420, %vm1420
      %vm1518 = vmpackc.low %vm1421, %vm1421
      %vm1519 = vmpackc.low %vm1422, %vm1422
      %vm1520 = vmpackc.low %vm1423, %vm1423
      %vm1521 = vmpackc.low %vm1424, %vm1424
      %vm1522 = vmpackc.low %vm1425, %vm1425
      %vm1523 = vmpackc.low %vm1426, %vm1426
      %vm1524 = vmpackc.low %vm1427, %vm1427
      %vm1525 = vmpackc.low %vm1428, %vm1428
      %v1526 = vsel %vm1494, 65537, 0
      %v1527 = vsel %vm1495, 65537, 0
      %v1528 = vsel %vm1496, 65537, 0
      %v1529 = vsel %vm1497, 65537, 0
      %v1530 = vsel %vm1498, 65537, 0
      %v1531 = vsel %vm1499, 65537, 0
      %v1532 = vsel %vm1500, 65537, 0
      %v1533 = vsel %vm1501, 65537, 0
      %v1534 = vsel %vm1502, 65537, 0
      %v1535 = vsel %vm1503, 65537, 0
      %v1536 = vsel %vm1504, 65537, 0
      %v1537 = vsel %vm1505, 65537, 0
      %v1538 = vsel %vm1506, 65537, 0
      %v1539 = vsel %vm1507, 65537, 0
      %v1540 = vsel %vm1508, 65537, 0
      %v1541 = vsel %vm1509, 65537, 0
      %v1542 = vsel %vm1510, 65537, 0
      %v1543 = vsel %vm1511, 65537, 0
      %v1544 = vsel %vm1512, 65537, 0
      %v1545 = vsel %vm1513, 65537, 0
      %v1546 = vsel %vm1514, 65537, 0
      %v1547 = vsel %vm1515, 65537, 0
      %v1548 = vsel %vm1516, 65537, 0
      %v1549 = vsel %vm1517, 65537, 0
      %v1550 = vsel %vm1518, 65537, 0
      %v1551 = vsel %vm1519, 65537, 0
      %v1552 = vsel %vm1520, 65537, 0
      %v1553 = vsel %vm1521, 65537, 0
      %v1554 = vsel %vm1522, 65537, 0
      %v1555 = vsel %vm1523, 65537, 0
      %v1556 = vsel %vm1524, 65537, 0
      %v1557 = vsel %vm1525, 65537, 0
      %vm1558 = vsmask.f32 3328
      %vm1559 = vsmask.f32 7440
      %vm1560 = vmor %vm1558, %vm1559
      %v1562 = vshll.u32 %v1526, 16
      %v1564 = vrot.slane %v1562, 5
      %v1565 = vshrl.u32 %v1526, 16
      %v1567 = vrot.slane %v1565, 4
      %v1568 = vor.u32 %v1567, %v1564
      %v1569 = vrot.slane %v1568, 4
      %v1571 = vshll.u32 %v1527, 16
      %v1573 = vrot.slane %v1571, 5
      %v1574 = vsel %vm1560, %v1569, %v1573
      %v1575 = vshrl.u32 %v1527, 16
      %v1577 = vrot.slane %v1575, 4
      %v1578 = vor.u32 %v1577, %v1573
      %v1579 = vrot.slane %v1578, 4
      %v1581 = vshll.u32 %v1528, 16
      %v1583 = vrot.slane %v1581, 5
      %v1584 = vsel %vm1560, %v1579, %v1583
      %v1585 = vshrl.u32 %v1528, 16
      %v1587 = vrot.slane %v1585, 4
      %v1588 = vor.u32 %v1587, %v1583
      %v1589 = vrot.slane %v1588, 4
      %v1591 = vshll.u32 %v1529, 16
      %v1593 = vrot.slane %v1591, 5
      %v1594 = vsel %vm1560, %v1589, %v1593
      %v1595 = vshrl.u32 %v1529, 16
      %v1597 = vrot.slane %v1595, 4
      %v1598 = vor.u32 %v1597, %v1593
      %v1599 = vrot.slane %v1598, 4
      %v1601 = vshll.u32 %v1530, 16
      %v1603 = vrot.slane %v1601, 5
      %v1604 = vsel %vm1560, %v1599, %v1603
      %v1605 = vshrl.u32 %v1530, 16
      %v1607 = vrot.slane %v1605, 4
      %v1608 = vor.u32 %v1607, %v1603
      %v1609 = vrot.slane %v1608, 4
      %v1611 = vshll.u32 %v1531, 16
      %v1613 = vrot.slane %v1611, 5
      %v1614 = vsel %vm1560, %v1609, %v1613
      %v1615 = vshrl.u32 %v1531, 16
      %v1617 = vrot.slane %v1615, 4
      %v1618 = vor.u32 %v1617, %v1613
      %v1619 = vrot.slane %v1618, 4
      %v1621 = vshll.u32 %v1532, 16
      %v1623 = vrot.slane %v1621, 5
      %v1624 = vsel %vm1560, %v1619, %v1623
      %v1625 = vshrl.u32 %v1532, 16
      %v1627 = vrot.slane %v1625, 4
      %v1628 = vor.u32 %v1627, %v1623
      %v1629 = vrot.slane %v1628, 4
      %v1631 = vshll.u32 %v1533, 16
      %v1633 = vrot.slane %v1631, 5
      %v1634 = vsel %vm1560, %v1629, %v1633
      %v1635 = vshrl.u32 %v1533, 16
      %v1637 = vrot.slane %v1635, 4
      %v1638 = vor.u32 %v1637, %v1633
      %v1639 = vrot.slane %v1638, 4
      %v1641 = vshll.u32 %v1534, 16
      %v1643 = vrot.slane %v1641, 5
      %v1644 = vsel %vm1560, %v1639, %v1643
      %v1645 = vshrl.u32 %v1534, 16
      %v1647 = vrot.slane %v1645, 4
      %v1648 = vor.u32 %v1647, %v1643
      %v1649 = vrot.slane %v1648, 4
      %v1651 = vshll.u32 %v1535, 16
      %v1653 = vrot.slane %v1651, 5
      %v1654 = vsel %vm1560, %v1649, %v1653
      %v1655 = vshrl.u32 %v1535, 16
      %v1657 = vrot.slane %v1655, 4
      %v1658 = vor.u32 %v1657, %v1653
      %v1659 = vrot.slane %v1658, 4
      %v1661 = vshll.u32 %v1536, 16
      %v1663 = vrot.slane %v1661, 5
      %v1664 = vsel %vm1560, %v1659, %v1663
      %v1665 = vshrl.u32 %v1536, 16
      %v1667 = vrot.slane %v1665, 4
      %v1668 = vor.u32 %v1667, %v1663
      %v1669 = vrot.slane %v1668, 4
      %v1671 = vshll.u32 %v1537, 16
      %v1673 = vrot.slane %v1671, 5
      %v1674 = vsel %vm1560, %v1669, %v1673
      %v1675 = vshrl.u32 %v1537, 16
      %v1677 = vrot.slane %v1675, 4
      %v1678 = vor.u32 %v1677, %v1673
      %v1679 = vrot.slane %v1678, 4
      %v1681 = vshll.u32 %v1538, 16
      %v1683 = vrot.slane %v1681, 5
      %v1684 = vsel %vm1560, %v1679, %v1683
      %v1685 = vshrl.u32 %v1538, 16
      %v1687 = vrot.slane %v1685, 4
      %v1688 = vor.u32 %v1687, %v1683
      %v1689 = vrot.slane %v1688, 4
      %v1691 = vshll.u32 %v1539, 16
      %v1693 = vrot.slane %v1691, 5
      %v1694 = vsel %vm1560, %v1689, %v1693
      %v1695 = vshrl.u32 %v1539, 16
      %v1697 = vrot.slane %v1695, 4
      %v1698 = vor.u32 %v1697, %v1693
      %v1699 = vrot.slane %v1698, 4
      %v1701 = vshll.u32 %v1540, 16
      %v1703 = vrot.slane %v1701, 5
      %v1704 = vsel %vm1560, %v1699, %v1703
      %v1705 = vshrl.u32 %v1540, 16
      %v1707 = vrot.slane %v1705, 4
      %v1708 = vor.u32 %v1707, %v1703
      %v1709 = vrot.slane %v1708, 4
      %v1711 = vshll.u32 %v1541, 16
      %v1713 = vrot.slane %v1711, 5
      %v1714 = vsel %vm1560, %v1709, %v1713
      %v1715 = vshrl.u32 %v1541, 16
      %v1717 = vrot.slane %v1715, 4
      %v1718 = vor.u32 %v1717, %v1713
      %v1719 = vrot.slane %v1718, 4
      %v1721 = vshll.u32 %v1542, 16
      %v1723 = vrot.slane %v1721, 5
      %v1724 = vsel %vm1560, %v1719, %v1723
      %v1725 = vshrl.u32 %v1542, 16
      %v1727 = vrot.slane %v1725, 4
      %v1728 = vor.u32 %v1727, %v1723
      %v1729 = vrot.slane %v1728, 4
      %v1731 = vshll.u32 %v1543, 16
      %v1733 = vrot.slane %v1731, 5
      %v1734 = vsel %vm1560, %v1729, %v1733
      %v1735 = vshrl.u32 %v1543, 16
      %v1737 = vrot.slane %v1735, 4
      %v1738 = vor.u32 %v1737, %v1733
      %v1739 = vrot.slane %v1738, 4
      %v1741 = vshll.u32 %v1544, 16
      %v1743 = vrot.slane %v1741, 5
      %v1744 = vsel %vm1560, %v1739, %v1743
      %v1745 = vshrl.u32 %v1544, 16
      %v1747 = vrot.slane %v1745, 4
      %v1748 = vor.u32 %v1747, %v1743
      %v1749 = vrot.slane %v1748, 4
      %v1751 = vshll.u32 %v1545, 16
      %v1753 = vrot.slane %v1751, 5
      %v1754 = vsel %vm1560, %v1749, %v1753
      %v1755 = vshrl.u32 %v1545, 16
      %v1757 = vrot.slane %v1755, 4
      %v1758 = vor.u32 %v1757, %v1753
      %v1759 = vrot.slane %v1758, 4
      %v1761 = vshll.u32 %v1546, 16
      %v1763 = vrot.slane %v1761, 5
      %v1764 = vsel %vm1560, %v1759, %v1763
      %v1765 = vshrl.u32 %v1546, 16
      %v1767 = vrot.slane %v1765, 4
      %v1768 = vor.u32 %v1767, %v1763
      %v1769 = vrot.slane %v1768, 4
      %v1771 = vshll.u32 %v1547, 16
      %v1773 = vrot.slane %v1771, 5
      %v1774 = vsel %vm1560, %v1769, %v1773
      %v1775 = vshrl.u32 %v1547, 16
      %v1777 = vrot.slane %v1775, 4
      %v1778 = vor.u32 %v1777, %v1773
      %v1779 = vrot.slane %v1778, 4
      %v1781 = vshll.u32 %v1548, 16
      %v1783 = vrot.slane %v1781, 5
      %v1784 = vsel %vm1560, %v1779, %v1783
      %v1785 = vshrl.u32 %v1548, 16
      %v1787 = vrot.slane %v1785, 4
      %v1788 = vor.u32 %v1787, %v1783
      %v1789 = vrot.slane %v1788, 4
      %v1791 = vshll.u32 %v1549, 16
      %v1793 = vrot.slane %v1791, 5
      %v1794 = vsel %vm1560, %v1789, %v1793
      %v1795 = vshrl.u32 %v1549, 16
      %v1797 = vrot.slane %v1795, 4
      %v1798 = vor.u32 %v1797, %v1793
      %v1799 = vrot.slane %v1798, 4
      %v1801 = vshll.u32 %v1550, 16
      %v1803 = vrot.slane %v1801, 5
      %v1804 = vsel %vm1560, %v1799, %v1803
      %v1805 = vshrl.u32 %v1550, 16
      %v1807 = vrot.slane %v1805, 4
      %v1808 = vor.u32 %v1807, %v1803
      %v1809 = vrot.slane %v1808, 4
      %v1811 = vshll.u32 %v1551, 16
      %v1813 = vrot.slane %v1811, 5
      %v1814 = vsel %vm1560, %v1809, %v1813
      %v1815 = vshrl.u32 %v1551, 16
      %v1817 = vrot.slane %v1815, 4
      %v1818 = vor.u32 %v1817, %v1813
      %v1819 = vrot.slane %v1818, 4
      %v1821 = vshll.u32 %v1552, 16
      %v1823 = vrot.slane %v1821, 5
      %v1824 = vsel %vm1560, %v1819, %v1823
      %v1825 = vshrl.u32 %v1552, 16
      %v1827 = vrot.slane %v1825, 4
      %v1828 = vor.u32 %v1827, %v1823
      %v1829 = vrot.slane %v1828, 4
      %v1831 = vshll.u32 %v1553, 16
      %v1833 = vrot.slane %v1831, 5
      %v1834 = vsel %vm1560, %v1829, %v1833
      %v1835 = vshrl.u32 %v1553, 16
      %v1837 = vrot.slane %v1835, 4
      %v1838 = vor.u32 %v1837, %v1833
      %v1839 = vrot.slane %v1838, 4
      %v1841 = vshll.u32 %v1554, 16
      %v1843 = vrot.slane %v1841, 5
      %v1844 = vsel %vm1560, %v1839, %v1843
      %v1845 = vshrl.u32 %v1554, 16
      %v1847 = vrot.slane %v1845, 4
      %v1848 = vor.u32 %v1847, %v1843
      %v1849 = vrot.slane %v1848, 4
      %v1851 = vshll.u32 %v1555, 16
      %v1853 = vrot.slane %v1851, 5
      %v1854 = vsel %vm1560, %v1849, %v1853
      %v1855 = vshrl.u32 %v1555, 16
      %v1857 = vrot.slane %v1855, 4
      %v1858 = vor.u32 %v1857, %v1853
      %v1859 = vrot.slane %v1858, 4
      %v1861 = vshll.u32 %v1556, 16
      %v1863 = vrot.slane %v1861, 5
      %v1864 = vsel %vm1560, %v1859, %v1863
      %v1865 = vshrl.u32 %v1556, 16
      %v1867 = vrot.slane %v1865, 4
      %v1868 = vor.u32 %v1867, %v1863
      %v1869 = vrot.slane %v1868, 4
      %v1871 = vshll.u32 %v1557, 16
      %v1873 = vrot.slane %v1871, 5
      %v1874 = vsel %vm1560, %v1869, %v1873
      %v1875 = vshrl.u32 %v1557, 16
      %v1877 = vrot.slane %v1875, 4
      %v1878 = vor.u32 %v1877, %v1873
      %v1879 = vrot.slane %v1878, 4
      %vm1880 = vcmp.ne.s16.totalorder %v1564, 0
      %vm1881 = vcmp.ne.s16.totalorder %v1574, 0
      %vm1882 = vcmp.ne.s16.totalorder %v1584, 0
      %vm1883 = vcmp.ne.s16.totalorder %v1594, 0
      %vm1884 = vcmp.ne.s16.totalorder %v1604, 0
      %vm1885 = vcmp.ne.s16.totalorder %v1614, 0
      %vm1886 = vcmp.ne.s16.totalorder %v1624, 0
      %vm1887 = vcmp.ne.s16.totalorder %v1634, 0
      %vm1888 = vcmp.ne.s16.totalorder %v1644, 0
      %vm1889 = vcmp.ne.s16.totalorder %v1654, 0
      %vm1890 = vcmp.ne.s16.totalorder %v1664, 0
      %vm1891 = vcmp.ne.s16.totalorder %v1674, 0
      %vm1892 = vcmp.ne.s16.totalorder %v1684, 0
      %vm1893 = vcmp.ne.s16.totalorder %v1694, 0
      %vm1894 = vcmp.ne.s16.totalorder %v1704, 0
      %vm1895 = vcmp.ne.s16.totalorder %v1714, 0
      %vm1896 = vcmp.ne.s16.totalorder %v1724, 0
      %vm1897 = vcmp.ne.s16.totalorder %v1734, 0
      %vm1898 = vcmp.ne.s16.totalorder %v1744, 0
      %vm1899 = vcmp.ne.s16.totalorder %v1754, 0
      %vm1900 = vcmp.ne.s16.totalorder %v1764, 0
      %vm1901 = vcmp.ne.s16.totalorder %v1774, 0
      %vm1902 = vcmp.ne.s16.totalorder %v1784, 0
      %vm1903 = vcmp.ne.s16.totalorder %v1794, 0
      %vm1904 = vcmp.ne.s16.totalorder %v1804, 0
      %vm1905 = vcmp.ne.s16.totalorder %v1814, 0
      %vm1906 = vcmp.ne.s16.totalorder %v1824, 0
      %vm1907 = vcmp.ne.s16.totalorder %v1834, 0
      %vm1908 = vcmp.ne.s16.totalorder %v1844, 0
      %vm1909 = vcmp.ne.s16.totalorder %v1854, 0
      %vm1910 = vcmp.ne.s16.totalorder %v1864, 0
      %vm1911 = vcmp.ne.s16.totalorder %v1874, 0
      %vm1912 = vcmp.ne.s16.totalorder %v1879, 0
      %v1913 = vsel %vm1880, %v1461, 0
      %v1914 = vsel %vm1881, %v1462, 0
      %v1915 = vsel %vm1882, %v1463, 0
      %v1916 = vsel %vm1883, %v1464, 0
      %v1917 = vsel %vm1884, %v1465, 0
      %v1918 = vsel %vm1885, %v1466, 0
      %v1919 = vsel %vm1886, %v1467, 0
      %v1920 = vsel %vm1887, %v1468, 0
      %v1921 = vsel %vm1888, %v1469, 0
      %v1922 = vsel %vm1889, %v1470, 0
      %v1923 = vsel %vm1890, %v1471, 0
      %v1924 = vsel %vm1891, %v1472, 0
      %v1925 = vsel %vm1892, %v1473, 0
      %v1926 = vsel %vm1893, %v1474, 0
      %v1927 = vsel %vm1894, %v1475, 0
      %v1928 = vsel %vm1895, %v1476, 0
      %v1929 = vsel %vm1896, %v1477, 0
      %v1930 = vsel %vm1897, %v1478, 0
      %v1931 = vsel %vm1898, %v1479, 0
      %v1932 = vsel %vm1899, %v1480, 0
      %v1933 = vsel %vm1900, %v1481, 0
      %v1934 = vsel %vm1901, %v1482, 0
      %v1935 = vsel %vm1902, %v1483, 0
      %v1936 = vsel %vm1903, %v1484, 0
      %v1937 = vsel %vm1904, %v1485, 0
      %v1938 = vsel %vm1905, %v1486, 0
      %v1939 = vsel %vm1906, %v1487, 0
      %v1940 = vsel %vm1907, %v1488, 0
      %v1941 = vsel %vm1908, %v1489, 0
      %v1942 = vsel %vm1909, %v1490, 0
      %v1943 = vsel %vm1910, %v1491, 0
      %v1944 = vsel %vm1911, %v1492, 0
      %v1945 = vsel %vm1912, %v1493, 0
      %v1946 = vld [vmem:[%s2] sm:$0x3]
      %s1947 = scalar_lea.vmem %s2, 2
      %v1948 = vld [vmem:[%s1947] sm:$0x3]
      %v1981 = vunpack.c.l.b16 %v1462
      %v1982 = vunpack.c.l.b16 %v1463
      %v1983 = vunpack.c.l.b16 %v1464
      %v1984 = vunpack.c.l.b16 %v1465
      %v1985 = vunpack.c.l.b16 %v1466
      %v1986 = vunpack.c.l.b16 %v1467
      %v1987 = vunpack.c.l.b16 %v1468
      %v1988 = vunpack.c.l.b16 %v1469
      %v1989 = vunpack.c.l.b16 %v1470
      %v1990 = vunpack.c.l.b16 %v1471
      %v1991 = vunpack.c.l.b16 %v1472
      %v1992 = vunpack.c.l.b16 %v1473
      %v1993 = vunpack.c.l.b16 %v1474
      %v1994 = vunpack.c.l.b16 %v1475
      %v1995 = vunpack.c.l.b16 %v1476
      %v1996 = vunpack.c.l.b16 %v1477
      %v1997 = vunpack.c.l.b16 %v1478
      %v1998 = vunpack.c.l.b16 %v1479
      %v1999 = vunpack.c.l.b16 %v1480
      %v2000 = vunpack.c.l.b16 %v1481
      %v2001 = vunpack.c.l.b16 %v1482
      %v2002 = vunpack.c.l.b16 %v1483
      %v2003 = vunpack.c.l.b16 %v1484
      %v2004 = vunpack.c.l.b16 %v1485
      %v2005 = vunpack.c.l.b16 %v1486
      %v2006 = vunpack.c.l.b16 %v1487
      %v2007 = vunpack.c.l.b16 %v1488
      %v2008 = vunpack.c.l.b16 %v1489
      %v2009 = vunpack.c.l.b16 %v1490
      %v2010 = vunpack.c.l.b16 %v1491
      %v2011 = vunpack.c.l.b16 %v1492
      %v2012 = vunpack.c.l.b16 %v1493
      %v2013 = vpack.c.b16 %v1982, %v1981
      %v2014 = vpack.c.b16 %v1984, %v1983
      %v2015 = vpack.c.b16 %v1986, %v1985
      %v2016 = vpack.c.b16 %v1988, %v1987
      %v2017 = vpack.c.b16 %v1990, %v1989
      %v2018 = vpack.c.b16 %v1992, %v1991
      %v2019 = vpack.c.b16 %v1994, %v1993
      %v2020 = vpack.c.b16 %v1996, %v1995
      %v2021 = vpack.c.b16 %v1998, %v1997
      %v2022 = vpack.c.b16 %v2000, %v1999
      %v2023 = vpack.c.b16 %v2002, %v2001
      %v2024 = vpack.c.b16 %v2004, %v2003
      %v2025 = vpack.c.b16 %v2006, %v2005
      %v2026 = vpack.c.b16 %v2008, %v2007
      %v2027 = vpack.c.b16 %v2010, %v2009
      %v2028 = vpack.c.b16 %v2012, %v2011
      %vm2029 = vcmask 31744
      %v2031 = vsel %vm2029, %v2013, 0
      %v2034 = vsel %vm2029, %v2014, 0
      %v2037 = vsel %vm2029, %v2015, 0
      %v2040 = vsel %vm2029, %v2016, 0
      %v2043 = vsel %vm2029, %v2017, 0
      %v2046 = vsel %vm2029, %v2018, 0
      %v2049 = vsel %vm2029, %v2019, 0
      %v2052 = vsel %vm2029, %v2020, 0
      %v2055 = vsel %vm2029, %v2021, 0
      %v2058 = vsel %vm2029, %v2022, 0
      %v2061 = vsel %vm2029, %v2023, 0
      %v2064 = vsel %vm2029, %v2024, 0
      %v2067 = vsel %vm2029, %v2025, 0
      %v2070 = vsel %vm2029, %v2026, 0
      %v2073 = vsel %vm2029, %v2027, 0
      %v2076 = vsel %vm2029, %v2028, 0
      %vm2078 = vcmask 1041408
      %v2080 = vsel %vm2078, %v1948, 0
      %2082 = vmatprep.subr.bf16.mxu0 0
      %2083 = vmatpush1.bf16.msra.mxu0 0
      %2084 = vmatprep.subr.bf16.mxu0 0
      %2085 = vmatpush1.bf16.msra.mxu0 0
      %2086 = vmatprep.subr.bf16.mxu0 0
      %2087 = vmatpush1.bf16.msra.mxu0 0
      %2088 = vmatprep.subr.bf16.mxu0 0
      %2089 = vmatpush1.bf16.msra.mxu0 0
      %2090 = vmatprep.subr.bf16.mxu0 0
      %2091 = vmatpush1.bf16.msra.mxu0 0
      %2092 = vmatprep.subr.bf16.mxu0 0
      %2093 = vmatpush1.bf16.msra.mxu0 0
      %2094 = vmatprep.subr.bf16.mxu0 0
      %2095 = vmatpush1.bf16.msra.mxu0 0
      %2096 = vmatprep.subr.bf16.mxu0 0
      %2097 = vmatpush1.bf16.msra.mxu0 %v2080
      %2098 = vmatprep.subr.bf16.mxu0 0
      %2099 = vmatpush2.bf16.msra.mxu0 0
      %2100 = vmatprep.subr.bf16.mxu0 0
      %2101 = vmatpush2.bf16.msra.mxu0 0
      %2102 = vmatprep.subr.bf16.mxu0 0
      %2103 = vmatpush2.bf16.msra.mxu0 0
      %2104 = vmatprep.subr.bf16.mxu0 0
      %2105 = vmatpush2.bf16.msra.mxu0 0
      %2106 = vmatprep.subr.bf16.mxu0 0
      %2107 = vmatpush2.bf16.msra.mxu0 0
      %2108 = vmatprep.subr.bf16.mxu0 0
      %2109 = vmatpush2.bf16.msra.mxu0 0
      %2110 = vmatprep.subr.bf16.mxu0 0
      %2111 = vmatpush2.bf16.msra.mxu0 0
      %2112 = vmatprep.subr.bf16.mxu0 0
      %2113 = vmatpush2.bf16.msra.mxu0 0
      %2114 = vmatprep.mubr.bf16.mxu0 0
      %2115 = vmatmul.mubr.bf16.gmra.mxu0 %v2031
      %v2116 = vpop.f32.mrf.mxu0
      %v2117 = vadd.f32 0.0, %v2116
      %v2118 = vpop.f32.mrf.mxu0
      %v2119 = vpop.f32.mrf.mxu0
      %v2120 = vadd.f32 0.0, %v2119
      %v2121 = vpop.f32.mrf.mxu0
      %2122 = vmatprep.mubr.bf16.mxu0 0
      %2123 = vmatmul.mubr.bf16.gmra.mxu0 %v2034
      %v2124 = vpop.f32.mrf.mxu0
      %v2125 = vadd.f32 0.0, %v2124
      %v2126 = vpop.f32.mrf.mxu0
      %v2127 = vpop.f32.mrf.mxu0
      %v2128 = vadd.f32 0.0, %v2127
      %v2129 = vpop.f32.mrf.mxu0
      %2130 = vmatprep.mubr.bf16.mxu0 0
      %2131 = vmatmul.mubr.bf16.gmra.mxu0 %v2037
      %v2132 = vpop.f32.mrf.mxu0
      %v2133 = vadd.f32 0.0, %v2132
      %v2134 = vpop.f32.mrf.mxu0
      %v2135 = vpop.f32.mrf.mxu0
      %v2136 = vadd.f32 0.0, %v2135
      %v2137 = vpop.f32.mrf.mxu0
      %2138 = vmatprep.mubr.bf16.mxu0 0
      %2139 = vmatmul.mubr.bf16.gmra.mxu0 %v2040
      %v2140 = vpop.f32.mrf.mxu0
      %v2141 = vadd.f32 0.0, %v2140
      %v2142 = vpop.f32.mrf.mxu0
      %v2143 = vpop.f32.mrf.mxu0
      %v2144 = vadd.f32 0.0, %v2143
      %v2145 = vpop.f32.mrf.mxu0
      %2146 = vmatprep.mubr.bf16.mxu0 0
      %2147 = vmatmul.mubr.bf16.gmra.mxu0 %v2043
      %v2148 = vpop.f32.mrf.mxu0
      %v2149 = vadd.f32 0.0, %v2148
      %v2150 = vpop.f32.mrf.mxu0
      %v2151 = vpop.f32.mrf.mxu0
      %v2152 = vadd.f32 0.0, %v2151
      %v2153 = vpop.f32.mrf.mxu0
      %2154 = vmatprep.mubr.bf16.mxu0 0
      %2155 = vmatmul.mubr.bf16.gmra.mxu0 %v2046
      %v2156 = vpop.f32.mrf.mxu0
      %v2157 = vadd.f32 0.0, %v2156
      %v2158 = vpop.f32.mrf.mxu0
      %v2159 = vpop.f32.mrf.mxu0
      %v2160 = vadd.f32 0.0, %v2159
      %v2161 = vpop.f32.mrf.mxu0
      %2162 = vmatprep.mubr.bf16.mxu0 0
      %2163 = vmatmul.mubr.bf16.gmra.mxu0 %v2049
      %v2164 = vpop.f32.mrf.mxu0
      %v2165 = vadd.f32 0.0, %v2164
      %v2166 = vpop.f32.mrf.mxu0
      %v2167 = vpop.f32.mrf.mxu0
      %v2168 = vadd.f32 0.0, %v2167
      %v2169 = vpop.f32.mrf.mxu0
      %2170 = vmatprep.mubr.bf16.mxu0 0
      %2171 = vmatmul.mubr.bf16.gmra.mxu0 %v2052
      %v2172 = vpop.f32.mrf.mxu0
      %v2173 = vadd.f32 0.0, %v2172
      %v2174 = vpop.f32.mrf.mxu0
      %v2175 = vpop.f32.mrf.mxu0
      %v2176 = vadd.f32 0.0, %v2175
      %v2177 = vpop.f32.mrf.mxu0
      %2178 = vmatprep.mubr.bf16.mxu0 0
      %2179 = vmatmul.mubr.bf16.gmra.mxu0 %v2055
      %v2180 = vpop.f32.mrf.mxu0
      %v2181 = vadd.f32 0.0, %v2180
      %v2182 = vpop.f32.mrf.mxu0
      %v2183 = vpop.f32.mrf.mxu0
      %v2184 = vadd.f32 0.0, %v2183
      %v2185 = vpop.f32.mrf.mxu0
      %2186 = vmatprep.mubr.bf16.mxu0 0
      %2187 = vmatmul.mubr.bf16.gmra.mxu0 %v2058
      %v2188 = vpop.f32.mrf.mxu0
      %v2189 = vadd.f32 0.0, %v2188
      %v2190 = vpop.f32.mrf.mxu0
      %v2191 = vpop.f32.mrf.mxu0
      %v2192 = vadd.f32 0.0, %v2191
      %v2193 = vpop.f32.mrf.mxu0
      %2194 = vmatprep.mubr.bf16.mxu0 0
      %2195 = vmatmul.mubr.bf16.gmra.mxu0 %v2061
      %v2196 = vpop.f32.mrf.mxu0
      %v2197 = vadd.f32 0.0, %v2196
      %v2198 = vpop.f32.mrf.mxu0
      %v2199 = vpop.f32.mrf.mxu0
      %v2200 = vadd.f32 0.0, %v2199
      %v2201 = vpop.f32.mrf.mxu0
      %2202 = vmatprep.mubr.bf16.mxu0 0
      %2203 = vmatmul.mubr.bf16.gmra.mxu0 %v2064
      %v2204 = vpop.f32.mrf.mxu0
      %v2205 = vadd.f32 0.0, %v2204
      %v2206 = vpop.f32.mrf.mxu0
      %v2207 = vpop.f32.mrf.mxu0
      %v2208 = vadd.f32 0.0, %v2207
      %v2209 = vpop.f32.mrf.mxu0
      %2210 = vmatprep.mubr.bf16.mxu0 0
      %2211 = vmatmul.mubr.bf16.gmra.mxu0 %v2067
      %v2212 = vpop.f32.mrf.mxu0
      %v2213 = vadd.f32 0.0, %v2212
      %v2214 = vpop.f32.mrf.mxu0
      %v2215 = vpop.f32.mrf.mxu0
      %v2216 = vadd.f32 0.0, %v2215
      %v2217 = vpop.f32.mrf.mxu0
      %2218 = vmatprep.mubr.bf16.mxu0 0
      %2219 = vmatmul.mubr.bf16.gmra.mxu0 %v2070
      %v2220 = vpop.f32.mrf.mxu0
      %v2221 = vadd.f32 0.0, %v2220
      %v2222 = vpop.f32.mrf.mxu0
      %v2223 = vpop.f32.mrf.mxu0
      %v2224 = vadd.f32 0.0, %v2223
      %v2225 = vpop.f32.mrf.mxu0
      %2226 = vmatprep.mubr.bf16.mxu0 0
      %2227 = vmatmul.mubr.bf16.gmra.mxu0 %v2073
      %v2228 = vpop.f32.mrf.mxu0
      %v2229 = vadd.f32 0.0, %v2228
      %v2230 = vpop.f32.mrf.mxu0
      %v2231 = vpop.f32.mrf.mxu0
      %v2232 = vadd.f32 0.0, %v2231
      %v2233 = vpop.f32.mrf.mxu0
      %2234 = vmatprep.mubr.bf16.mxu0 0
      %2235 = vmatmul.mubr.bf16.gmra.mxu0 %v2076
      %v2236 = vpop.f32.mrf.mxu0
      %v2237 = vadd.f32 0.0, %v2236
      %v2238 = vpop.f32.mrf.mxu0
      %v2239 = vpop.f32.mrf.mxu0
      %v2240 = vadd.f32 0.0, %v2239
      %v2241 = vpop.f32.mrf.mxu0
      %2242 = vdwg.mxu0
      %v2276 = vunpack.c.l.b16 %v1913
      %v2277 = vunpack.c.l.b16 %v1914
      %v2278 = vunpack.c.l.b16 %v1915
      %v2279 = vunpack.c.l.b16 %v1916
      %v2280 = vunpack.c.l.b16 %v1917
      %v2281 = vunpack.c.l.b16 %v1918
      %v2282 = vunpack.c.l.b16 %v1919
      %v2283 = vunpack.c.l.b16 %v1920
      %v2284 = vunpack.c.l.b16 %v1921
      %v2285 = vunpack.c.l.b16 %v1922
      %v2286 = vunpack.c.l.b16 %v1923
      %v2287 = vunpack.c.l.b16 %v1924
      %v2288 = vunpack.c.l.b16 %v1925
      %v2289 = vunpack.c.l.b16 %v1926
      %v2290 = vunpack.c.l.b16 %v1927
      %v2291 = vunpack.c.l.b16 %v1928
      %v2292 = vunpack.c.l.b16 %v1929
      %v2293 = vunpack.c.l.b16 %v1930
      %v2294 = vunpack.c.l.b16 %v1931
      %v2295 = vunpack.c.l.b16 %v1932
      %v2296 = vunpack.c.l.b16 %v1933
      %v2297 = vunpack.c.l.b16 %v1934
      %v2298 = vunpack.c.l.b16 %v1935
      %v2299 = vunpack.c.l.b16 %v1936
      %v2300 = vunpack.c.l.b16 %v1937
      %v2301 = vunpack.c.l.b16 %v1938
      %v2302 = vunpack.c.l.b16 %v1939
      %v2303 = vunpack.c.l.b16 %v1940
      %v2304 = vunpack.c.l.b16 %v1941
      %v2305 = vunpack.c.l.b16 %v1942
      %v2306 = vunpack.c.l.b16 %v1943
      %v2307 = vunpack.c.l.b16 %v1944
      %v2308 = vunpack.c.l.b16 %v1945
      %v2309 = vpack.c.b16 %v2277, %v2276
      %v2310 = vpack.c.b16 %v2279, %v2278
      %v2311 = vpack.c.b16 %v2281, %v2280
      %v2312 = vpack.c.b16 %v2283, %v2282
      %v2313 = vpack.c.b16 %v2285, %v2284
      %v2314 = vpack.c.b16 %v2287, %v2286
      %v2315 = vpack.c.b16 %v2289, %v2288
      %v2316 = vpack.c.b16 %v2291, %v2290
      %v2317 = vpack.c.b16 %v2293, %v2292
      %v2318 = vpack.c.b16 %v2295, %v2294
      %v2319 = vpack.c.b16 %v2297, %v2296
      %v2320 = vpack.c.b16 %v2299, %v2298
      %v2321 = vpack.c.b16 %v2301, %v2300
      %v2322 = vpack.c.b16 %v2303, %v2302
      %v2323 = vpack.c.b16 %v2305, %v2304
      %v2324 = vpack.c.b16 %v2307, %v2306
      %v2325 = vpack.c.b16 %v2308, %v2308
      %vm2326 = vsmask.f32 4352
      %v2328 = vshrl.u32 %v2309, 16
      %v2330 = vrot.slane %v2328, 3
      %v2331 = vshll.u32 %v2309, 16
      %v2333 = vrot.slane %v2331, 4
      %v2334 = vor.u32 %v2330, %v2333
      %v2336 = vshrl.u32 %v2310, 16
      %v2338 = vrot.slane %v2336, 3
      %v2339 = vshll.u32 %v2310, 16
      %v2341 = vrot.slane %v2339, 4
      %v2342 = vor.u32 %v2338, %v2341
      %v2343 = vsel %vm2326, %v2334, %v2342
      %v2345 = vshrl.u32 %v2311, 16
      %v2347 = vrot.slane %v2345, 3
      %v2348 = vshll.u32 %v2311, 16
      %v2350 = vrot.slane %v2348, 4
      %v2351 = vor.u32 %v2347, %v2350
      %v2352 = vsel %vm2326, %v2342, %v2351
      %v2354 = vshrl.u32 %v2312, 16
      %v2356 = vrot.slane %v2354, 3
      %v2357 = vshll.u32 %v2312, 16
      %v2359 = vrot.slane %v2357, 4
      %v2360 = vor.u32 %v2356, %v2359
      %v2361 = vsel %vm2326, %v2351, %v2360
      %v2363 = vshrl.u32 %v2313, 16
      %v2365 = vrot.slane %v2363, 3
      %v2366 = vshll.u32 %v2313, 16
      %v2368 = vrot.slane %v2366, 4
      %v2369 = vor.u32 %v2365, %v2368
      %v2370 = vsel %vm2326, %v2360, %v2369
      %v2372 = vshrl.u32 %v2314, 16
      %v2374 = vrot.slane %v2372, 3
      %v2375 = vshll.u32 %v2314, 16
      %v2377 = vrot.slane %v2375, 4
      %v2378 = vor.u32 %v2374, %v2377
      %v2379 = vsel %vm2326, %v2369, %v2378
      %v2381 = vshrl.u32 %v2315, 16
      %v2383 = vrot.slane %v2381, 3
      %v2384 = vshll.u32 %v2315, 16
      %v2386 = vrot.slane %v2384, 4
      %v2387 = vor.u32 %v2383, %v2386
      %v2388 = vsel %vm2326, %v2378, %v2387
      %v2390 = vshrl.u32 %v2316, 16
      %v2392 = vrot.slane %v2390, 3
      %v2393 = vshll.u32 %v2316, 16
      %v2395 = vrot.slane %v2393, 4
      %v2396 = vor.u32 %v2392, %v2395
      %v2397 = vsel %vm2326, %v2387, %v2396
      %v2399 = vshrl.u32 %v2317, 16
      %v2401 = vrot.slane %v2399, 3
      %v2402 = vshll.u32 %v2317, 16
      %v2404 = vrot.slane %v2402, 4
      %v2405 = vor.u32 %v2401, %v2404
      %v2406 = vsel %vm2326, %v2396, %v2405
      %v2408 = vshrl.u32 %v2318, 16
      %v2410 = vrot.slane %v2408, 3
      %v2411 = vshll.u32 %v2318, 16
      %v2413 = vrot.slane %v2411, 4
      %v2414 = vor.u32 %v2410, %v2413
      %v2415 = vsel %vm2326, %v2405, %v2414
      %v2417 = vshrl.u32 %v2319, 16
      %v2419 = vrot.slane %v2417, 3
      %v2420 = vshll.u32 %v2319, 16
      %v2422 = vrot.slane %v2420, 4
      %v2423 = vor.u32 %v2419, %v2422
      %v2424 = vsel %vm2326, %v2414, %v2423
      %v2426 = vshrl.u32 %v2320, 16
      %v2428 = vrot.slane %v2426, 3
      %v2429 = vshll.u32 %v2320, 16
      %v2431 = vrot.slane %v2429, 4
      %v2432 = vor.u32 %v2428, %v2431
      %v2433 = vsel %vm2326, %v2423, %v2432
      %v2435 = vshrl.u32 %v2321, 16
      %v2437 = vrot.slane %v2435, 3
      %v2438 = vshll.u32 %v2321, 16
      %v2440 = vrot.slane %v2438, 4
      %v2441 = vor.u32 %v2437, %v2440
      %v2442 = vsel %vm2326, %v2432, %v2441
      %v2444 = vshrl.u32 %v2322, 16
      %v2446 = vrot.slane %v2444, 3
      %v2447 = vshll.u32 %v2322, 16
      %v2449 = vrot.slane %v2447, 4
      %v2450 = vor.u32 %v2446, %v2449
      %v2451 = vsel %vm2326, %v2441, %v2450
      %v2453 = vshrl.u32 %v2323, 16
      %v2455 = vrot.slane %v2453, 3
      %v2456 = vshll.u32 %v2323, 16
      %v2458 = vrot.slane %v2456, 4
      %v2459 = vor.u32 %v2455, %v2458
      %v2460 = vsel %vm2326, %v2450, %v2459
      %v2462 = vshrl.u32 %v2324, 16
      %v2464 = vrot.slane %v2462, 3
      %v2465 = vshll.u32 %v2324, 16
      %v2467 = vrot.slane %v2465, 4
      %v2468 = vor.u32 %v2464, %v2467
      %v2469 = vsel %vm2326, %v2459, %v2468
      %v2471 = vshrl.u32 %v2325, 16
      %v2473 = vrot.slane %v2471, 3
      %v2474 = vshll.u32 %v2325, 16
      %v2476 = vrot.slane %v2474, 4
      %v2477 = vor.u32 %v2473, %v2476
      %v2478 = vsel %vm2326, %v2468, %v2477
      %v2480 = vsel %vm2029, %v2343, 0
      %v2483 = vsel %vm2029, %v2352, 0
      %v2486 = vsel %vm2029, %v2361, 0
      %v2489 = vsel %vm2029, %v2370, 0
      %v2492 = vsel %vm2029, %v2379, 0
      %v2495 = vsel %vm2029, %v2388, 0
      %v2498 = vsel %vm2029, %v2397, 0
      %v2501 = vsel %vm2029, %v2406, 0
      %v2504 = vsel %vm2029, %v2415, 0
      %v2507 = vsel %vm2029, %v2424, 0
      %v2510 = vsel %vm2029, %v2433, 0
      %v2513 = vsel %vm2029, %v2442, 0
      %v2516 = vsel %vm2029, %v2451, 0
      %v2519 = vsel %vm2029, %v2460, 0
      %v2522 = vsel %vm2029, %v2469, 0
      %v2525 = vsel %vm2029, %v2478, 0
      %v2528 = vsel %vm2078, %v1946, 0
      %2530 = vmatprep.subr.bf16.mxu0 0
      %2531 = vmatpush1.bf16.msra.mxu0 0
      %2532 = vmatprep.subr.bf16.mxu0 0
      %2533 = vmatpush1.bf16.msra.mxu0 0
      %2534 = vmatprep.subr.bf16.mxu0 0
      %2535 = vmatpush1.bf16.msra.mxu0 0
      %2536 = vmatprep.subr.bf16.mxu0 0
      %2537 = vmatpush1.bf16.msra.mxu0 0
      %2538 = vmatprep.subr.bf16.mxu0 0
      %2539 = vmatpush1.bf16.msra.mxu0 0
      %2540 = vmatprep.subr.bf16.mxu0 0
      %2541 = vmatpush1.bf16.msra.mxu0 0
      %2542 = vmatprep.subr.bf16.mxu0 0
      %2543 = vmatpush1.bf16.msra.mxu0 0
      %2544 = vmatprep.subr.bf16.mxu0 0
      %2545 = vmatpush1.bf16.msra.mxu0 %v2528
      %2546 = vmatprep.subr.bf16.mxu0 0
      %2547 = vmatpush2.bf16.msra.mxu0 0
      %2548 = vmatprep.subr.bf16.mxu0 0
      %2549 = vmatpush2.bf16.msra.mxu0 0
      %2550 = vmatprep.subr.bf16.mxu0 0
      %2551 = vmatpush2.bf16.msra.mxu0 0
      %2552 = vmatprep.subr.bf16.mxu0 0
      %2553 = vmatpush2.bf16.msra.mxu0 0
      %2554 = vmatprep.subr.bf16.mxu0 0
      %2555 = vmatpush2.bf16.msra.mxu0 0
      %2556 = vmatprep.subr.bf16.mxu0 0
      %2557 = vmatpush2.bf16.msra.mxu0 0
      %2558 = vmatprep.subr.bf16.mxu0 0
      %2559 = vmatpush2.bf16.msra.mxu0 0
      %2560 = vmatprep.subr.bf16.mxu0 0
      %2561 = vmatpush2.bf16.msra.mxu0 0
      %2562 = vmatprep.mubr.bf16.mxu0 0
      %2563 = vmatmul.mubr.bf16.gmra.mxu0 %v2480
      %v2564 = vpop.f32.mrf.mxu0
      %v2565 = vadd.f32 %v2117, %v2564
      %v2566 = vpop.f32.mrf.mxu0
      %v2567 = vpop.f32.mrf.mxu0
      %v2568 = vadd.f32 %v2120, %v2567
      %v2569 = vpop.f32.mrf.mxu0
      %2570 = vmatprep.mubr.bf16.mxu0 0
      %2571 = vmatmul.mubr.bf16.gmra.mxu0 %v2483
      %v2572 = vpop.f32.mrf.mxu0
      %v2573 = vadd.f32 %v2125, %v2572
      %v2574 = vpop.f32.mrf.mxu0
      %v2575 = vpop.f32.mrf.mxu0
      %v2576 = vadd.f32 %v2128, %v2575
      %v2577 = vpop.f32.mrf.mxu0
      %2578 = vmatprep.mubr.bf16.mxu0 0
      %2579 = vmatmul.mubr.bf16.gmra.mxu0 %v2486
      %v2580 = vpop.f32.mrf.mxu0
      %v2581 = vadd.f32 %v2133, %v2580
      %v2582 = vpop.f32.mrf.mxu0
      %v2583 = vpop.f32.mrf.mxu0
      %v2584 = vadd.f32 %v2136, %v2583
      %v2585 = vpop.f32.mrf.mxu0
      %2586 = vmatprep.mubr.bf16.mxu0 0
      %2587 = vmatmul.mubr.bf16.gmra.mxu0 %v2489
      %v2588 = vpop.f32.mrf.mxu0
      %v2589 = vadd.f32 %v2141, %v2588
      %v2590 = vpop.f32.mrf.mxu0
      %v2591 = vpop.f32.mrf.mxu0
      %v2592 = vadd.f32 %v2144, %v2591
      %v2593 = vpop.f32.mrf.mxu0
      %2594 = vmatprep.mubr.bf16.mxu0 0
      %2595 = vmatmul.mubr.bf16.gmra.mxu0 %v2492
      %v2596 = vpop.f32.mrf.mxu0
      %v2597 = vadd.f32 %v2149, %v2596
      %v2598 = vpop.f32.mrf.mxu0
      %v2599 = vpop.f32.mrf.mxu0
      %v2600 = vadd.f32 %v2152, %v2599
      %v2601 = vpop.f32.mrf.mxu0
      %2602 = vmatprep.mubr.bf16.mxu0 0
      %2603 = vmatmul.mubr.bf16.gmra.mxu0 %v2495
      %v2604 = vpop.f32.mrf.mxu0
      %v2605 = vadd.f32 %v2157, %v2604
      %v2606 = vpop.f32.mrf.mxu0
      %v2607 = vpop.f32.mrf.mxu0
      %v2608 = vadd.f32 %v2160, %v2607
      %v2609 = vpop.f32.mrf.mxu0
      %2610 = vmatprep.mubr.bf16.mxu0 0
      %2611 = vmatmul.mubr.bf16.gmra.mxu0 %v2498
      %v2612 = vpop.f32.mrf.mxu0
      %v2613 = vadd.f32 %v2165, %v2612
      %v2614 = vpop.f32.mrf.mxu0
      %v2615 = vpop.f32.mrf.mxu0
      %v2616 = vadd.f32 %v2168, %v2615
      %v2617 = vpop.f32.mrf.mxu0
      %2618 = vmatprep.mubr.bf16.mxu0 0
      %2619 = vmatmul.mubr.bf16.gmra.mxu0 %v2501
      %v2620 = vpop.f32.mrf.mxu0
      %v2621 = vadd.f32 %v2173, %v2620
      %v2622 = vpop.f32.mrf.mxu0
      %v2623 = vpop.f32.mrf.mxu0
      %v2624 = vadd.f32 %v2176, %v2623
      %v2625 = vpop.f32.mrf.mxu0
      %2626 = vmatprep.mubr.bf16.mxu0 0
      %2627 = vmatmul.mubr.bf16.gmra.mxu0 %v2504
      %v2628 = vpop.f32.mrf.mxu0
      %v2629 = vadd.f32 %v2181, %v2628
      %v2630 = vpop.f32.mrf.mxu0
      %v2631 = vpop.f32.mrf.mxu0
      %v2632 = vadd.f32 %v2184, %v2631
      %v2633 = vpop.f32.mrf.mxu0
      %2634 = vmatprep.mubr.bf16.mxu0 0
      %2635 = vmatmul.mubr.bf16.gmra.mxu0 %v2507
      %v2636 = vpop.f32.mrf.mxu0
      %v2637 = vadd.f32 %v2189, %v2636
      %v2638 = vpop.f32.mrf.mxu0
      %v2639 = vpop.f32.mrf.mxu0
      %v2640 = vadd.f32 %v2192, %v2639
      %v2641 = vpop.f32.mrf.mxu0
      %2642 = vmatprep.mubr.bf16.mxu0 0
      %2643 = vmatmul.mubr.bf16.gmra.mxu0 %v2510
      %v2644 = vpop.f32.mrf.mxu0
      %v2645 = vadd.f32 %v2197, %v2644
      %v2646 = vpop.f32.mrf.mxu0
      %v2647 = vpop.f32.mrf.mxu0
      %v2648 = vadd.f32 %v2200, %v2647
      %v2649 = vpop.f32.mrf.mxu0
      %2650 = vmatprep.mubr.bf16.mxu0 0
      %2651 = vmatmul.mubr.bf16.gmra.mxu0 %v2513
      %v2652 = vpop.f32.mrf.mxu0
      %v2653 = vadd.f32 %v2205, %v2652
      %v2654 = vpop.f32.mrf.mxu0
      %v2655 = vpop.f32.mrf.mxu0
      %v2656 = vadd.f32 %v2208, %v2655
      %v2657 = vpop.f32.mrf.mxu0
      %2658 = vmatprep.mubr.bf16.mxu0 0
      %2659 = vmatmul.mubr.bf16.gmra.mxu0 %v2516
      %v2660 = vpop.f32.mrf.mxu0
      %v2661 = vadd.f32 %v2213, %v2660
      %v2662 = vpop.f32.mrf.mxu0
      %v2663 = vpop.f32.mrf.mxu0
      %v2664 = vadd.f32 %v2216, %v2663
      %v2665 = vpop.f32.mrf.mxu0
      %2666 = vmatprep.mubr.bf16.mxu0 0
      %2667 = vmatmul.mubr.bf16.gmra.mxu0 %v2519
      %v2668 = vpop.f32.mrf.mxu0
      %v2669 = vadd.f32 %v2221, %v2668
      %v2670 = vpop.f32.mrf.mxu0
      %v2671 = vpop.f32.mrf.mxu0
      %v2672 = vadd.f32 %v2224, %v2671
      %v2673 = vpop.f32.mrf.mxu0
      %2674 = vmatprep.mubr.bf16.mxu0 0
      %2675 = vmatmul.mubr.bf16.gmra.mxu0 %v2522
      %v2676 = vpop.f32.mrf.mxu0
      %v2677 = vadd.f32 %v2229, %v2676
      %v2678 = vpop.f32.mrf.mxu0
      %v2679 = vpop.f32.mrf.mxu0
      %v2680 = vadd.f32 %v2232, %v2679
      %v2681 = vpop.f32.mrf.mxu0
      %2682 = vmatprep.mubr.bf16.mxu0 0
      %2683 = vmatmul.mubr.bf16.gmra.mxu0 %v2525
      %v2684 = vpop.f32.mrf.mxu0
      %v2685 = vadd.f32 %v2237, %v2684
      %v2686 = vpop.f32.mrf.mxu0
      %v2687 = vpop.f32.mrf.mxu0
      %v2688 = vadd.f32 %v2240, %v2687
      %v2689 = vpop.f32.mrf.mxu0
      %2690 = vdwg.mxu0
      %v2691 = vld [vmem:[#allocation2 + $0x4] sm:$0xf]
      %v2692 = vld [vmem:[#allocation2 + $0x8] sm:$0xf]
      %v2693 = vld [vmem:[#allocation2 + $0xc] sm:$0xf]
      %v2694 = vld [vmem:[#allocation2 + $0x10] sm:$0xf]
      %v2695 = vld [vmem:[#allocation2 + $0x14] sm:$0xf]
      %v2696 = vld [vmem:[#allocation2 + $0x18] sm:$0xf]
      %v2697 = vld [vmem:[#allocation2 + $0x1c] sm:$0xf]
      %v2698 = vld [vmem:[#allocation2 + $0x20] sm:$0xf]
      %v2699 = vld [vmem:[#allocation2 + $0x24] sm:$0xf]
      %v2700 = vld [vmem:[#allocation2 + $0x28] sm:$0xf]
      %v2701 = vld [vmem:[#allocation2 + $0x2c] sm:$0xf]
      %v2702 = vld [vmem:[#allocation2 + $0x30] sm:$0xf]
      %v2703 = vld [vmem:[#allocation2 + $0x34] sm:$0xf]
      %v2704 = vld [vmem:[#allocation2 + $0x38] sm:$0xf]
      %v2705 = vld [vmem:[#allocation2 + $0x3c] sm:$0xf]
      %v2706 = vld [vmem:[#allocation2 + $0x40] sm:$0xf]
      %v2707 = vld [vmem:[#allocation2 + $0x44] sm:$0xf]
      %v2708 = vld [vmem:[#allocation2 + $0x48] sm:$0xf]
      %v2709 = vld [vmem:[#allocation2 + $0x4c] sm:$0xf]
      %v2710 = vld [vmem:[#allocation2 + $0x50] sm:$0xf]
      %v2711 = vld [vmem:[#allocation2 + $0x54] sm:$0xf]
      %v2712 = vld [vmem:[#allocation2 + $0x58] sm:$0xf]
      %v2713 = vld [vmem:[#allocation2 + $0x5c] sm:$0xf]
      %v2714 = vld [vmem:[#allocation2 + $0x60] sm:$0xf]
      %v2715 = vld [vmem:[#allocation2 + $0x64] sm:$0xf]
      %v2716 = vld [vmem:[#allocation2 + $0x68] sm:$0xf]
      %v2717 = vld [vmem:[#allocation2 + $0x6c] sm:$0xf]
      %v2718 = vld [vmem:[#allocation2 + $0x70] sm:$0xf]
      %v2719 = vld [vmem:[#allocation2 + $0x74] sm:$0xf]
      %v2720 = vld [vmem:[#allocation2 + $0x78] sm:$0xf]
      %v2721 = vld [vmem:[#allocation2 + $0x7c] sm:$0xf]
      %v2722 = vld [vmem:[#allocation2 + $0x80] sm:$0xf]
      %v2723 = vld [vmem:[#allocation2 + $0x84] sm:$0x1]
      %vm2724 = vmpackc.low %vm1429, %vm1429
      %vm2725 = vmpackc.low %vm1430, %vm1430
      %vm2726 = vmpackc.low %vm1431, %vm1431
      %vm2727 = vmpackc.low %vm1432, %vm1432
      %vm2728 = vmpackc.low %vm1433, %vm1433
      %vm2729 = vmpackc.low %vm1434, %vm1434
      %vm2730 = vmpackc.low %vm1435, %vm1435
      %vm2731 = vmpackc.low %vm1436, %vm1436
      %vm2732 = vmpackc.low %vm1437, %vm1437
      %vm2733 = vmpackc.low %vm1438, %vm1438
      %vm2734 = vmpackc.low %vm1439, %vm1439
      %vm2735 = vmpackc.low %vm1440, %vm1440
      %vm2736 = vmpackc.low %vm1441, %vm1441
      %vm2737 = vmpackc.low %vm1442, %vm1442
      %vm2738 = vmpackc.low %vm1443, %vm1443
      %vm2739 = vmpackc.low %vm1444, %vm1444
      %vm2740 = vmpackc.low %vm1445, %vm1445
      %vm2741 = vmpackc.low %vm1446, %vm1446
      %vm2742 = vmpackc.low %vm1447, %vm1447
      %vm2743 = vmpackc.low %vm1448, %vm1448
      %vm2744 = vmpackc.low %vm1449, %vm1449
      %vm2745 = vmpackc.low %vm1450, %vm1450
      %vm2746 = vmpackc.low %vm1451, %vm1451
      %vm2747 = vmpackc.low %vm1452, %vm1452
      %vm2748 = vmpackc.low %vm1453, %vm1453
      %vm2749 = vmpackc.low %vm1454, %vm1454
      %vm2750 = vmpackc.low %vm1455, %vm1455
      %vm2751 = vmpackc.low %vm1456, %vm1456
      %vm2752 = vmpackc.low %vm1457, %vm1457
      %vm2753 = vmpackc.low %vm1458, %vm1458
      %vm2754 = vmpackc.low %vm1459, %vm1459
      %vm2755 = vmpackc.low %vm1460, %vm1460
      %v2756 = vsel %vm2724, 65537, 0
      %v2757 = vsel %vm2725, 65537, 0
      %v2758 = vsel %vm2726, 65537, 0
      %v2759 = vsel %vm2727, 65537, 0
      %v2760 = vsel %vm2728, 65537, 0
      %v2761 = vsel %vm2729, 65537, 0
      %v2762 = vsel %vm2730, 65537, 0
      %v2763 = vsel %vm2731, 65537, 0
      %v2764 = vsel %vm2732, 65537, 0
      %v2765 = vsel %vm2733, 65537, 0
      %v2766 = vsel %vm2734, 65537, 0
      %v2767 = vsel %vm2735, 65537, 0
      %v2768 = vsel %vm2736, 65537, 0
      %v2769 = vsel %vm2737, 65537, 0
      %v2770 = vsel %vm2738, 65537, 0
      %v2771 = vsel %vm2739, 65537, 0
      %v2772 = vsel %vm2740, 65537, 0
      %v2773 = vsel %vm2741, 65537, 0
      %v2774 = vsel %vm2742, 65537, 0
      %v2775 = vsel %vm2743, 65537, 0
      %v2776 = vsel %vm2744, 65537, 0
      %v2777 = vsel %vm2745, 65537, 0
      %v2778 = vsel %vm2746, 65537, 0
      %v2779 = vsel %vm2747, 65537, 0
      %v2780 = vsel %vm2748, 65537, 0
      %v2781 = vsel %vm2749, 65537, 0
      %v2782 = vsel %vm2750, 65537, 0
      %v2783 = vsel %vm2751, 65537, 0
      %v2784 = vsel %vm2752, 65537, 0
      %v2785 = vsel %vm2753, 65537, 0
      %v2786 = vsel %vm2754, 65537, 0
      %v2787 = vsel %vm2755, 65537, 0
      %vm2788 = vsmask.f32 4368
      %vm2789 = vmor %vm815, %vm2788
      %v2791 = vshrl.u32 %v2756, 16
      %v2793 = vrot.slane %v2791, 7
      %v2794 = vshll.u32 %v2756, 16
      %v2796 = vor.u32 %v2793, %v2794
      %v2797 = vrot.slane %v2793, 4
      %v2799 = vshrl.u32 %v2757, 16
      %v2801 = vrot.slane %v2799, 7
      %v2802 = vshll.u32 %v2757, 16
      %v2804 = vor.u32 %v2801, %v2802
      %v2805 = vsel %vm2789, %v2797, %v2804
      %v2806 = vrot.slane %v2801, 4
      %v2808 = vshrl.u32 %v2758, 16
      %v2810 = vrot.slane %v2808, 7
      %v2811 = vshll.u32 %v2758, 16
      %v2813 = vor.u32 %v2810, %v2811
      %v2814 = vsel %vm2789, %v2806, %v2813
      %v2815 = vrot.slane %v2810, 4
      %v2817 = vshrl.u32 %v2759, 16
      %v2819 = vrot.slane %v2817, 7
      %v2820 = vshll.u32 %v2759, 16
      %v2822 = vor.u32 %v2819, %v2820
      %v2823 = vsel %vm2789, %v2815, %v2822
      %v2824 = vrot.slane %v2819, 4
      %v2826 = vshrl.u32 %v2760, 16
      %v2828 = vrot.slane %v2826, 7
      %v2829 = vshll.u32 %v2760, 16
      %v2831 = vor.u32 %v2828, %v2829
      %v2832 = vsel %vm2789, %v2824, %v2831
      %v2833 = vrot.slane %v2828, 4
      %v2835 = vshrl.u32 %v2761, 16
      %v2837 = vrot.slane %v2835, 7
      %v2838 = vshll.u32 %v2761, 16
      %v2840 = vor.u32 %v2837, %v2838
      %v2841 = vsel %vm2789, %v2833, %v2840
      %v2842 = vrot.slane %v2837, 4
      %v2844 = vshrl.u32 %v2762, 16
      %v2846 = vrot.slane %v2844, 7
      %v2847 = vshll.u32 %v2762, 16
      %v2849 = vor.u32 %v2846, %v2847
      %v2850 = vsel %vm2789, %v2842, %v2849
      %v2851 = vrot.slane %v2846, 4
      %v2853 = vshrl.u32 %v2763, 16
      %v2855 = vrot.slane %v2853, 7
      %v2856 = vshll.u32 %v2763, 16
      %v2858 = vor.u32 %v2855, %v2856
      %v2859 = vsel %vm2789, %v2851, %v2858
      %v2860 = vrot.slane %v2855, 4
      %v2862 = vshrl.u32 %v2764, 16
      %v2864 = vrot.slane %v2862, 7
      %v2865 = vshll.u32 %v2764, 16
      %v2867 = vor.u32 %v2864, %v2865
      %v2868 = vsel %vm2789, %v2860, %v2867
      %v2869 = vrot.slane %v2864, 4
      %v2871 = vshrl.u32 %v2765, 16
      %v2873 = vrot.slane %v2871, 7
      %v2874 = vshll.u32 %v2765, 16
      %v2876 = vor.u32 %v2873, %v2874
      %v2877 = vsel %vm2789, %v2869, %v2876
      %v2878 = vrot.slane %v2873, 4
      %v2880 = vshrl.u32 %v2766, 16
      %v2882 = vrot.slane %v2880, 7
      %v2883 = vshll.u32 %v2766, 16
      %v2885 = vor.u32 %v2882, %v2883
      %v2886 = vsel %vm2789, %v2878, %v2885
      %v2887 = vrot.slane %v2882, 4
      %v2889 = vshrl.u32 %v2767, 16
      %v2891 = vrot.slane %v2889, 7
      %v2892 = vshll.u32 %v2767, 16
      %v2894 = vor.u32 %v2891, %v2892
      %v2895 = vsel %vm2789, %v2887, %v2894
      %v2896 = vrot.slane %v2891, 4
      %v2898 = vshrl.u32 %v2768, 16
      %v2900 = vrot.slane %v2898, 7
      %v2901 = vshll.u32 %v2768, 16
      %v2903 = vor.u32 %v2900, %v2901
      %v2904 = vsel %vm2789, %v2896, %v2903
      %v2905 = vrot.slane %v2900, 4
      %v2907 = vshrl.u32 %v2769, 16
      %v2909 = vrot.slane %v2907, 7
      %v2910 = vshll.u32 %v2769, 16
      %v2912 = vor.u32 %v2909, %v2910
      %v2913 = vsel %vm2789, %v2905, %v2912
      %v2914 = vrot.slane %v2909, 4
      %v2916 = vshrl.u32 %v2770, 16
      %v2918 = vrot.slane %v2916, 7
      %v2919 = vshll.u32 %v2770, 16
      %v2921 = vor.u32 %v2918, %v2919
      %v2922 = vsel %vm2789, %v2914, %v2921
      %v2923 = vrot.slane %v2918, 4
      %v2925 = vshrl.u32 %v2771, 16
      %v2927 = vrot.slane %v2925, 7
      %v2928 = vshll.u32 %v2771, 16
      %v2930 = vor.u32 %v2927, %v2928
      %v2931 = vsel %vm2789, %v2923, %v2930
      %v2932 = vrot.slane %v2927, 4
      %v2934 = vshrl.u32 %v2772, 16
      %v2936 = vrot.slane %v2934, 7
      %v2937 = vshll.u32 %v2772, 16
      %v2939 = vor.u32 %v2936, %v2937
      %v2940 = vsel %vm2789, %v2932, %v2939
      %v2941 = vrot.slane %v2936, 4
      %v2943 = vshrl.u32 %v2773, 16
      %v2945 = vrot.slane %v2943, 7
      %v2946 = vshll.u32 %v2773, 16
      %v2948 = vor.u32 %v2945, %v2946
      %v2949 = vsel %vm2789, %v2941, %v2948
      %v2950 = vrot.slane %v2945, 4
      %v2952 = vshrl.u32 %v2774, 16
      %v2954 = vrot.slane %v2952, 7
      %v2955 = vshll.u32 %v2774, 16
      %v2957 = vor.u32 %v2954, %v2955
      %v2958 = vsel %vm2789, %v2950, %v2957
      %v2959 = vrot.slane %v2954, 4
      %v2961 = vshrl.u32 %v2775, 16
      %v2963 = vrot.slane %v2961, 7
      %v2964 = vshll.u32 %v2775, 16
      %v2966 = vor.u32 %v2963, %v2964
      %v2967 = vsel %vm2789, %v2959, %v2966
      %v2968 = vrot.slane %v2963, 4
      %v2970 = vshrl.u32 %v2776, 16
      %v2972 = vrot.slane %v2970, 7
      %v2973 = vshll.u32 %v2776, 16
      %v2975 = vor.u32 %v2972, %v2973
      %v2976 = vsel %vm2789, %v2968, %v2975
      %v2977 = vrot.slane %v2972, 4
      %v2979 = vshrl.u32 %v2777, 16
      %v2981 = vrot.slane %v2979, 7
      %v2982 = vshll.u32 %v2777, 16
      %v2984 = vor.u32 %v2981, %v2982
      %v2985 = vsel %vm2789, %v2977, %v2984
      %v2986 = vrot.slane %v2981, 4
      %v2988 = vshrl.u32 %v2778, 16
      %v2990 = vrot.slane %v2988, 7
      %v2991 = vshll.u32 %v2778, 16
      %v2993 = vor.u32 %v2990, %v2991
      %v2994 = vsel %vm2789, %v2986, %v2993
      %v2995 = vrot.slane %v2990, 4
      %v2997 = vshrl.u32 %v2779, 16
      %v2999 = vrot.slane %v2997, 7
      %v3000 = vshll.u32 %v2779, 16
      %v3002 = vor.u32 %v2999, %v3000
      %v3003 = vsel %vm2789, %v2995, %v3002
      %v3004 = vrot.slane %v2999, 4
      %v3006 = vshrl.u32 %v2780, 16
      %v3008 = vrot.slane %v3006, 7
      %v3009 = vshll.u32 %v2780, 16
      %v3011 = vor.u32 %v3008, %v3009
      %v3012 = vsel %vm2789, %v3004, %v3011
      %v3013 = vrot.slane %v3008, 4
      %v3015 = vshrl.u32 %v2781, 16
      %v3017 = vrot.slane %v3015, 7
      %v3018 = vshll.u32 %v2781, 16
      %v3020 = vor.u32 %v3017, %v3018
      %v3021 = vsel %vm2789, %v3013, %v3020
      %v3022 = vrot.slane %v3017, 4
      %v3024 = vshrl.u32 %v2782, 16
      %v3026 = vrot.slane %v3024, 7
      %v3027 = vshll.u32 %v2782, 16
      %v3029 = vor.u32 %v3026, %v3027
      %v3030 = vsel %vm2789, %v3022, %v3029
      %v3031 = vrot.slane %v3026, 4
      %v3033 = vshrl.u32 %v2783, 16
      %v3035 = vrot.slane %v3033, 7
      %v3036 = vshll.u32 %v2783, 16
      %v3038 = vor.u32 %v3035, %v3036
      %v3039 = vsel %vm2789, %v3031, %v3038
      %v3040 = vrot.slane %v3035, 4
      %v3042 = vshrl.u32 %v2784, 16
      %v3044 = vrot.slane %v3042, 7
      %v3045 = vshll.u32 %v2784, 16
      %v3047 = vor.u32 %v3044, %v3045
      %v3048 = vsel %vm2789, %v3040, %v3047
      %v3049 = vrot.slane %v3044, 4
      %v3051 = vshrl.u32 %v2785, 16
      %v3053 = vrot.slane %v3051, 7
      %v3054 = vshll.u32 %v2785, 16
      %v3056 = vor.u32 %v3053, %v3054
      %v3057 = vsel %vm2789, %v3049, %v3056
      %v3058 = vrot.slane %v3053, 4
      %v3060 = vshrl.u32 %v2786, 16
      %v3062 = vrot.slane %v3060, 7
      %v3063 = vshll.u32 %v2786, 16
      %v3065 = vor.u32 %v3062, %v3063
      %v3066 = vsel %vm2789, %v3058, %v3065
      %v3067 = vrot.slane %v3062, 4
      %v3069 = vshrl.u32 %v2787, 16
      %v3071 = vrot.slane %v3069, 7
      %v3072 = vshll.u32 %v2787, 16
      %v3074 = vor.u32 %v3071, %v3072
      %v3075 = vsel %vm2789, %v3067, %v3074
      %v3076 = vrot.slane %v3071, 4
      %vm3077 = vcmp.ne.s16.totalorder %v2796, 0
      %vm3078 = vcmp.ne.s16.totalorder %v2805, 0
      %vm3079 = vcmp.ne.s16.totalorder %v2814, 0
      %vm3080 = vcmp.ne.s16.totalorder %v2823, 0
      %vm3081 = vcmp.ne.s16.totalorder %v2832, 0
      %vm3082 = vcmp.ne.s16.totalorder %v2841, 0
      %vm3083 = vcmp.ne.s16.totalorder %v2850, 0
      %vm3084 = vcmp.ne.s16.totalorder %v2859, 0
      %vm3085 = vcmp.ne.s16.totalorder %v2868, 0
      %vm3086 = vcmp.ne.s16.totalorder %v2877, 0
      %vm3087 = vcmp.ne.s16.totalorder %v2886, 0
      %vm3088 = vcmp.ne.s16.totalorder %v2895, 0
      %vm3089 = vcmp.ne.s16.totalorder %v2904, 0
      %vm3090 = vcmp.ne.s16.totalorder %v2913, 0
      %vm3091 = vcmp.ne.s16.totalorder %v2922, 0
      %vm3092 = vcmp.ne.s16.totalorder %v2931, 0
      %vm3093 = vcmp.ne.s16.totalorder %v2940, 0
      %vm3094 = vcmp.ne.s16.totalorder %v2949, 0
      %vm3095 = vcmp.ne.s16.totalorder %v2958, 0
      %vm3096 = vcmp.ne.s16.totalorder %v2967, 0
      %vm3097 = vcmp.ne.s16.totalorder %v2976, 0
      %vm3098 = vcmp.ne.s16.totalorder %v2985, 0
      %vm3099 = vcmp.ne.s16.totalorder %v2994, 0
      %vm3100 = vcmp.ne.s16.totalorder %v3003, 0
      %vm3101 = vcmp.ne.s16.totalorder %v3012, 0
      %vm3102 = vcmp.ne.s16.totalorder %v3021, 0
      %vm3103 = vcmp.ne.s16.totalorder %v3030, 0
      %vm3104 = vcmp.ne.s16.totalorder %v3039, 0
      %vm3105 = vcmp.ne.s16.totalorder %v3048, 0
      %vm3106 = vcmp.ne.s16.totalorder %v3057, 0
      %vm3107 = vcmp.ne.s16.totalorder %v3066, 0
      %vm3108 = vcmp.ne.s16.totalorder %v3075, 0
      %vm3109 = vcmp.ne.s16.totalorder %v3076, 0
      %v3110 = vsel %vm3077, %v2691, 0
      %v3111 = vsel %vm3078, %v2692, 0
      %v3112 = vsel %vm3079, %v2693, 0
      %v3113 = vsel %vm3080, %v2694, 0
      %v3114 = vsel %vm3081, %v2695, 0
      %v3115 = vsel %vm3082, %v2696, 0
      %v3116 = vsel %vm3083, %v2697, 0
      %v3117 = vsel %vm3084, %v2698, 0
      %v3118 = vsel %vm3085, %v2699, 0
      %v3119 = vsel %vm3086, %v2700, 0
      %v3120 = vsel %vm3087, %v2701, 0
      %v3121 = vsel %vm3088, %v2702, 0
      %v3122 = vsel %vm3089, %v2703, 0
      %v3123 = vsel %vm3090, %v2704, 0
      %v3124 = vsel %vm3091, %v2705, 0
      %v3125 = vsel %vm3092, %v2706, 0
      %v3126 = vsel %vm3093, %v2707, 0
      %v3127 = vsel %vm3094, %v2708, 0
      %v3128 = vsel %vm3095, %v2709, 0
      %v3129 = vsel %vm3096, %v2710, 0
      %v3130 = vsel %vm3097, %v2711, 0
      %v3131 = vsel %vm3098, %v2712, 0
      %v3132 = vsel %vm3099, %v2713, 0
      %v3133 = vsel %vm3100, %v2714, 0
      %v3134 = vsel %vm3101, %v2715, 0
      %v3135 = vsel %vm3102, %v2716, 0
      %v3136 = vsel %vm3103, %v2717, 0
      %v3137 = vsel %vm3104, %v2718, 0
      %v3138 = vsel %vm3105, %v2719, 0
      %v3139 = vsel %vm3106, %v2720, 0
      %v3140 = vsel %vm3107, %v2721, 0
      %v3141 = vsel %vm3108, %v2722, 0
      %v3142 = vsel %vm3109, %v2723, 0
      %s3143 = scalar_lea.vmem %s2, 4
      %v3144 = vld [vmem:[%s3143] sm:$0x3]
      %v3178 = vunpack.c.l.b16 %v3110
      %v3179 = vunpack.c.l.b16 %v3111
      %v3180 = vunpack.c.l.b16 %v3112
      %v3181 = vunpack.c.l.b16 %v3113
      %v3182 = vunpack.c.l.b16 %v3114
      %v3183 = vunpack.c.l.b16 %v3115
      %v3184 = vunpack.c.l.b16 %v3116
      %v3185 = vunpack.c.l.b16 %v3117
      %v3186 = vunpack.c.l.b16 %v3118
      %v3187 = vunpack.c.l.b16 %v3119
      %v3188 = vunpack.c.l.b16 %v3120
      %v3189 = vunpack.c.l.b16 %v3121
      %v3190 = vunpack.c.l.b16 %v3122
      %v3191 = vunpack.c.l.b16 %v3123
      %v3192 = vunpack.c.l.b16 %v3124
      %v3193 = vunpack.c.l.b16 %v3125
      %v3194 = vunpack.c.l.b16 %v3126
      %v3195 = vunpack.c.l.b16 %v3127
      %v3196 = vunpack.c.l.b16 %v3128
      %v3197 = vunpack.c.l.b16 %v3129
      %v3198 = vunpack.c.l.b16 %v3130
      %v3199 = vunpack.c.l.b16 %v3131
      %v3200 = vunpack.c.l.b16 %v3132
      %v3201 = vunpack.c.l.b16 %v3133
      %v3202 = vunpack.c.l.b16 %v3134
      %v3203 = vunpack.c.l.b16 %v3135
      %v3204 = vunpack.c.l.b16 %v3136
      %v3205 = vunpack.c.l.b16 %v3137
      %v3206 = vunpack.c.l.b16 %v3138
      %v3207 = vunpack.c.l.b16 %v3139
      %v3208 = vunpack.c.l.b16 %v3140
      %v3209 = vunpack.c.l.b16 %v3141
      %v3210 = vunpack.c.l.b16 %v3142
      %v3211 = vpack.c.b16 %v3179, %v3178
      %v3212 = vpack.c.b16 %v3181, %v3180
      %v3213 = vpack.c.b16 %v3183, %v3182
      %v3214 = vpack.c.b16 %v3185, %v3184
      %v3215 = vpack.c.b16 %v3187, %v3186
      %v3216 = vpack.c.b16 %v3189, %v3188
      %v3217 = vpack.c.b16 %v3191, %v3190
      %v3218 = vpack.c.b16 %v3193, %v3192
      %v3219 = vpack.c.b16 %v3195, %v3194
      %v3220 = vpack.c.b16 %v3197, %v3196
      %v3221 = vpack.c.b16 %v3199, %v3198
      %v3222 = vpack.c.b16 %v3201, %v3200
      %v3223 = vpack.c.b16 %v3203, %v3202
      %v3224 = vpack.c.b16 %v3205, %v3204
      %v3225 = vpack.c.b16 %v3207, %v3206
      %v3226 = vpack.c.b16 %v3209, %v3208
      %v3227 = vpack.c.b16 %v3210, %v3210
      %vm3228 = vsmask.f32 7424
      %v3230 = vshrl.u32 %v3211, 16
      %v3232 = vshll.u32 %v3211, 16
      %v3234 = vrot.slane %v3232, 1
      %v3235 = vor.u32 %v3230, %v3234
      %v3237 = vshll.u32 %v3212, 16
      %v3239 = vrot.slane %v3237, 1
      %v3240 = vsel %vm3228, %v3235, %v3239
      %v3241 = vshrl.u32 %v3212, 16
      %v3243 = vor.u32 %v3241, %v3239
      %v3245 = vshll.u32 %v3213, 16
      %v3247 = vrot.slane %v3245, 1
      %v3248 = vsel %vm3228, %v3243, %v3247
      %v3249 = vshrl.u32 %v3213, 16
      %v3251 = vor.u32 %v3249, %v3247
      %v3253 = vshll.u32 %v3214, 16
      %v3255 = vrot.slane %v3253, 1
      %v3256 = vsel %vm3228, %v3251, %v3255
      %v3257 = vshrl.u32 %v3214, 16
      %v3259 = vor.u32 %v3257, %v3255
      %v3261 = vshll.u32 %v3215, 16
      %v3263 = vrot.slane %v3261, 1
      %v3264 = vsel %vm3228, %v3259, %v3263
      %v3265 = vshrl.u32 %v3215, 16
      %v3267 = vor.u32 %v3265, %v3263
      %v3269 = vshll.u32 %v3216, 16
      %v3271 = vrot.slane %v3269, 1
      %v3272 = vsel %vm3228, %v3267, %v3271
      %v3273 = vshrl.u32 %v3216, 16
      %v3275 = vor.u32 %v3273, %v3271
      %v3277 = vshll.u32 %v3217, 16
      %v3279 = vrot.slane %v3277, 1
      %v3280 = vsel %vm3228, %v3275, %v3279
      %v3281 = vshrl.u32 %v3217, 16
      %v3283 = vor.u32 %v3281, %v3279
      %v3285 = vshll.u32 %v3218, 16
      %v3287 = vrot.slane %v3285, 1
      %v3288 = vsel %vm3228, %v3283, %v3287
      %v3289 = vshrl.u32 %v3218, 16
      %v3291 = vor.u32 %v3289, %v3287
      %v3293 = vshll.u32 %v3219, 16
      %v3295 = vrot.slane %v3293, 1
      %v3296 = vsel %vm3228, %v3291, %v3295
      %v3297 = vshrl.u32 %v3219, 16
      %v3299 = vor.u32 %v3297, %v3295
      %v3301 = vshll.u32 %v3220, 16
      %v3303 = vrot.slane %v3301, 1
      %v3304 = vsel %vm3228, %v3299, %v3303
      %v3305 = vshrl.u32 %v3220, 16
      %v3307 = vor.u32 %v3305, %v3303
      %v3309 = vshll.u32 %v3221, 16
      %v3311 = vrot.slane %v3309, 1
      %v3312 = vsel %vm3228, %v3307, %v3311
      %v3313 = vshrl.u32 %v3221, 16
      %v3315 = vor.u32 %v3313, %v3311
      %v3317 = vshll.u32 %v3222, 16
      %v3319 = vrot.slane %v3317, 1
      %v3320 = vsel %vm3228, %v3315, %v3319
      %v3321 = vshrl.u32 %v3222, 16
      %v3323 = vor.u32 %v3321, %v3319
      %v3325 = vshll.u32 %v3223, 16
      %v3327 = vrot.slane %v3325, 1
      %v3328 = vsel %vm3228, %v3323, %v3327
      %v3329 = vshrl.u32 %v3223, 16
      %v3331 = vor.u32 %v3329, %v3327
      %v3333 = vshll.u32 %v3224, 16
      %v3335 = vrot.slane %v3333, 1
      %v3336 = vsel %vm3228, %v3331, %v3335
      %v3337 = vshrl.u32 %v3224, 16
      %v3339 = vor.u32 %v3337, %v3335
      %v3341 = vshll.u32 %v3225, 16
      %v3343 = vrot.slane %v3341, 1
      %v3344 = vsel %vm3228, %v3339, %v3343
      %v3345 = vshrl.u32 %v3225, 16
      %v3347 = vor.u32 %v3345, %v3343
      %v3349 = vshll.u32 %v3226, 16
      %v3351 = vrot.slane %v3349, 1
      %v3352 = vsel %vm3228, %v3347, %v3351
      %v3353 = vshrl.u32 %v3226, 16
      %v3355 = vor.u32 %v3353, %v3351
      %v3357 = vshll.u32 %v3227, 16
      %v3359 = vrot.slane %v3357, 1
      %v3360 = vsel %vm3228, %v3355, %v3359
      %v3362 = vsel %vm2029, %v3240, 0
      %v3365 = vsel %vm2029, %v3248, 0
      %v3368 = vsel %vm2029, %v3256, 0
      %v3371 = vsel %vm2029, %v3264, 0
      %v3374 = vsel %vm2029, %v3272, 0
      %v3377 = vsel %vm2029, %v3280, 0
      %v3380 = vsel %vm2029, %v3288, 0
      %v3383 = vsel %vm2029, %v3296, 0
      %v3386 = vsel %vm2029, %v3304, 0
      %v3389 = vsel %vm2029, %v3312, 0
      %v3392 = vsel %vm2029, %v3320, 0
      %v3395 = vsel %vm2029, %v3328, 0
      %v3398 = vsel %vm2029, %v3336, 0
      %v3401 = vsel %vm2029, %v3344, 0
      %v3404 = vsel %vm2029, %v3352, 0
      %v3407 = vsel %vm2029, %v3360, 0
      %v3410 = vsel %vm2078, %v3144, 0
      %3412 = vmatprep.subr.bf16.mxu0 0
      %3413 = vmatpush1.bf16.msra.mxu0 0
      %3414 = vmatprep.subr.bf16.mxu0 0
      %3415 = vmatpush1.bf16.msra.mxu0 0
      %3416 = vmatprep.subr.bf16.mxu0 0
      %3417 = vmatpush1.bf16.msra.mxu0 0
      %3418 = vmatprep.subr.bf16.mxu0 0
      %3419 = vmatpush1.bf16.msra.mxu0 0
      %3420 = vmatprep.subr.bf16.mxu0 0
      %3421 = vmatpush1.bf16.msra.mxu0 0
      %3422 = vmatprep.subr.bf16.mxu0 0
      %3423 = vmatpush1.bf16.msra.mxu0 0
      %3424 = vmatprep.subr.bf16.mxu0 0
      %3425 = vmatpush1.bf16.msra.mxu0 0
      %3426 = vmatprep.subr.bf16.mxu0 0
      %3427 = vmatpush1.bf16.msra.mxu0 %v3410
      %3428 = vmatprep.subr.bf16.mxu0 0
      %3429 = vmatpush2.bf16.msra.mxu0 0
      %3430 = vmatprep.subr.bf16.mxu0 0
      %3431 = vmatpush2.bf16.msra.mxu0 0
      %3432 = vmatprep.subr.bf16.mxu0 0
      %3433 = vmatpush2.bf16.msra.mxu0 0
      %3434 = vmatprep.subr.bf16.mxu0 0
      %3435 = vmatpush2.bf16.msra.mxu0 0
      %3436 = vmatprep.subr.bf16.mxu0 0
      %3437 = vmatpush2.bf16.msra.mxu0 0
      %3438 = vmatprep.subr.bf16.mxu0 0
      %3439 = vmatpush2.bf16.msra.mxu0 0
      %3440 = vmatprep.subr.bf16.mxu0 0
      %3441 = vmatpush2.bf16.msra.mxu0 0
      %3442 = vmatprep.subr.bf16.mxu0 0
      %3443 = vmatpush2.bf16.msra.mxu0 0
      %3444 = vmatprep.mubr.bf16.mxu0 0
      %3445 = vmatmul.mubr.bf16.gmra.mxu0 %v3362
      %v3446 = vpop.f32.mrf.mxu0
      %v3447 = vadd.f32 0.0, %v3446
      %v3448 = vpop.f32.mrf.mxu0
      %v3449 = vpop.f32.mrf.mxu0
      %v3450 = vadd.f32 0.0, %v3449
      %v3451 = vpop.f32.mrf.mxu0
      %3452 = vmatprep.mubr.bf16.mxu0 0
      %3453 = vmatmul.mubr.bf16.gmra.mxu0 %v3365
      %v3454 = vpop.f32.mrf.mxu0
      %v3455 = vadd.f32 0.0, %v3454
      %v3456 = vpop.f32.mrf.mxu0
      %v3457 = vpop.f32.mrf.mxu0
      %v3458 = vadd.f32 0.0, %v3457
      %v3459 = vpop.f32.mrf.mxu0
      %3460 = vmatprep.mubr.bf16.mxu0 0
      %3461 = vmatmul.mubr.bf16.gmra.mxu0 %v3368
      %v3462 = vpop.f32.mrf.mxu0
      %v3463 = vadd.f32 0.0, %v3462
      %v3464 = vpop.f32.mrf.mxu0
      %v3465 = vpop.f32.mrf.mxu0
      %v3466 = vadd.f32 0.0, %v3465
      %v3467 = vpop.f32.mrf.mxu0
      %3468 = vmatprep.mubr.bf16.mxu0 0
      %3469 = vmatmul.mubr.bf16.gmra.mxu0 %v3371
      %v3470 = vpop.f32.mrf.mxu0
      %v3471 = vadd.f32 0.0, %v3470
      %v3472 = vpop.f32.mrf.mxu0
      %v3473 = vpop.f32.mrf.mxu0
      %v3474 = vadd.f32 0.0, %v3473
      %v3475 = vpop.f32.mrf.mxu0
      %3476 = vmatprep.mubr.bf16.mxu0 0
      %3477 = vmatmul.mubr.bf16.gmra.mxu0 %v3374
      %v3478 = vpop.f32.mrf.mxu0
      %v3479 = vadd.f32 0.0, %v3478
      %v3480 = vpop.f32.mrf.mxu0
      %v3481 = vpop.f32.mrf.mxu0
      %v3482 = vadd.f32 0.0, %v3481
      %v3483 = vpop.f32.mrf.mxu0
      %3484 = vmatprep.mubr.bf16.mxu0 0
      %3485 = vmatmul.mubr.bf16.gmra.mxu0 %v3377
      %v3486 = vpop.f32.mrf.mxu0
      %v3487 = vadd.f32 0.0, %v3486
      %v3488 = vpop.f32.mrf.mxu0
      %v3489 = vpop.f32.mrf.mxu0
      %v3490 = vadd.f32 0.0, %v3489
      %v3491 = vpop.f32.mrf.mxu0
      %3492 = vmatprep.mubr.bf16.mxu0 0
      %3493 = vmatmul.mubr.bf16.gmra.mxu0 %v3380
      %v3494 = vpop.f32.mrf.mxu0
      %v3495 = vadd.f32 0.0, %v3494
      %v3496 = vpop.f32.mrf.mxu0
      %v3497 = vpop.f32.mrf.mxu0
      %v3498 = vadd.f32 0.0, %v3497
      %v3499 = vpop.f32.mrf.mxu0
      %3500 = vmatprep.mubr.bf16.mxu0 0
      %3501 = vmatmul.mubr.bf16.gmra.mxu0 %v3383
      %v3502 = vpop.f32.mrf.mxu0
      %v3503 = vadd.f32 0.0, %v3502
      %v3504 = vpop.f32.mrf.mxu0
      %v3505 = vpop.f32.mrf.mxu0
      %v3506 = vadd.f32 0.0, %v3505
      %v3507 = vpop.f32.mrf.mxu0
      %3508 = vmatprep.mubr.bf16.mxu0 0
      %3509 = vmatmul.mubr.bf16.gmra.mxu0 %v3386
      %v3510 = vpop.f32.mrf.mxu0
      %v3511 = vadd.f32 0.0, %v3510
      %v3512 = vpop.f32.mrf.mxu0
      %v3513 = vpop.f32.mrf.mxu0
      %v3514 = vadd.f32 0.0, %v3513
      %v3515 = vpop.f32.mrf.mxu0
      %3516 = vmatprep.mubr.bf16.mxu0 0
      %3517 = vmatmul.mubr.bf16.gmra.mxu0 %v3389
      %v3518 = vpop.f32.mrf.mxu0
      %v3519 = vadd.f32 0.0, %v3518
      %v3520 = vpop.f32.mrf.mxu0
      %v3521 = vpop.f32.mrf.mxu0
      %v3522 = vadd.f32 0.0, %v3521
      %v3523 = vpop.f32.mrf.mxu0
      %3524 = vmatprep.mubr.bf16.mxu0 0
      %3525 = vmatmul.mubr.bf16.gmra.mxu0 %v3392
      %v3526 = vpop.f32.mrf.mxu0
      %v3527 = vadd.f32 0.0, %v3526
      %v3528 = vpop.f32.mrf.mxu0
      %v3529 = vpop.f32.mrf.mxu0
      %v3530 = vadd.f32 0.0, %v3529
      %v3531 = vpop.f32.mrf.mxu0
      %3532 = vmatprep.mubr.bf16.mxu0 0
      %3533 = vmatmul.mubr.bf16.gmra.mxu0 %v3395
      %v3534 = vpop.f32.mrf.mxu0
      %v3535 = vadd.f32 0.0, %v3534
      %v3536 = vpop.f32.mrf.mxu0
      %v3537 = vpop.f32.mrf.mxu0
      %v3538 = vadd.f32 0.0, %v3537
      %v3539 = vpop.f32.mrf.mxu0
      %3540 = vmatprep.mubr.bf16.mxu0 0
      %3541 = vmatmul.mubr.bf16.gmra.mxu0 %v3398
      %v3542 = vpop.f32.mrf.mxu0
      %v3543 = vadd.f32 0.0, %v3542
      %v3544 = vpop.f32.mrf.mxu0
      %v3545 = vpop.f32.mrf.mxu0
      %v3546 = vadd.f32 0.0, %v3545
      %v3547 = vpop.f32.mrf.mxu0
      %3548 = vmatprep.mubr.bf16.mxu0 0
      %3549 = vmatmul.mubr.bf16.gmra.mxu0 %v3401
      %v3550 = vpop.f32.mrf.mxu0
      %v3551 = vadd.f32 0.0, %v3550
      %v3552 = vpop.f32.mrf.mxu0
      %v3553 = vpop.f32.mrf.mxu0
      %v3554 = vadd.f32 0.0, %v3553
      %v3555 = vpop.f32.mrf.mxu0
      %3556 = vmatprep.mubr.bf16.mxu0 0
      %3557 = vmatmul.mubr.bf16.gmra.mxu0 %v3404
      %v3558 = vpop.f32.mrf.mxu0
      %v3559 = vadd.f32 0.0, %v3558
      %v3560 = vpop.f32.mrf.mxu0
      %v3561 = vpop.f32.mrf.mxu0
      %v3562 = vadd.f32 0.0, %v3561
      %v3563 = vpop.f32.mrf.mxu0
      %3564 = vmatprep.mubr.bf16.mxu0 0
      %3565 = vmatmul.mubr.bf16.gmra.mxu0 %v3407
      %v3566 = vpop.f32.mrf.mxu0
      %v3567 = vadd.f32 0.0, %v3566
      %v3568 = vpop.f32.mrf.mxu0
      %v3569 = vpop.f32.mrf.mxu0
      %v3570 = vadd.f32 0.0, %v3569
      %v3571 = vpop.f32.mrf.mxu0
      %3572 = vdwg.mxu0
      %v3573 = vadd.f32 %v2565, %v3447
      %v3574 = vadd.f32 %v2568, %v3450
      %v3575 = vadd.f32 %v2573, %v3455
      %v3576 = vadd.f32 %v2576, %v3458
      %v3577 = vadd.f32 %v2581, %v3463
      %v3578 = vadd.f32 %v2584, %v3466
      %v3579 = vadd.f32 %v2589, %v3471
      %v3580 = vadd.f32 %v2592, %v3474
      %v3581 = vadd.f32 %v2597, %v3479
      %v3582 = vadd.f32 %v2600, %v3482
      %v3583 = vadd.f32 %v2605, %v3487
      %v3584 = vadd.f32 %v2608, %v3490
      %v3585 = vadd.f32 %v2613, %v3495
      %v3586 = vadd.f32 %v2616, %v3498
      %v3587 = vadd.f32 %v2621, %v3503
      %v3588 = vadd.f32 %v2624, %v3506
      %v3589 = vadd.f32 %v2629, %v3511
      %v3590 = vadd.f32 %v2632, %v3514
      %v3591 = vadd.f32 %v2637, %v3519
      %v3592 = vadd.f32 %v2640, %v3522
      %v3593 = vadd.f32 %v2645, %v3527
      %v3594 = vadd.f32 %v2648, %v3530
      %v3595 = vadd.f32 %v2653, %v3535
      %v3596 = vadd.f32 %v2656, %v3538
      %v3597 = vadd.f32 %v2661, %v3543
      %v3598 = vadd.f32 %v2664, %v3546
      %v3599 = vadd.f32 %v2669, %v3551
      %v3600 = vadd.f32 %v2672, %v3554
      %v3601 = vadd.f32 %v2677, %v3559
      %v3602 = vadd.f32 %v2680, %v3562
      %v3603 = vadd.f32 %v2685, %v3567
      %v3604 = vadd.f32 %v2688, %v3570
      %v3605 = vld [vmem:[#allocation2 + $0x8] sm:$0x8]
      %v3606 = vld [vmem:[#allocation2 + $0xc] sm:$0xf]
      %v3607 = vld [vmem:[#allocation2 + $0x10] sm:$0xf]
      %v3608 = vld [vmem:[#allocation2 + $0x14] sm:$0xf]
      %v3609 = vld [vmem:[#allocation2 + $0x18] sm:$0xf]
      %v3610 = vld [vmem:[#allocation2 + $0x1c] sm:$0xf]
      %v3611 = vld [vmem:[#allocation2 + $0x20] sm:$0xf]
      %v3612 = vld [vmem:[#allocation2 + $0x24] sm:$0xf]
      %v3613 = vld [vmem:[#allocation2 + $0x28] sm:$0xf]
      %v3614 = vld [vmem:[#allocation2 + $0x2c] sm:$0xf]
      %v3615 = vld [vmem:[#allocation2 + $0x30] sm:$0xf]
      %v3616 = vld [vmem:[#allocation2 + $0x34] sm:$0xf]
      %v3617 = vld [vmem:[#allocation2 + $0x38] sm:$0xf]
      %v3618 = vld [vmem:[#allocation2 + $0x3c] sm:$0xf]
      %v3619 = vld [vmem:[#allocation2 + $0x40] sm:$0xf]
      %v3620 = vld [vmem:[#allocation2 + $0x44] sm:$0xf]
      %v3621 = vld [vmem:[#allocation2 + $0x48] sm:$0xf]
      %v3622 = vld [vmem:[#allocation2 + $0x4c] sm:$0xf]
      %v3623 = vld [vmem:[#allocation2 + $0x50] sm:$0xf]
      %v3624 = vld [vmem:[#allocation2 + $0x54] sm:$0xf]
      %v3625 = vld [vmem:[#allocation2 + $0x58] sm:$0xf]
      %v3626 = vld [vmem:[#allocation2 + $0x5c] sm:$0xf]
      %v3627 = vld [vmem:[#allocation2 + $0x60] sm:$0xf]
      %v3628 = vld [vmem:[#allocation2 + $0x64] sm:$0xf]
      %v3629 = vld [vmem:[#allocation2 + $0x68] sm:$0xf]
      %v3630 = vld [vmem:[#allocation2 + $0x6c] sm:$0xf]
      %v3631 = vld [vmem:[#allocation2 + $0x70] sm:$0xf]
      %v3632 = vld [vmem:[#allocation2 + $0x74] sm:$0xf]
      %v3633 = vld [vmem:[#allocation2 + $0x78] sm:$0xf]
      %v3634 = vld [vmem:[#allocation2 + $0x7c] sm:$0xf]
      %v3635 = vld [vmem:[#allocation2 + $0x80] sm:$0xf]
      %v3636 = vld [vmem:[#allocation2 + $0x84] sm:$0xf]
      %v3637 = vld [vmem:[#allocation2 + $0x88] sm:$0xf]
      %v3638 = vsel %vm1880, %v3605, 0
      %v3639 = vsel %vm1881, %v3606, 0
      %v3640 = vsel %vm1882, %v3607, 0
      %v3641 = vsel %vm1883, %v3608, 0
      %v3642 = vsel %vm1884, %v3609, 0
      %v3643 = vsel %vm1885, %v3610, 0
      %v3644 = vsel %vm1886, %v3611, 0
      %v3645 = vsel %vm1887, %v3612, 0
      %v3646 = vsel %vm1888, %v3613, 0
      %v3647 = vsel %vm1889, %v3614, 0
      %v3648 = vsel %vm1890, %v3615, 0
      %v3649 = vsel %vm1891, %v3616, 0
      %v3650 = vsel %vm1892, %v3617, 0
      %v3651 = vsel %vm1893, %v3618, 0
      %v3652 = vsel %vm1894, %v3619, 0
      %v3653 = vsel %vm1895, %v3620, 0
      %v3654 = vsel %vm1896, %v3621, 0
      %v3655 = vsel %vm1897, %v3622, 0
      %v3656 = vsel %vm1898, %v3623, 0
      %v3657 = vsel %vm1899, %v3624, 0
      %v3658 = vsel %vm1900, %v3625, 0
      %v3659 = vsel %vm1901, %v3626, 0
      %v3660 = vsel %vm1902, %v3627, 0
      %v3661 = vsel %vm1903, %v3628, 0
      %v3662 = vsel %vm1904, %v3629, 0
      %v3663 = vsel %vm1905, %v3630, 0
      %v3664 = vsel %vm1906, %v3631, 0
      %v3665 = vsel %vm1907, %v3632, 0
      %v3666 = vsel %vm1908, %v3633, 0
      %v3667 = vsel %vm1909, %v3634, 0
      %v3668 = vsel %vm1910, %v3635, 0
      %v3669 = vsel %vm1911, %v3636, 0
      %v3670 = vsel %vm1912, %v3637, 0
      %s3671 = scalar_lea.vmem %s2, 6
      %v3672 = vld [vmem:[%s3671] sm:$0x3]
      %v3706 = vunpack.c.l.b16 %v3638
      %v3707 = vunpack.c.l.b16 %v3639
      %v3708 = vunpack.c.l.b16 %v3640
      %v3709 = vunpack.c.l.b16 %v3641
      %v3710 = vunpack.c.l.b16 %v3642
      %v3711 = vunpack.c.l.b16 %v3643
      %v3712 = vunpack.c.l.b16 %v3644
      %v3713 = vunpack.c.l.b16 %v3645
      %v3714 = vunpack.c.l.b16 %v3646
      %v3715 = vunpack.c.l.b16 %v3647
      %v3716 = vunpack.c.l.b16 %v3648
      %v3717 = vunpack.c.l.b16 %v3649
      %v3718 = vunpack.c.l.b16 %v3650
      %v3719 = vunpack.c.l.b16 %v3651
      %v3720 = vunpack.c.l.b16 %v3652
      %v3721 = vunpack.c.l.b16 %v3653
      %v3722 = vunpack.c.l.b16 %v3654
      %v3723 = vunpack.c.l.b16 %v3655
      %v3724 = vunpack.c.l.b16 %v3656
      %v3725 = vunpack.c.l.b16 %v3657
      %v3726 = vunpack.c.l.b16 %v3658
      %v3727 = vunpack.c.l.b16 %v3659
      %v3728 = vunpack.c.l.b16 %v3660
      %v3729 = vunpack.c.l.b16 %v3661
      %v3730 = vunpack.c.l.b16 %v3662
      %v3731 = vunpack.c.l.b16 %v3663
      %v3732 = vunpack.c.l.b16 %v3664
      %v3733 = vunpack.c.l.b16 %v3665
      %v3734 = vunpack.c.l.b16 %v3666
      %v3735 = vunpack.c.l.b16 %v3667
      %v3736 = vunpack.c.l.b16 %v3668
      %v3737 = vunpack.c.l.b16 %v3669
      %v3738 = vunpack.c.l.b16 %v3670
      %v3739 = vpack.c.b16 %v3707, %v3706
      %v3740 = vpack.c.b16 %v3709, %v3708
      %v3741 = vpack.c.b16 %v3711, %v3710
      %v3742 = vpack.c.b16 %v3713, %v3712
      %v3743 = vpack.c.b16 %v3715, %v3714
      %v3744 = vpack.c.b16 %v3717, %v3716
      %v3745 = vpack.c.b16 %v3719, %v3718
      %v3746 = vpack.c.b16 %v3721, %v3720
      %v3747 = vpack.c.b16 %v3723, %v3722
      %v3748 = vpack.c.b16 %v3725, %v3724
      %v3749 = vpack.c.b16 %v3727, %v3726
      %v3750 = vpack.c.b16 %v3729, %v3728
      %v3751 = vpack.c.b16 %v3731, %v3730
      %v3752 = vpack.c.b16 %v3733, %v3732
      %v3753 = vpack.c.b16 %v3735, %v3734
      %v3754 = vpack.c.b16 %v3737, %v3736
      %v3755 = vpack.c.b16 %v3738, %v3738
      %v3757 = vshrl.u32 %v3739, 16
      %v3759 = vrot.slane %v3757, 3
      %v3760 = vshll.u32 %v3739, 16
      %v3762 = vrot.slane %v3760, 4
      %v3763 = vor.u32 %v3759, %v3762
      %v3765 = vshrl.u32 %v3740, 16
      %v3767 = vrot.slane %v3765, 3
      %v3768 = vshll.u32 %v3740, 16
      %v3770 = vrot.slane %v3768, 4
      %v3771 = vor.u32 %v3767, %v3770
      %v3772 = vsel %vm2326, %v3763, %v3771
      %v3774 = vshrl.u32 %v3741, 16
      %v3776 = vrot.slane %v3774, 3
      %v3777 = vshll.u32 %v3741, 16
      %v3779 = vrot.slane %v3777, 4
      %v3780 = vor.u32 %v3776, %v3779
      %v3781 = vsel %vm2326, %v3771, %v3780
      %v3783 = vshrl.u32 %v3742, 16
      %v3785 = vrot.slane %v3783, 3
      %v3786 = vshll.u32 %v3742, 16
      %v3788 = vrot.slane %v3786, 4
      %v3789 = vor.u32 %v3785, %v3788
      %v3790 = vsel %vm2326, %v3780, %v3789
      %v3792 = vshrl.u32 %v3743, 16
      %v3794 = vrot.slane %v3792, 3
      %v3795 = vshll.u32 %v3743, 16
      %v3797 = vrot.slane %v3795, 4
      %v3798 = vor.u32 %v3794, %v3797
      %v3799 = vsel %vm2326, %v3789, %v3798
      %v3801 = vshrl.u32 %v3744, 16
      %v3803 = vrot.slane %v3801, 3
      %v3804 = vshll.u32 %v3744, 16
      %v3806 = vrot.slane %v3804, 4
      %v3807 = vor.u32 %v3803, %v3806
      %v3808 = vsel %vm2326, %v3798, %v3807
      %v3810 = vshrl.u32 %v3745, 16
      %v3812 = vrot.slane %v3810, 3
      %v3813 = vshll.u32 %v3745, 16
      %v3815 = vrot.slane %v3813, 4
      %v3816 = vor.u32 %v3812, %v3815
      %v3817 = vsel %vm2326, %v3807, %v3816
      %v3819 = vshrl.u32 %v3746, 16
      %v3821 = vrot.slane %v3819, 3
      %v3822 = vshll.u32 %v3746, 16
      %v3824 = vrot.slane %v3822, 4
      %v3825 = vor.u32 %v3821, %v3824
      %v3826 = vsel %vm2326, %v3816, %v3825
      %v3828 = vshrl.u32 %v3747, 16
      %v3830 = vrot.slane %v3828, 3
      %v3831 = vshll.u32 %v3747, 16
      %v3833 = vrot.slane %v3831, 4
      %v3834 = vor.u32 %v3830, %v3833
      %v3835 = vsel %vm2326, %v3825, %v3834
      %v3837 = vshrl.u32 %v3748, 16
      %v3839 = vrot.slane %v3837, 3
      %v3840 = vshll.u32 %v3748, 16
      %v3842 = vrot.slane %v3840, 4
      %v3843 = vor.u32 %v3839, %v3842
      %v3844 = vsel %vm2326, %v3834, %v3843
      %v3846 = vshrl.u32 %v3749, 16
      %v3848 = vrot.slane %v3846, 3
      %v3849 = vshll.u32 %v3749, 16
      %v3851 = vrot.slane %v3849, 4
      %v3852 = vor.u32 %v3848, %v3851
      %v3853 = vsel %vm2326, %v3843, %v3852
      %v3855 = vshrl.u32 %v3750, 16
      %v3857 = vrot.slane %v3855, 3
      %v3858 = vshll.u32 %v3750, 16
      %v3860 = vrot.slane %v3858, 4
      %v3861 = vor.u32 %v3857, %v3860
      %v3862 = vsel %vm2326, %v3852, %v3861
      %v3864 = vshrl.u32 %v3751, 16
      %v3866 = vrot.slane %v3864, 3
      %v3867 = vshll.u32 %v3751, 16
      %v3869 = vrot.slane %v3867, 4
      %v3870 = vor.u32 %v3866, %v3869
      %v3871 = vsel %vm2326, %v3861, %v3870
      %v3873 = vshrl.u32 %v3752, 16
      %v3875 = vrot.slane %v3873, 3
      %v3876 = vshll.u32 %v3752, 16
      %v3878 = vrot.slane %v3876, 4
      %v3879 = vor.u32 %v3875, %v3878
      %v3880 = vsel %vm2326, %v3870, %v3879
      %v3882 = vshrl.u32 %v3753, 16
      %v3884 = vrot.slane %v3882, 3
      %v3885 = vshll.u32 %v3753, 16
      %v3887 = vrot.slane %v3885, 4
      %v3888 = vor.u32 %v3884, %v3887
      %v3889 = vsel %vm2326, %v3879, %v3888
      %v3891 = vshrl.u32 %v3754, 16
      %v3893 = vrot.slane %v3891, 3
      %v3894 = vshll.u32 %v3754, 16
      %v3896 = vrot.slane %v3894, 4
      %v3897 = vor.u32 %v3893, %v3896
      %v3898 = vsel %vm2326, %v3888, %v3897
      %v3900 = vshrl.u32 %v3755, 16
      %v3902 = vrot.slane %v3900, 3
      %v3903 = vshll.u32 %v3755, 16
      %v3905 = vrot.slane %v3903, 4
      %v3906 = vor.u32 %v3902, %v3905
      %v3907 = vsel %vm2326, %v3897, %v3906
      %v3909 = vsel %vm2029, %v3772, 0
      %v3912 = vsel %vm2029, %v3781, 0
      %v3915 = vsel %vm2029, %v3790, 0
      %v3918 = vsel %vm2029, %v3799, 0
      %v3921 = vsel %vm2029, %v3808, 0
      %v3924 = vsel %vm2029, %v3817, 0
      %v3927 = vsel %vm2029, %v3826, 0
      %v3930 = vsel %vm2029, %v3835, 0
      %v3933 = vsel %vm2029, %v3844, 0
      %v3936 = vsel %vm2029, %v3853, 0
      %v3939 = vsel %vm2029, %v3862, 0
      %v3942 = vsel %vm2029, %v3871, 0
      %v3945 = vsel %vm2029, %v3880, 0
      %v3948 = vsel %vm2029, %v3889, 0
      %v3951 = vsel %vm2029, %v3898, 0
      %v3954 = vsel %vm2029, %v3907, 0
      %v3957 = vsel %vm2078, %v3672, 0
      %3959 = vmatprep.subr.bf16.mxu0 0
      %3960 = vmatpush1.bf16.msra.mxu0 0
      %3961 = vmatprep.subr.bf16.mxu0 0
      %3962 = vmatpush1.bf16.msra.mxu0 0
      %3963 = vmatprep.subr.bf16.mxu0 0
      %3964 = vmatpush1.bf16.msra.mxu0 0
      %3965 = vmatprep.subr.bf16.mxu0 0
      %3966 = vmatpush1.bf16.msra.mxu0 0
      %3967 = vmatprep.subr.bf16.mxu0 0
      %3968 = vmatpush1.bf16.msra.mxu0 0
      %3969 = vmatprep.subr.bf16.mxu0 0
      %3970 = vmatpush1.bf16.msra.mxu0 0
      %3971 = vmatprep.subr.bf16.mxu0 0
      %3972 = vmatpush1.bf16.msra.mxu0 0
      %3973 = vmatprep.subr.bf16.mxu0 0
      %3974 = vmatpush1.bf16.msra.mxu0 %v3957
      %3975 = vmatprep.subr.bf16.mxu0 0
      %3976 = vmatpush2.bf16.msra.mxu0 0
      %3977 = vmatprep.subr.bf16.mxu0 0
      %3978 = vmatpush2.bf16.msra.mxu0 0
      %3979 = vmatprep.subr.bf16.mxu0 0
      %3980 = vmatpush2.bf16.msra.mxu0 0
      %3981 = vmatprep.subr.bf16.mxu0 0
      %3982 = vmatpush2.bf16.msra.mxu0 0
      %3983 = vmatprep.subr.bf16.mxu0 0
      %3984 = vmatpush2.bf16.msra.mxu0 0
      %3985 = vmatprep.subr.bf16.mxu0 0
      %3986 = vmatpush2.bf16.msra.mxu0 0
      %3987 = vmatprep.subr.bf16.mxu0 0
      %3988 = vmatpush2.bf16.msra.mxu0 0
      %3989 = vmatprep.subr.bf16.mxu0 0
      %3990 = vmatpush2.bf16.msra.mxu0 0
      %3991 = vmatprep.mubr.bf16.mxu0 0
      %3992 = vmatmul.mubr.bf16.gmra.mxu0 %v3909
      %v3993 = vpop.f32.mrf.mxu0
      %v3994 = vadd.f32 0.0, %v3993
      %v3995 = vpop.f32.mrf.mxu0
      %v3996 = vpop.f32.mrf.mxu0
      %v3997 = vadd.f32 0.0, %v3996
      %v3998 = vpop.f32.mrf.mxu0
      %3999 = vmatprep.mubr.bf16.mxu0 0
      %4000 = vmatmul.mubr.bf16.gmra.mxu0 %v3912
      %v4001 = vpop.f32.mrf.mxu0
      %v4002 = vadd.f32 0.0, %v4001
      %v4003 = vpop.f32.mrf.mxu0
      %v4004 = vpop.f32.mrf.mxu0
      %v4005 = vadd.f32 0.0, %v4004
      %v4006 = vpop.f32.mrf.mxu0
      %4007 = vmatprep.mubr.bf16.mxu0 0
      %4008 = vmatmul.mubr.bf16.gmra.mxu0 %v3915
      %v4009 = vpop.f32.mrf.mxu0
      %v4010 = vadd.f32 0.0, %v4009
      %v4011 = vpop.f32.mrf.mxu0
      %v4012 = vpop.f32.mrf.mxu0
      %v4013 = vadd.f32 0.0, %v4012
      %v4014 = vpop.f32.mrf.mxu0
      %4015 = vmatprep.mubr.bf16.mxu0 0
      %4016 = vmatmul.mubr.bf16.gmra.mxu0 %v3918
      %v4017 = vpop.f32.mrf.mxu0
      %v4018 = vadd.f32 0.0, %v4017
      %v4019 = vpop.f32.mrf.mxu0
      %v4020 = vpop.f32.mrf.mxu0
      %v4021 = vadd.f32 0.0, %v4020
      %v4022 = vpop.f32.mrf.mxu0
      %4023 = vmatprep.mubr.bf16.mxu0 0
      %4024 = vmatmul.mubr.bf16.gmra.mxu0 %v3921
      %v4025 = vpop.f32.mrf.mxu0
      %v4026 = vadd.f32 0.0, %v4025
      %v4027 = vpop.f32.mrf.mxu0
      %v4028 = vpop.f32.mrf.mxu0
      %v4029 = vadd.f32 0.0, %v4028
      %v4030 = vpop.f32.mrf.mxu0
      %4031 = vmatprep.mubr.bf16.mxu0 0
      %4032 = vmatmul.mubr.bf16.gmra.mxu0 %v3924
      %v4033 = vpop.f32.mrf.mxu0
      %v4034 = vadd.f32 0.0, %v4033
      %v4035 = vpop.f32.mrf.mxu0
      %v4036 = vpop.f32.mrf.mxu0
      %v4037 = vadd.f32 0.0, %v4036
      %v4038 = vpop.f32.mrf.mxu0
      %4039 = vmatprep.mubr.bf16.mxu0 0
      %4040 = vmatmul.mubr.bf16.gmra.mxu0 %v3927
      %v4041 = vpop.f32.mrf.mxu0
      %v4042 = vadd.f32 0.0, %v4041
      %v4043 = vpop.f32.mrf.mxu0
      %v4044 = vpop.f32.mrf.mxu0
      %v4045 = vadd.f32 0.0, %v4044
      %v4046 = vpop.f32.mrf.mxu0
      %4047 = vmatprep.mubr.bf16.mxu0 0
      %4048 = vmatmul.mubr.bf16.gmra.mxu0 %v3930
      %v4049 = vpop.f32.mrf.mxu0
      %v4050 = vadd.f32 0.0, %v4049
      %v4051 = vpop.f32.mrf.mxu0
      %v4052 = vpop.f32.mrf.mxu0
      %v4053 = vadd.f32 0.0, %v4052
      %v4054 = vpop.f32.mrf.mxu0
      %4055 = vmatprep.mubr.bf16.mxu0 0
      %4056 = vmatmul.mubr.bf16.gmra.mxu0 %v3933
      %v4057 = vpop.f32.mrf.mxu0
      %v4058 = vadd.f32 0.0, %v4057
      %v4059 = vpop.f32.mrf.mxu0
      %v4060 = vpop.f32.mrf.mxu0
      %v4061 = vadd.f32 0.0, %v4060
      %v4062 = vpop.f32.mrf.mxu0
      %4063 = vmatprep.mubr.bf16.mxu0 0
      %4064 = vmatmul.mubr.bf16.gmra.mxu0 %v3936
      %v4065 = vpop.f32.mrf.mxu0
      %v4066 = vadd.f32 0.0, %v4065
      %v4067 = vpop.f32.mrf.mxu0
      %v4068 = vpop.f32.mrf.mxu0
      %v4069 = vadd.f32 0.0, %v4068
      %v4070 = vpop.f32.mrf.mxu0
      %4071 = vmatprep.mubr.bf16.mxu0 0
      %4072 = vmatmul.mubr.bf16.gmra.mxu0 %v3939
      %v4073 = vpop.f32.mrf.mxu0
      %v4074 = vadd.f32 0.0, %v4073
      %v4075 = vpop.f32.mrf.mxu0
      %v4076 = vpop.f32.mrf.mxu0
      %v4077 = vadd.f32 0.0, %v4076
      %v4078 = vpop.f32.mrf.mxu0
      %4079 = vmatprep.mubr.bf16.mxu0 0
      %4080 = vmatmul.mubr.bf16.gmra.mxu0 %v3942
      %v4081 = vpop.f32.mrf.mxu0
      %v4082 = vadd.f32 0.0, %v4081
      %v4083 = vpop.f32.mrf.mxu0
      %v4084 = vpop.f32.mrf.mxu0
      %v4085 = vadd.f32 0.0, %v4084
      %v4086 = vpop.f32.mrf.mxu0
      %4087 = vmatprep.mubr.bf16.mxu0 0
      %4088 = vmatmul.mubr.bf16.gmra.mxu0 %v3945
      %v4089 = vpop.f32.mrf.mxu0
      %v4090 = vadd.f32 0.0, %v4089
      %v4091 = vpop.f32.mrf.mxu0
      %v4092 = vpop.f32.mrf.mxu0
      %v4093 = vadd.f32 0.0, %v4092
      %v4094 = vpop.f32.mrf.mxu0
      %4095 = vmatprep.mubr.bf16.mxu0 0
      %4096 = vmatmul.mubr.bf16.gmra.mxu0 %v3948
      %v4097 = vpop.f32.mrf.mxu0
      %v4098 = vadd.f32 0.0, %v4097
      %v4099 = vpop.f32.mrf.mxu0
      %v4100 = vpop.f32.mrf.mxu0
      %v4101 = vadd.f32 0.0, %v4100
      %v4102 = vpop.f32.mrf.mxu0
      %4103 = vmatprep.mubr.bf16.mxu0 0
      %4104 = vmatmul.mubr.bf16.gmra.mxu0 %v3951
      %v4105 = vpop.f32.mrf.mxu0
      %v4106 = vadd.f32 0.0, %v4105
      %v4107 = vpop.f32.mrf.mxu0
      %v4108 = vpop.f32.mrf.mxu0
      %v4109 = vadd.f32 0.0, %v4108
      %v4110 = vpop.f32.mrf.mxu0
      %4111 = vmatprep.mubr.bf16.mxu0 0
      %4112 = vmatmul.mubr.bf16.gmra.mxu0 %v3954
      %v4113 = vpop.f32.mrf.mxu0
      %v4114 = vadd.f32 0.0, %v4113
      %v4115 = vpop.f32.mrf.mxu0
      %v4116 = vpop.f32.mrf.mxu0
      %v4117 = vadd.f32 0.0, %v4116
      %v4118 = vpop.f32.mrf.mxu0
      %4119 = vdwg.mxu0
      %v4120 = vadd.f32 %v3573, %v3994
      %v4121 = vadd.f32 %v3574, %v3997
      %v4122 = vadd.f32 %v3575, %v4002
      %v4123 = vadd.f32 %v3576, %v4005
      %v4124 = vadd.f32 %v3577, %v4010
      %v4125 = vadd.f32 %v3578, %v4013
      %v4126 = vadd.f32 %v3579, %v4018
      %v4127 = vadd.f32 %v3580, %v4021
      %v4128 = vadd.f32 %v3581, %v4026
      %v4129 = vadd.f32 %v3582, %v4029
      %v4130 = vadd.f32 %v3583, %v4034
      %v4131 = vadd.f32 %v3584, %v4037
      %v4132 = vadd.f32 %v3585, %v4042
      %v4133 = vadd.f32 %v3586, %v4045
      %v4134 = vadd.f32 %v3587, %v4050
      %v4135 = vadd.f32 %v3588, %v4053
      %v4136 = vadd.f32 %v3589, %v4058
      %v4137 = vadd.f32 %v3590, %v4061
      %v4138 = vadd.f32 %v3591, %v4066
      %v4139 = vadd.f32 %v3592, %v4069
      %v4140 = vadd.f32 %v3593, %v4074
      %v4141 = vadd.f32 %v3594, %v4077
      %v4142 = vadd.f32 %v3595, %v4082
      %v4143 = vadd.f32 %v3596, %v4085
      %v4144 = vadd.f32 %v3597, %v4090
      %v4145 = vadd.f32 %v3598, %v4093
      %v4146 = vadd.f32 %v3599, %v4098
      %v4147 = vadd.f32 %v3600, %v4101
      %v4148 = vadd.f32 %v3601, %v4106
      %v4149 = vadd.f32 %v3602, %v4109
      %v4150 = vadd.f32 %v3603, %v4114
      %v4151 = vadd.f32 %v3604, %v4117
      %s4152 = scalar_lea.vmem %s2, 8
      %v4153 = vld [vmem:[%s4152] sm:$0x3]
      %v4186 = vunpack.c.l.b16 %v3606
      %v4187 = vunpack.c.l.b16 %v3607
      %v4188 = vunpack.c.l.b16 %v3608
      %v4189 = vunpack.c.l.b16 %v3609
      %v4190 = vunpack.c.l.b16 %v3610
      %v4191 = vunpack.c.l.b16 %v3611
      %v4192 = vunpack.c.l.b16 %v3612
      %v4193 = vunpack.c.l.b16 %v3613
      %v4194 = vunpack.c.l.b16 %v3614
      %v4195 = vunpack.c.l.b16 %v3615
      %v4196 = vunpack.c.l.b16 %v3616
      %v4197 = vunpack.c.l.b16 %v3617
      %v4198 = vunpack.c.l.b16 %v3618
      %v4199 = vunpack.c.l.b16 %v3619
      %v4200 = vunpack.c.l.b16 %v3620
      %v4201 = vunpack.c.l.b16 %v3621
      %v4202 = vunpack.c.l.b16 %v3622
      %v4203 = vunpack.c.l.b16 %v3623
      %v4204 = vunpack.c.l.b16 %v3624
      %v4205 = vunpack.c.l.b16 %v3625
      %v4206 = vunpack.c.l.b16 %v3626
      %v4207 = vunpack.c.l.b16 %v3627
      %v4208 = vunpack.c.l.b16 %v3628
      %v4209 = vunpack.c.l.b16 %v3629
      %v4210 = vunpack.c.l.b16 %v3630
      %v4211 = vunpack.c.l.b16 %v3631
      %v4212 = vunpack.c.l.b16 %v3632
      %v4213 = vunpack.c.l.b16 %v3633
      %v4214 = vunpack.c.l.b16 %v3634
      %v4215 = vunpack.c.l.b16 %v3635
      %v4216 = vunpack.c.l.b16 %v3636
      %v4217 = vunpack.c.l.b16 %v3637
      %v4218 = vpack.c.b16 %v4187, %v4186
      %v4219 = vpack.c.b16 %v4189, %v4188
      %v4220 = vpack.c.b16 %v4191, %v4190
      %v4221 = vpack.c.b16 %v4193, %v4192
      %v4222 = vpack.c.b16 %v4195, %v4194
      %v4223 = vpack.c.b16 %v4197, %v4196
      %v4224 = vpack.c.b16 %v4199, %v4198
      %v4225 = vpack.c.b16 %v4201, %v4200
      %v4226 = vpack.c.b16 %v4203, %v4202
      %v4227 = vpack.c.b16 %v4205, %v4204
      %v4228 = vpack.c.b16 %v4207, %v4206
      %v4229 = vpack.c.b16 %v4209, %v4208
      %v4230 = vpack.c.b16 %v4211, %v4210
      %v4231 = vpack.c.b16 %v4213, %v4212
      %v4232 = vpack.c.b16 %v4215, %v4214
      %v4233 = vpack.c.b16 %v4217, %v4216
      %v4235 = vsel %vm2029, %v4218, 0
      %v4238 = vsel %vm2029, %v4219, 0
      %v4241 = vsel %vm2029, %v4220, 0
      %v4244 = vsel %vm2029, %v4221, 0
      %v4247 = vsel %vm2029, %v4222, 0
      %v4250 = vsel %vm2029, %v4223, 0
      %v4253 = vsel %vm2029, %v4224, 0
      %v4256 = vsel %vm2029, %v4225, 0
      %v4259 = vsel %vm2029, %v4226, 0
      %v4262 = vsel %vm2029, %v4227, 0
      %v4265 = vsel %vm2029, %v4228, 0
      %v4268 = vsel %vm2029, %v4229, 0
      %v4271 = vsel %vm2029, %v4230, 0
      %v4274 = vsel %vm2029, %v4231, 0
      %v4277 = vsel %vm2029, %v4232, 0
      %v4280 = vsel %vm2029, %v4233, 0
      %v4283 = vsel %vm2078, %v4153, 0
      %4285 = vmatprep.subr.bf16.mxu0 0
      %4286 = vmatpush1.bf16.msra.mxu0 0
      %4287 = vmatprep.subr.bf16.mxu0 0
      %4288 = vmatpush1.bf16.msra.mxu0 0
      %4289 = vmatprep.subr.bf16.mxu0 0
      %4290 = vmatpush1.bf16.msra.mxu0 0
      %4291 = vmatprep.subr.bf16.mxu0 0
      %4292 = vmatpush1.bf16.msra.mxu0 0
      %4293 = vmatprep.subr.bf16.mxu0 0
      %4294 = vmatpush1.bf16.msra.mxu0 0
      %4295 = vmatprep.subr.bf16.mxu0 0
      %4296 = vmatpush1.bf16.msra.mxu0 0
      %4297 = vmatprep.subr.bf16.mxu0 0
      %4298 = vmatpush1.bf16.msra.mxu0 0
      %4299 = vmatprep.subr.bf16.mxu0 0
      %4300 = vmatpush1.bf16.msra.mxu0 %v4283
      %4301 = vmatprep.subr.bf16.mxu0 0
      %4302 = vmatpush2.bf16.msra.mxu0 0
      %4303 = vmatprep.subr.bf16.mxu0 0
      %4304 = vmatpush2.bf16.msra.mxu0 0
      %4305 = vmatprep.subr.bf16.mxu0 0
      %4306 = vmatpush2.bf16.msra.mxu0 0
      %4307 = vmatprep.subr.bf16.mxu0 0
      %4308 = vmatpush2.bf16.msra.mxu0 0
      %4309 = vmatprep.subr.bf16.mxu0 0
      %4310 = vmatpush2.bf16.msra.mxu0 0
      %4311 = vmatprep.subr.bf16.mxu0 0
      %4312 = vmatpush2.bf16.msra.mxu0 0
      %4313 = vmatprep.subr.bf16.mxu0 0
      %4314 = vmatpush2.bf16.msra.mxu0 0
      %4315 = vmatprep.subr.bf16.mxu0 0
      %4316 = vmatpush2.bf16.msra.mxu0 0
      %4317 = vmatprep.mubr.bf16.mxu0 0
      %4318 = vmatmul.mubr.bf16.gmra.mxu0 %v4235
      %v4319 = vpop.f32.mrf.mxu0
      %v4320 = vadd.f32 0.0, %v4319
      %v4321 = vpop.f32.mrf.mxu0
      %v4322 = vpop.f32.mrf.mxu0
      %v4323 = vadd.f32 0.0, %v4322
      %v4324 = vpop.f32.mrf.mxu0
      %4325 = vmatprep.mubr.bf16.mxu0 0
      %4326 = vmatmul.mubr.bf16.gmra.mxu0 %v4238
      %v4327 = vpop.f32.mrf.mxu0
      %v4328 = vadd.f32 0.0, %v4327
      %v4329 = vpop.f32.mrf.mxu0
      %v4330 = vpop.f32.mrf.mxu0
      %v4331 = vadd.f32 0.0, %v4330
      %v4332 = vpop.f32.mrf.mxu0
      %4333 = vmatprep.mubr.bf16.mxu0 0
      %4334 = vmatmul.mubr.bf16.gmra.mxu0 %v4241
      %v4335 = vpop.f32.mrf.mxu0
      %v4336 = vadd.f32 0.0, %v4335
      %v4337 = vpop.f32.mrf.mxu0
      %v4338 = vpop.f32.mrf.mxu0
      %v4339 = vadd.f32 0.0, %v4338
      %v4340 = vpop.f32.mrf.mxu0
      %4341 = vmatprep.mubr.bf16.mxu0 0
      %4342 = vmatmul.mubr.bf16.gmra.mxu0 %v4244
      %v4343 = vpop.f32.mrf.mxu0
      %v4344 = vadd.f32 0.0, %v4343
      %v4345 = vpop.f32.mrf.mxu0
      %v4346 = vpop.f32.mrf.mxu0
      %v4347 = vadd.f32 0.0, %v4346
      %v4348 = vpop.f32.mrf.mxu0
      %4349 = vmatprep.mubr.bf16.mxu0 0
      %4350 = vmatmul.mubr.bf16.gmra.mxu0 %v4247
      %v4351 = vpop.f32.mrf.mxu0
      %v4352 = vadd.f32 0.0, %v4351
      %v4353 = vpop.f32.mrf.mxu0
      %v4354 = vpop.f32.mrf.mxu0
      %v4355 = vadd.f32 0.0, %v4354
      %v4356 = vpop.f32.mrf.mxu0
      %4357 = vmatprep.mubr.bf16.mxu0 0
      %4358 = vmatmul.mubr.bf16.gmra.mxu0 %v4250
      %v4359 = vpop.f32.mrf.mxu0
      %v4360 = vadd.f32 0.0, %v4359
      %v4361 = vpop.f32.mrf.mxu0
      %v4362 = vpop.f32.mrf.mxu0
      %v4363 = vadd.f32 0.0, %v4362
      %v4364 = vpop.f32.mrf.mxu0
      %4365 = vmatprep.mubr.bf16.mxu0 0
      %4366 = vmatmul.mubr.bf16.gmra.mxu0 %v4253
      %v4367 = vpop.f32.mrf.mxu0
      %v4368 = vadd.f32 0.0, %v4367
      %v4369 = vpop.f32.mrf.mxu0
      %v4370 = vpop.f32.mrf.mxu0
      %v4371 = vadd.f32 0.0, %v4370
      %v4372 = vpop.f32.mrf.mxu0
      %4373 = vmatprep.mubr.bf16.mxu0 0
      %4374 = vmatmul.mubr.bf16.gmra.mxu0 %v4256
      %v4375 = vpop.f32.mrf.mxu0
      %v4376 = vadd.f32 0.0, %v4375
      %v4377 = vpop.f32.mrf.mxu0
      %v4378 = vpop.f32.mrf.mxu0
      %v4379 = vadd.f32 0.0, %v4378
      %v4380 = vpop.f32.mrf.mxu0
      %4381 = vmatprep.mubr.bf16.mxu0 0
      %4382 = vmatmul.mubr.bf16.gmra.mxu0 %v4259
      %v4383 = vpop.f32.mrf.mxu0
      %v4384 = vadd.f32 0.0, %v4383
      %v4385 = vpop.f32.mrf.mxu0
      %v4386 = vpop.f32.mrf.mxu0
      %v4387 = vadd.f32 0.0, %v4386
      %v4388 = vpop.f32.mrf.mxu0
      %4389 = vmatprep.mubr.bf16.mxu0 0
      %4390 = vmatmul.mubr.bf16.gmra.mxu0 %v4262
      %v4391 = vpop.f32.mrf.mxu0
      %v4392 = vadd.f32 0.0, %v4391
      %v4393 = vpop.f32.mrf.mxu0
      %v4394 = vpop.f32.mrf.mxu0
      %v4395 = vadd.f32 0.0, %v4394
      %v4396 = vpop.f32.mrf.mxu0
      %4397 = vmatprep.mubr.bf16.mxu0 0
      %4398 = vmatmul.mubr.bf16.gmra.mxu0 %v4265
      %v4399 = vpop.f32.mrf.mxu0
      %v4400 = vadd.f32 0.0, %v4399
      %v4401 = vpop.f32.mrf.mxu0
      %v4402 = vpop.f32.mrf.mxu0
      %v4403 = vadd.f32 0.0, %v4402
      %v4404 = vpop.f32.mrf.mxu0
      %4405 = vmatprep.mubr.bf16.mxu0 0
      %4406 = vmatmul.mubr.bf16.gmra.mxu0 %v4268
      %v4407 = vpop.f32.mrf.mxu0
      %v4408 = vadd.f32 0.0, %v4407
      %v4409 = vpop.f32.mrf.mxu0
      %v4410 = vpop.f32.mrf.mxu0
      %v4411 = vadd.f32 0.0, %v4410
      %v4412 = vpop.f32.mrf.mxu0
      %4413 = vmatprep.mubr.bf16.mxu0 0
      %4414 = vmatmul.mubr.bf16.gmra.mxu0 %v4271
      %v4415 = vpop.f32.mrf.mxu0
      %v4416 = vadd.f32 0.0, %v4415
      %v4417 = vpop.f32.mrf.mxu0
      %v4418 = vpop.f32.mrf.mxu0
      %v4419 = vadd.f32 0.0, %v4418
      %v4420 = vpop.f32.mrf.mxu0
      %4421 = vmatprep.mubr.bf16.mxu0 0
      %4422 = vmatmul.mubr.bf16.gmra.mxu0 %v4274
      %v4423 = vpop.f32.mrf.mxu0
      %v4424 = vadd.f32 0.0, %v4423
      %v4425 = vpop.f32.mrf.mxu0
      %v4426 = vpop.f32.mrf.mxu0
      %v4427 = vadd.f32 0.0, %v4426
      %v4428 = vpop.f32.mrf.mxu0
      %4429 = vmatprep.mubr.bf16.mxu0 0
      %4430 = vmatmul.mubr.bf16.gmra.mxu0 %v4277
      %v4431 = vpop.f32.mrf.mxu0
      %v4432 = vadd.f32 0.0, %v4431
      %v4433 = vpop.f32.mrf.mxu0
      %v4434 = vpop.f32.mrf.mxu0
      %v4435 = vadd.f32 0.0, %v4434
      %v4436 = vpop.f32.mrf.mxu0
      %4437 = vmatprep.mubr.bf16.mxu0 0
      %4438 = vmatmul.mubr.bf16.gmra.mxu0 %v4280
      %v4439 = vpop.f32.mrf.mxu0
      %v4440 = vadd.f32 0.0, %v4439
      %v4441 = vpop.f32.mrf.mxu0
      %v4442 = vpop.f32.mrf.mxu0
      %v4443 = vadd.f32 0.0, %v4442
      %v4444 = vpop.f32.mrf.mxu0
      %4445 = vdwg.mxu0
      %v4446 = vadd.f32 %v4120, %v4320
      %v4447 = vadd.f32 %v4121, %v4323
      %v4448 = vadd.f32 %v4122, %v4328
      %v4449 = vadd.f32 %v4123, %v4331
      %v4450 = vadd.f32 %v4124, %v4336
      %v4451 = vadd.f32 %v4125, %v4339
      %v4452 = vadd.f32 %v4126, %v4344
      %v4453 = vadd.f32 %v4127, %v4347
      %v4454 = vadd.f32 %v4128, %v4352
      %v4455 = vadd.f32 %v4129, %v4355
      %v4456 = vadd.f32 %v4130, %v4360
      %v4457 = vadd.f32 %v4131, %v4363
      %v4458 = vadd.f32 %v4132, %v4368
      %v4459 = vadd.f32 %v4133, %v4371
      %v4460 = vadd.f32 %v4134, %v4376
      %v4461 = vadd.f32 %v4135, %v4379
      %v4462 = vadd.f32 %v4136, %v4384
      %v4463 = vadd.f32 %v4137, %v4387
      %v4464 = vadd.f32 %v4138, %v4392
      %v4465 = vadd.f32 %v4139, %v4395
      %v4466 = vadd.f32 %v4140, %v4400
      %v4467 = vadd.f32 %v4141, %v4403
      %v4468 = vadd.f32 %v4142, %v4408
      %v4469 = vadd.f32 %v4143, %v4411
      %v4470 = vadd.f32 %v4144, %v4416
      %v4471 = vadd.f32 %v4145, %v4419
      %v4472 = vadd.f32 %v4146, %v4424
      %v4473 = vadd.f32 %v4147, %v4427
      %v4474 = vadd.f32 %v4148, %v4432
      %v4475 = vadd.f32 %v4149, %v4435
      %v4476 = vadd.f32 %v4150, %v4440
      %v4477 = vadd.f32 %v4151, %v4443
      %v4478 = vld [vmem:[#allocation2 + $0xc] sm:$0xf]
      %v4479 = vld [vmem:[#allocation2 + $0x10] sm:$0xf]
      %v4480 = vld [vmem:[#allocation2 + $0x14] sm:$0xf]
      %v4481 = vld [vmem:[#allocation2 + $0x18] sm:$0xf]
      %v4482 = vld [vmem:[#allocation2 + $0x1c] sm:$0xf]
      %v4483 = vld [vmem:[#allocation2 + $0x20] sm:$0xf]
      %v4484 = vld [vmem:[#allocation2 + $0x24] sm:$0xf]
      %v4485 = vld [vmem:[#allocation2 + $0x28] sm:$0xf]
      %v4486 = vld [vmem:[#allocation2 + $0x2c] sm:$0xf]
      %v4487 = vld [vmem:[#allocation2 + $0x30] sm:$0xf]
      %v4488 = vld [vmem:[#allocation2 + $0x34] sm:$0xf]
      %v4489 = vld [vmem:[#allocation2 + $0x38] sm:$0xf]
      %v4490 = vld [vmem:[#allocation2 + $0x3c] sm:$0xf]
      %v4491 = vld [vmem:[#allocation2 + $0x40] sm:$0xf]
      %v4492 = vld [vmem:[#allocation2 + $0x44] sm:$0xf]
      %v4493 = vld [vmem:[#allocation2 + $0x48] sm:$0xf]
      %v4494 = vld [vmem:[#allocation2 + $0x4c] sm:$0xf]
      %v4495 = vld [vmem:[#allocation2 + $0x50] sm:$0xf]
      %v4496 = vld [vmem:[#allocation2 + $0x54] sm:$0xf]
      %v4497 = vld [vmem:[#allocation2 + $0x58] sm:$0xf]
      %v4498 = vld [vmem:[#allocation2 + $0x5c] sm:$0xf]
      %v4499 = vld [vmem:[#allocation2 + $0x60] sm:$0xf]
      %v4500 = vld [vmem:[#allocation2 + $0x64] sm:$0xf]
      %v4501 = vld [vmem:[#allocation2 + $0x68] sm:$0xf]
      %v4502 = vld [vmem:[#allocation2 + $0x6c] sm:$0xf]
      %v4503 = vld [vmem:[#allocation2 + $0x70] sm:$0xf]
      %v4504 = vld [vmem:[#allocation2 + $0x74] sm:$0xf]
      %v4505 = vld [vmem:[#allocation2 + $0x78] sm:$0xf]
      %v4506 = vld [vmem:[#allocation2 + $0x7c] sm:$0xf]
      %v4507 = vld [vmem:[#allocation2 + $0x80] sm:$0xf]
      %v4508 = vld [vmem:[#allocation2 + $0x84] sm:$0xf]
      %v4509 = vld [vmem:[#allocation2 + $0x88] sm:$0xf]
      %v4510 = vld [vmem:[#allocation2 + $0x8c] sm:$0x1]
      %v4511 = vsel %vm3077, %v4478, 0
      %v4512 = vsel %vm3078, %v4479, 0
      %v4513 = vsel %vm3079, %v4480, 0
      %v4514 = vsel %vm3080, %v4481, 0
      %v4515 = vsel %vm3081, %v4482, 0
      %v4516 = vsel %vm3082, %v4483, 0
      %v4517 = vsel %vm3083, %v4484, 0
      %v4518 = vsel %vm3084, %v4485, 0
      %v4519 = vsel %vm3085, %v4486, 0
      %v4520 = vsel %vm3086, %v4487, 0
      %v4521 = vsel %vm3087, %v4488, 0
      %v4522 = vsel %vm3088, %v4489, 0
      %v4523 = vsel %vm3089, %v4490, 0
      %v4524 = vsel %vm3090, %v4491, 0
      %v4525 = vsel %vm3091, %v4492, 0
      %v4526 = vsel %vm3092, %v4493, 0
      %v4527 = vsel %vm3093, %v4494, 0
      %v4528 = vsel %vm3094, %v4495, 0
      %v4529 = vsel %vm3095, %v4496, 0
      %v4530 = vsel %vm3096, %v4497, 0
      %v4531 = vsel %vm3097, %v4498, 0
      %v4532 = vsel %vm3098, %v4499, 0
      %v4533 = vsel %vm3099, %v4500, 0
      %v4534 = vsel %vm3100, %v4501, 0
      %v4535 = vsel %vm3101, %v4502, 0
      %v4536 = vsel %vm3102, %v4503, 0
      %v4537 = vsel %vm3103, %v4504, 0
      %v4538 = vsel %vm3104, %v4505, 0
      %v4539 = vsel %vm3105, %v4506, 0
      %v4540 = vsel %vm3106, %v4507, 0
      %v4541 = vsel %vm3107, %v4508, 0
      %v4542 = vsel %vm3108, %v4509, 0
      %v4543 = vsel %vm3109, %v4510, 0
      %s4544 = scalar_lea.vmem %s2, 10
      %v4545 = vld [vmem:[%s4544] sm:$0x3]
      %v4579 = vunpack.c.l.b16 %v4511
      %v4580 = vunpack.c.l.b16 %v4512
      %v4581 = vunpack.c.l.b16 %v4513
      %v4582 = vunpack.c.l.b16 %v4514
      %v4583 = vunpack.c.l.b16 %v4515
      %v4584 = vunpack.c.l.b16 %v4516
      %v4585 = vunpack.c.l.b16 %v4517
      %v4586 = vunpack.c.l.b16 %v4518
      %v4587 = vunpack.c.l.b16 %v4519
      %v4588 = vunpack.c.l.b16 %v4520
      %v4589 = vunpack.c.l.b16 %v4521
      %v4590 = vunpack.c.l.b16 %v4522
      %v4591 = vunpack.c.l.b16 %v4523
      %v4592 = vunpack.c.l.b16 %v4524
      %v4593 = vunpack.c.l.b16 %v4525
      %v4594 = vunpack.c.l.b16 %v4526
      %v4595 = vunpack.c.l.b16 %v4527
      %v4596 = vunpack.c.l.b16 %v4528
      %v4597 = vunpack.c.l.b16 %v4529
      %v4598 = vunpack.c.l.b16 %v4530
      %v4599 = vunpack.c.l.b16 %v4531
      %v4600 = vunpack.c.l.b16 %v4532
      %v4601 = vunpack.c.l.b16 %v4533
      %v4602 = vunpack.c.l.b16 %v4534
      %v4603 = vunpack.c.l.b16 %v4535
      %v4604 = vunpack.c.l.b16 %v4536
      %v4605 = vunpack.c.l.b16 %v4537
      %v4606 = vunpack.c.l.b16 %v4538
      %v4607 = vunpack.c.l.b16 %v4539
      %v4608 = vunpack.c.l.b16 %v4540
      %v4609 = vunpack.c.l.b16 %v4541
      %v4610 = vunpack.c.l.b16 %v4542
      %v4611 = vunpack.c.l.b16 %v4543
      %v4612 = vpack.c.b16 %v4580, %v4579
      %v4613 = vpack.c.b16 %v4582, %v4581
      %v4614 = vpack.c.b16 %v4584, %v4583
      %v4615 = vpack.c.b16 %v4586, %v4585
      %v4616 = vpack.c.b16 %v4588, %v4587
      %v4617 = vpack.c.b16 %v4590, %v4589
      %v4618 = vpack.c.b16 %v4592, %v4591
      %v4619 = vpack.c.b16 %v4594, %v4593
      %v4620 = vpack.c.b16 %v4596, %v4595
      %v4621 = vpack.c.b16 %v4598, %v4597
      %v4622 = vpack.c.b16 %v4600, %v4599
      %v4623 = vpack.c.b16 %v4602, %v4601
      %v4624 = vpack.c.b16 %v4604, %v4603
      %v4625 = vpack.c.b16 %v4606, %v4605
      %v4626 = vpack.c.b16 %v4608, %v4607
      %v4627 = vpack.c.b16 %v4610, %v4609
      %v4628 = vpack.c.b16 %v4611, %v4611
      %v4630 = vshrl.u32 %v4612, 16
      %v4632 = vshll.u32 %v4612, 16
      %v4634 = vrot.slane %v4632, 1
      %v4635 = vor.u32 %v4630, %v4634
      %v4637 = vshll.u32 %v4613, 16
      %v4639 = vrot.slane %v4637, 1
      %v4640 = vsel %vm3228, %v4635, %v4639
      %v4641 = vshrl.u32 %v4613, 16
      %v4643 = vor.u32 %v4641, %v4639
      %v4645 = vshll.u32 %v4614, 16
      %v4647 = vrot.slane %v4645, 1
      %v4648 = vsel %vm3228, %v4643, %v4647
      %v4649 = vshrl.u32 %v4614, 16
      %v4651 = vor.u32 %v4649, %v4647
      %v4653 = vshll.u32 %v4615, 16
      %v4655 = vrot.slane %v4653, 1
      %v4656 = vsel %vm3228, %v4651, %v4655
      %v4657 = vshrl.u32 %v4615, 16
      %v4659 = vor.u32 %v4657, %v4655
      %v4661 = vshll.u32 %v4616, 16
      %v4663 = vrot.slane %v4661, 1
      %v4664 = vsel %vm3228, %v4659, %v4663
      %v4665 = vshrl.u32 %v4616, 16
      %v4667 = vor.u32 %v4665, %v4663
      %v4669 = vshll.u32 %v4617, 16
      %v4671 = vrot.slane %v4669, 1
      %v4672 = vsel %vm3228, %v4667, %v4671
      %v4673 = vshrl.u32 %v4617, 16
      %v4675 = vor.u32 %v4673, %v4671
      %v4677 = vshll.u32 %v4618, 16
      %v4679 = vrot.slane %v4677, 1
      %v4680 = vsel %vm3228, %v4675, %v4679
      %v4681 = vshrl.u32 %v4618, 16
      %v4683 = vor.u32 %v4681, %v4679
      %v4685 = vshll.u32 %v4619, 16
      %v4687 = vrot.slane %v4685, 1
      %v4688 = vsel %vm3228, %v4683, %v4687
      %v4689 = vshrl.u32 %v4619, 16
      %v4691 = vor.u32 %v4689, %v4687
      %v4693 = vshll.u32 %v4620, 16
      %v4695 = vrot.slane %v4693, 1
      %v4696 = vsel %vm3228, %v4691, %v4695
      %v4697 = vshrl.u32 %v4620, 16
      %v4699 = vor.u32 %v4697, %v4695
      %v4701 = vshll.u32 %v4621, 16
      %v4703 = vrot.slane %v4701, 1
      %v4704 = vsel %vm3228, %v4699, %v4703
      %v4705 = vshrl.u32 %v4621, 16
      %v4707 = vor.u32 %v4705, %v4703
      %v4709 = vshll.u32 %v4622, 16
      %v4711 = vrot.slane %v4709, 1
      %v4712 = vsel %vm3228, %v4707, %v4711
      %v4713 = vshrl.u32 %v4622, 16
      %v4715 = vor.u32 %v4713, %v4711
      %v4717 = vshll.u32 %v4623, 16
      %v4719 = vrot.slane %v4717, 1
      %v4720 = vsel %vm3228, %v4715, %v4719
      %v4721 = vshrl.u32 %v4623, 16
      %v4723 = vor.u32 %v4721, %v4719
      %v4725 = vshll.u32 %v4624, 16
      %v4727 = vrot.slane %v4725, 1
      %v4728 = vsel %vm3228, %v4723, %v4727
      %v4729 = vshrl.u32 %v4624, 16
      %v4731 = vor.u32 %v4729, %v4727
      %v4733 = vshll.u32 %v4625, 16
      %v4735 = vrot.slane %v4733, 1
      %v4736 = vsel %vm3228, %v4731, %v4735
      %v4737 = vshrl.u32 %v4625, 16
      %v4739 = vor.u32 %v4737, %v4735
      %v4741 = vshll.u32 %v4626, 16
      %v4743 = vrot.slane %v4741, 1
      %v4744 = vsel %vm3228, %v4739, %v4743
      %v4745 = vshrl.u32 %v4626, 16
      %v4747 = vor.u32 %v4745, %v4743
      %v4749 = vshll.u32 %v4627, 16
      %v4751 = vrot.slane %v4749, 1
      %v4752 = vsel %vm3228, %v4747, %v4751
      %v4753 = vshrl.u32 %v4627, 16
      %v4755 = vor.u32 %v4753, %v4751
      %v4757 = vshll.u32 %v4628, 16
      %v4759 = vrot.slane %v4757, 1
      %v4760 = vsel %vm3228, %v4755, %v4759
      %v4762 = vsel %vm2029, %v4640, 0
      %v4765 = vsel %vm2029, %v4648, 0
      %v4768 = vsel %vm2029, %v4656, 0
      %v4771 = vsel %vm2029, %v4664, 0
      %v4774 = vsel %vm2029, %v4672, 0
      %v4777 = vsel %vm2029, %v4680, 0
      %v4780 = vsel %vm2029, %v4688, 0
      %v4783 = vsel %vm2029, %v4696, 0
      %v4786 = vsel %vm2029, %v4704, 0
      %v4789 = vsel %vm2029, %v4712, 0
      %v4792 = vsel %vm2029, %v4720, 0
      %v4795 = vsel %vm2029, %v4728, 0
      %v4798 = vsel %vm2029, %v4736, 0
      %v4801 = vsel %vm2029, %v4744, 0
      %v4804 = vsel %vm2029, %v4752, 0
      %v4807 = vsel %vm2029, %v4760, 0
      %v4810 = vsel %vm2078, %v4545, 0
      %4812 = vmatprep.subr.bf16.mxu0 0
      %4813 = vmatpush1.bf16.msra.mxu0 0
      %4814 = vmatprep.subr.bf16.mxu0 0
      %4815 = vmatpush1.bf16.msra.mxu0 0
      %4816 = vmatprep.subr.bf16.mxu0 0
      %4817 = vmatpush1.bf16.msra.mxu0 0
      %4818 = vmatprep.subr.bf16.mxu0 0
      %4819 = vmatpush1.bf16.msra.mxu0 0
      %4820 = vmatprep.subr.bf16.mxu0 0
      %4821 = vmatpush1.bf16.msra.mxu0 0
      %4822 = vmatprep.subr.bf16.mxu0 0
      %4823 = vmatpush1.bf16.msra.mxu0 0
      %4824 = vmatprep.subr.bf16.mxu0 0
      %4825 = vmatpush1.bf16.msra.mxu0 0
      %4826 = vmatprep.subr.bf16.mxu0 0
      %4827 = vmatpush1.bf16.msra.mxu0 %v4810
      %4828 = vmatprep.subr.bf16.mxu0 0
      %4829 = vmatpush2.bf16.msra.mxu0 0
      %4830 = vmatprep.subr.bf16.mxu0 0
      %4831 = vmatpush2.bf16.msra.mxu0 0
      %4832 = vmatprep.subr.bf16.mxu0 0
      %4833 = vmatpush2.bf16.msra.mxu0 0
      %4834 = vmatprep.subr.bf16.mxu0 0
      %4835 = vmatpush2.bf16.msra.mxu0 0
      %4836 = vmatprep.subr.bf16.mxu0 0
      %4837 = vmatpush2.bf16.msra.mxu0 0
      %4838 = vmatprep.subr.bf16.mxu0 0
      %4839 = vmatpush2.bf16.msra.mxu0 0
      %4840 = vmatprep.subr.bf16.mxu0 0
      %4841 = vmatpush2.bf16.msra.mxu0 0
      %4842 = vmatprep.subr.bf16.mxu0 0
      %4843 = vmatpush2.bf16.msra.mxu0 0
      %4844 = vmatprep.mubr.bf16.mxu0 0
      %4845 = vmatmul.mubr.bf16.gmra.mxu0 %v4762
      %v4846 = vpop.f32.mrf.mxu0
      %v4847 = vadd.f32 0.0, %v4846
      %v4848 = vpop.f32.mrf.mxu0
      %v4849 = vpop.f32.mrf.mxu0
      %v4850 = vadd.f32 0.0, %v4849
      %v4851 = vpop.f32.mrf.mxu0
      %4852 = vmatprep.mubr.bf16.mxu0 0
      %4853 = vmatmul.mubr.bf16.gmra.mxu0 %v4765
      %v4854 = vpop.f32.mrf.mxu0
      %v4855 = vadd.f32 0.0, %v4854
      %v4856 = vpop.f32.mrf.mxu0
      %v4857 = vpop.f32.mrf.mxu0
      %v4858 = vadd.f32 0.0, %v4857
      %v4859 = vpop.f32.mrf.mxu0
      %4860 = vmatprep.mubr.bf16.mxu0 0
      %4861 = vmatmul.mubr.bf16.gmra.mxu0 %v4768
      %v4862 = vpop.f32.mrf.mxu0
      %v4863 = vadd.f32 0.0, %v4862
      %v4864 = vpop.f32.mrf.mxu0
      %v4865 = vpop.f32.mrf.mxu0
      %v4866 = vadd.f32 0.0, %v4865
      %v4867 = vpop.f32.mrf.mxu0
      %4868 = vmatprep.mubr.bf16.mxu0 0
      %4869 = vmatmul.mubr.bf16.gmra.mxu0 %v4771
      %v4870 = vpop.f32.mrf.mxu0
      %v4871 = vadd.f32 0.0, %v4870
      %v4872 = vpop.f32.mrf.mxu0
      %v4873 = vpop.f32.mrf.mxu0
      %v4874 = vadd.f32 0.0, %v4873
      %v4875 = vpop.f32.mrf.mxu0
      %4876 = vmatprep.mubr.bf16.mxu0 0
      %4877 = vmatmul.mubr.bf16.gmra.mxu0 %v4774
      %v4878 = vpop.f32.mrf.mxu0
      %v4879 = vadd.f32 0.0, %v4878
      %v4880 = vpop.f32.mrf.mxu0
      %v4881 = vpop.f32.mrf.mxu0
      %v4882 = vadd.f32 0.0, %v4881
      %v4883 = vpop.f32.mrf.mxu0
      %4884 = vmatprep.mubr.bf16.mxu0 0
      %4885 = vmatmul.mubr.bf16.gmra.mxu0 %v4777
      %v4886 = vpop.f32.mrf.mxu0
      %v4887 = vadd.f32 0.0, %v4886
      %v4888 = vpop.f32.mrf.mxu0
      %v4889 = vpop.f32.mrf.mxu0
      %v4890 = vadd.f32 0.0, %v4889
      %v4891 = vpop.f32.mrf.mxu0
      %4892 = vmatprep.mubr.bf16.mxu0 0
      %4893 = vmatmul.mubr.bf16.gmra.mxu0 %v4780
      %v4894 = vpop.f32.mrf.mxu0
      %v4895 = vadd.f32 0.0, %v4894
      %v4896 = vpop.f32.mrf.mxu0
      %v4897 = vpop.f32.mrf.mxu0
      %v4898 = vadd.f32 0.0, %v4897
      %v4899 = vpop.f32.mrf.mxu0
      %4900 = vmatprep.mubr.bf16.mxu0 0
      %4901 = vmatmul.mubr.bf16.gmra.mxu0 %v4783
      %v4902 = vpop.f32.mrf.mxu0
      %v4903 = vadd.f32 0.0, %v4902
      %v4904 = vpop.f32.mrf.mxu0
      %v4905 = vpop.f32.mrf.mxu0
      %v4906 = vadd.f32 0.0, %v4905
      %v4907 = vpop.f32.mrf.mxu0
      %4908 = vmatprep.mubr.bf16.mxu0 0
      %4909 = vmatmul.mubr.bf16.gmra.mxu0 %v4786
      %v4910 = vpop.f32.mrf.mxu0
      %v4911 = vadd.f32 0.0, %v4910
      %v4912 = vpop.f32.mrf.mxu0
      %v4913 = vpop.f32.mrf.mxu0
      %v4914 = vadd.f32 0.0, %v4913
      %v4915 = vpop.f32.mrf.mxu0
      %4916 = vmatprep.mubr.bf16.mxu0 0
      %4917 = vmatmul.mubr.bf16.gmra.mxu0 %v4789
      %v4918 = vpop.f32.mrf.mxu0
      %v4919 = vadd.f32 0.0, %v4918
      %v4920 = vpop.f32.mrf.mxu0
      %v4921 = vpop.f32.mrf.mxu0
      %v4922 = vadd.f32 0.0, %v4921
      %v4923 = vpop.f32.mrf.mxu0
      %4924 = vmatprep.mubr.bf16.mxu0 0
      %4925 = vmatmul.mubr.bf16.gmra.mxu0 %v4792
      %v4926 = vpop.f32.mrf.mxu0
      %v4927 = vadd.f32 0.0, %v4926
      %v4928 = vpop.f32.mrf.mxu0
      %v4929 = vpop.f32.mrf.mxu0
      %v4930 = vadd.f32 0.0, %v4929
      %v4931 = vpop.f32.mrf.mxu0
      %4932 = vmatprep.mubr.bf16.mxu0 0
      %4933 = vmatmul.mubr.bf16.gmra.mxu0 %v4795
      %v4934 = vpop.f32.mrf.mxu0
      %v4935 = vadd.f32 0.0, %v4934
      %v4936 = vpop.f32.mrf.mxu0
      %v4937 = vpop.f32.mrf.mxu0
      %v4938 = vadd.f32 0.0, %v4937
      %v4939 = vpop.f32.mrf.mxu0
      %4940 = vmatprep.mubr.bf16.mxu0 0
      %4941 = vmatmul.mubr.bf16.gmra.mxu0 %v4798
      %v4942 = vpop.f32.mrf.mxu0
      %v4943 = vadd.f32 0.0, %v4942
      %v4944 = vpop.f32.mrf.mxu0
      %v4945 = vpop.f32.mrf.mxu0
      %v4946 = vadd.f32 0.0, %v4945
      %v4947 = vpop.f32.mrf.mxu0
      %4948 = vmatprep.mubr.bf16.mxu0 0
      %4949 = vmatmul.mubr.bf16.gmra.mxu0 %v4801
      %v4950 = vpop.f32.mrf.mxu0
      %v4951 = vadd.f32 0.0, %v4950
      %v4952 = vpop.f32.mrf.mxu0
      %v4953 = vpop.f32.mrf.mxu0
      %v4954 = vadd.f32 0.0, %v4953
      %v4955 = vpop.f32.mrf.mxu0
      %4956 = vmatprep.mubr.bf16.mxu0 0
      %4957 = vmatmul.mubr.bf16.gmra.mxu0 %v4804
      %v4958 = vpop.f32.mrf.mxu0
      %v4959 = vadd.f32 0.0, %v4958
      %v4960 = vpop.f32.mrf.mxu0
      %v4961 = vpop.f32.mrf.mxu0
      %v4962 = vadd.f32 0.0, %v4961
      %v4963 = vpop.f32.mrf.mxu0
      %4964 = vmatprep.mubr.bf16.mxu0 0
      %4965 = vmatmul.mubr.bf16.gmra.mxu0 %v4807
      %v4966 = vpop.f32.mrf.mxu0
      %v4967 = vadd.f32 0.0, %v4966
      %v4968 = vpop.f32.mrf.mxu0
      %v4969 = vpop.f32.mrf.mxu0
      %v4970 = vadd.f32 0.0, %v4969
      %v4971 = vpop.f32.mrf.mxu0
      %4972 = vdwg.mxu0
      %v4973 = vadd.f32 %v4446, %v4847
      %v4974 = vadd.f32 %v4447, %v4850
      %v4975 = vadd.f32 %v4448, %v4855
      %v4976 = vadd.f32 %v4449, %v4858
      %v4977 = vadd.f32 %v4450, %v4863
      %v4978 = vadd.f32 %v4451, %v4866
      %v4979 = vadd.f32 %v4452, %v4871
      %v4980 = vadd.f32 %v4453, %v4874
      %v4981 = vadd.f32 %v4454, %v4879
      %v4982 = vadd.f32 %v4455, %v4882
      %v4983 = vadd.f32 %v4456, %v4887
      %v4984 = vadd.f32 %v4457, %v4890
      %v4985 = vadd.f32 %v4458, %v4895
      %v4986 = vadd.f32 %v4459, %v4898
      %v4987 = vadd.f32 %v4460, %v4903
      %v4988 = vadd.f32 %v4461, %v4906
      %v4989 = vadd.f32 %v4462, %v4911
      %v4990 = vadd.f32 %v4463, %v4914
      %v4991 = vadd.f32 %v4464, %v4919
      %v4992 = vadd.f32 %v4465, %v4922
      %v4993 = vadd.f32 %v4466, %v4927
      %v4994 = vadd.f32 %v4467, %v4930
      %v4995 = vadd.f32 %v4468, %v4935
      %v4996 = vadd.f32 %v4469, %v4938
      %v4997 = vadd.f32 %v4470, %v4943
      %v4998 = vadd.f32 %v4471, %v4946
      %v4999 = vadd.f32 %v4472, %v4951
      %v5000 = vadd.f32 %v4473, %v4954
      %v5001 = vadd.f32 %v4474, %v4959
      %v5002 = vadd.f32 %v4475, %v4962
      %v5003 = vadd.f32 %v4476, %v4967
      %v5004 = vadd.f32 %v4477, %v4970
      %v5005 = vld [vmem:[#allocation2 + $0x10] sm:$0x8]
      %v5006 = vld [vmem:[#allocation2 + $0x14] sm:$0xf]
      %v5007 = vld [vmem:[#allocation2 + $0x18] sm:$0xf]
      %v5008 = vld [vmem:[#allocation2 + $0x1c] sm:$0xf]
      %v5009 = vld [vmem:[#allocation2 + $0x20] sm:$0xf]
      %v5010 = vld [vmem:[#allocation2 + $0x24] sm:$0xf]
      %v5011 = vld [vmem:[#allocation2 + $0x28] sm:$0xf]
      %v5012 = vld [vmem:[#allocation2 + $0x2c] sm:$0xf]
      %v5013 = vld [vmem:[#allocation2 + $0x30] sm:$0xf]
      %v5014 = vld [vmem:[#allocation2 + $0x34] sm:$0xf]
      %v5015 = vld [vmem:[#allocation2 + $0x38] sm:$0xf]
      %v5016 = vld [vmem:[#allocation2 + $0x3c] sm:$0xf]
      %v5017 = vld [vmem:[#allocation2 + $0x40] sm:$0xf]
      %v5018 = vld [vmem:[#allocation2 + $0x44] sm:$0xf]
      %v5019 = vld [vmem:[#allocation2 + $0x48] sm:$0xf]
      %v5020 = vld [vmem:[#allocation2 + $0x4c] sm:$0xf]
      %v5021 = vld [vmem:[#allocation2 + $0x50] sm:$0xf]
      %v5022 = vld [vmem:[#allocation2 + $0x54] sm:$0xf]
      %v5023 = vld [vmem:[#allocation2 + $0x58] sm:$0xf]
      %v5024 = vld [vmem:[#allocation2 + $0x5c] sm:$0xf]
      %v5025 = vld [vmem:[#allocation2 + $0x60] sm:$0xf]
      %v5026 = vld [vmem:[#allocation2 + $0x64] sm:$0xf]
      %v5027 = vld [vmem:[#allocation2 + $0x68] sm:$0xf]
      %v5028 = vld [vmem:[#allocation2 + $0x6c] sm:$0xf]
      %v5029 = vld [vmem:[#allocation2 + $0x70] sm:$0xf]
      %v5030 = vld [vmem:[#allocation2 + $0x74] sm:$0xf]
      %v5031 = vld [vmem:[#allocation2 + $0x78] sm:$0xf]
      %v5032 = vld [vmem:[#allocation2 + $0x7c] sm:$0xf]
      %v5033 = vld [vmem:[#allocation2 + $0x80] sm:$0xf]
      %v5034 = vld [vmem:[#allocation2 + $0x84] sm:$0xf]
      %v5035 = vld [vmem:[#allocation2 + $0x88] sm:$0xf]
      %v5036 = vld [vmem:[#allocation2 + $0x8c] sm:$0xf]
      %v5037 = vld [vmem:[#allocation2 + $0x90] sm:$0xf]
      %v5038 = vsel %vm1880, %v5005, 0
      %v5039 = vsel %vm1881, %v5006, 0
      %v5040 = vsel %vm1882, %v5007, 0
      %v5041 = vsel %vm1883, %v5008, 0
      %v5042 = vsel %vm1884, %v5009, 0
      %v5043 = vsel %vm1885, %v5010, 0
      %v5044 = vsel %vm1886, %v5011, 0
      %v5045 = vsel %vm1887, %v5012, 0
      %v5046 = vsel %vm1888, %v5013, 0
      %v5047 = vsel %vm1889, %v5014, 0
      %v5048 = vsel %vm1890, %v5015, 0
      %v5049 = vsel %vm1891, %v5016, 0
      %v5050 = vsel %vm1892, %v5017, 0
      %v5051 = vsel %vm1893, %v5018, 0
      %v5052 = vsel %vm1894, %v5019, 0
      %v5053 = vsel %vm1895, %v5020, 0
      %v5054 = vsel %vm1896, %v5021, 0
      %v5055 = vsel %vm1897, %v5022, 0
      %v5056 = vsel %vm1898, %v5023, 0
      %v5057 = vsel %vm1899, %v5024, 0
      %v5058 = vsel %vm1900, %v5025, 0
      %v5059 = vsel %vm1901, %v5026, 0
      %v5060 = vsel %vm1902, %v5027, 0
      %v5061 = vsel %vm1903, %v5028, 0
      %v5062 = vsel %vm1904, %v5029, 0
      %v5063 = vsel %vm1905, %v5030, 0
      %v5064 = vsel %vm1906, %v5031, 0
      %v5065 = vsel %vm1907, %v5032, 0
      %v5066 = vsel %vm1908, %v5033, 0
      %v5067 = vsel %vm1909, %v5034, 0
      %v5068 = vsel %vm1910, %v5035, 0
      %v5069 = vsel %vm1911, %v5036, 0
      %v5070 = vsel %vm1912, %v5037, 0
      %s5071 = scalar_lea.vmem %s2, 12
      %v5072 = vld [vmem:[%s5071] sm:$0x3]
      %v5106 = vunpack.c.l.b16 %v5038
      %v5107 = vunpack.c.l.b16 %v5039
      %v5108 = vunpack.c.l.b16 %v5040
      %v5109 = vunpack.c.l.b16 %v5041
      %v5110 = vunpack.c.l.b16 %v5042
      %v5111 = vunpack.c.l.b16 %v5043
      %v5112 = vunpack.c.l.b16 %v5044
      %v5113 = vunpack.c.l.b16 %v5045
      %v5114 = vunpack.c.l.b16 %v5046
      %v5115 = vunpack.c.l.b16 %v5047
      %v5116 = vunpack.c.l.b16 %v5048
      %v5117 = vunpack.c.l.b16 %v5049
      %v5118 = vunpack.c.l.b16 %v5050
      %v5119 = vunpack.c.l.b16 %v5051
      %v5120 = vunpack.c.l.b16 %v5052
      %v5121 = vunpack.c.l.b16 %v5053
      %v5122 = vunpack.c.l.b16 %v5054
      %v5123 = vunpack.c.l.b16 %v5055
      %v5124 = vunpack.c.l.b16 %v5056
      %v5125 = vunpack.c.l.b16 %v5057
      %v5126 = vunpack.c.l.b16 %v5058
      %v5127 = vunpack.c.l.b16 %v5059
      %v5128 = vunpack.c.l.b16 %v5060
      %v5129 = vunpack.c.l.b16 %v5061
      %v5130 = vunpack.c.l.b16 %v5062
      %v5131 = vunpack.c.l.b16 %v5063
      %v5132 = vunpack.c.l.b16 %v5064
      %v5133 = vunpack.c.l.b16 %v5065
      %v5134 = vunpack.c.l.b16 %v5066
      %v5135 = vunpack.c.l.b16 %v5067
      %v5136 = vunpack.c.l.b16 %v5068
      %v5137 = vunpack.c.l.b16 %v5069
      %v5138 = vunpack.c.l.b16 %v5070
      %v5139 = vpack.c.b16 %v5107, %v5106
      %v5140 = vpack.c.b16 %v5109, %v5108
      %v5141 = vpack.c.b16 %v5111, %v5110
      %v5142 = vpack.c.b16 %v5113, %v5112
      %v5143 = vpack.c.b16 %v5115, %v5114
      %v5144 = vpack.c.b16 %v5117, %v5116
      %v5145 = vpack.c.b16 %v5119, %v5118
      %v5146 = vpack.c.b16 %v5121, %v5120
      %v5147 = vpack.c.b16 %v5123, %v5122
      %v5148 = vpack.c.b16 %v5125, %v5124
      %v5149 = vpack.c.b16 %v5127, %v5126
      %v5150 = vpack.c.b16 %v5129, %v5128
      %v5151 = vpack.c.b16 %v5131, %v5130
      %v5152 = vpack.c.b16 %v5133, %v5132
      %v5153 = vpack.c.b16 %v5135, %v5134
      %v5154 = vpack.c.b16 %v5137, %v5136
      %v5155 = vpack.c.b16 %v5138, %v5138
      %v5157 = vshrl.u32 %v5139, 16
      %v5159 = vrot.slane %v5157, 3
      %v5160 = vshll.u32 %v5139, 16
      %v5162 = vrot.slane %v5160, 4
      %v5163 = vor.u32 %v5159, %v5162
      %v5165 = vshrl.u32 %v5140, 16
      %v5167 = vrot.slane %v5165, 3
      %v5168 = vshll.u32 %v5140, 16
      %v5170 = vrot.slane %v5168, 4
      %v5171 = vor.u32 %v5167, %v5170
      %v5172 = vsel %vm2326, %v5163, %v5171
      %v5174 = vshrl.u32 %v5141, 16
      %v5176 = vrot.slane %v5174, 3
      %v5177 = vshll.u32 %v5141, 16
      %v5179 = vrot.slane %v5177, 4
      %v5180 = vor.u32 %v5176, %v5179
      %v5181 = vsel %vm2326, %v5171, %v5180
      %v5183 = vshrl.u32 %v5142, 16
      %v5185 = vrot.slane %v5183, 3
      %v5186 = vshll.u32 %v5142, 16
      %v5188 = vrot.slane %v5186, 4
      %v5189 = vor.u32 %v5185, %v5188
      %v5190 = vsel %vm2326, %v5180, %v5189
      %v5192 = vshrl.u32 %v5143, 16
      %v5194 = vrot.slane %v5192, 3
      %v5195 = vshll.u32 %v5143, 16
      %v5197 = vrot.slane %v5195, 4
      %v5198 = vor.u32 %v5194, %v5197
      %v5199 = vsel %vm2326, %v5189, %v5198
      %v5201 = vshrl.u32 %v5144, 16
      %v5203 = vrot.slane %v5201, 3
      %v5204 = vshll.u32 %v5144, 16
      %v5206 = vrot.slane %v5204, 4
      %v5207 = vor.u32 %v5203, %v5206
      %v5208 = vsel %vm2326, %v5198, %v5207
      %v5210 = vshrl.u32 %v5145, 16
      %v5212 = vrot.slane %v5210, 3
      %v5213 = vshll.u32 %v5145, 16
      %v5215 = vrot.slane %v5213, 4
      %v5216 = vor.u32 %v5212, %v5215
      %v5217 = vsel %vm2326, %v5207, %v5216
      %v5219 = vshrl.u32 %v5146, 16
      %v5221 = vrot.slane %v5219, 3
      %v5222 = vshll.u32 %v5146, 16
      %v5224 = vrot.slane %v5222, 4
      %v5225 = vor.u32 %v5221, %v5224
      %v5226 = vsel %vm2326, %v5216, %v5225
      %v5228 = vshrl.u32 %v5147, 16
      %v5230 = vrot.slane %v5228, 3
      %v5231 = vshll.u32 %v5147, 16
      %v5233 = vrot.slane %v5231, 4
      %v5234 = vor.u32 %v5230, %v5233
      %v5235 = vsel %vm2326, %v5225, %v5234
      %v5237 = vshrl.u32 %v5148, 16
      %v5239 = vrot.slane %v5237, 3
      %v5240 = vshll.u32 %v5148, 16
      %v5242 = vrot.slane %v5240, 4
      %v5243 = vor.u32 %v5239, %v5242
      %v5244 = vsel %vm2326, %v5234, %v5243
      %v5246 = vshrl.u32 %v5149, 16
      %v5248 = vrot.slane %v5246, 3
      %v5249 = vshll.u32 %v5149, 16
      %v5251 = vrot.slane %v5249, 4
      %v5252 = vor.u32 %v5248, %v5251
      %v5253 = vsel %vm2326, %v5243, %v5252
      %v5255 = vshrl.u32 %v5150, 16
      %v5257 = vrot.slane %v5255, 3
      %v5258 = vshll.u32 %v5150, 16
      %v5260 = vrot.slane %v5258, 4
      %v5261 = vor.u32 %v5257, %v5260
      %v5262 = vsel %vm2326, %v5252, %v5261
      %v5264 = vshrl.u32 %v5151, 16
      %v5266 = vrot.slane %v5264, 3
      %v5267 = vshll.u32 %v5151, 16
      %v5269 = vrot.slane %v5267, 4
      %v5270 = vor.u32 %v5266, %v5269
      %v5271 = vsel %vm2326, %v5261, %v5270
      %v5273 = vshrl.u32 %v5152, 16
      %v5275 = vrot.slane %v5273, 3
      %v5276 = vshll.u32 %v5152, 16
      %v5278 = vrot.slane %v5276, 4
      %v5279 = vor.u32 %v5275, %v5278
      %v5280 = vsel %vm2326, %v5270, %v5279
      %v5282 = vshrl.u32 %v5153, 16
      %v5284 = vrot.slane %v5282, 3
      %v5285 = vshll.u32 %v5153, 16
      %v5287 = vrot.slane %v5285, 4
      %v5288 = vor.u32 %v5284, %v5287
      %v5289 = vsel %vm2326, %v5279, %v5288
      %v5291 = vshrl.u32 %v5154, 16
      %v5293 = vrot.slane %v5291, 3
      %v5294 = vshll.u32 %v5154, 16
      %v5296 = vrot.slane %v5294, 4
      %v5297 = vor.u32 %v5293, %v5296
      %v5298 = vsel %vm2326, %v5288, %v5297
      %v5300 = vshrl.u32 %v5155, 16
      %v5302 = vrot.slane %v5300, 3
      %v5303 = vshll.u32 %v5155, 16
      %v5305 = vrot.slane %v5303, 4
      %v5306 = vor.u32 %v5302, %v5305
      %v5307 = vsel %vm2326, %v5297, %v5306
      %v5309 = vsel %vm2029, %v5172, 0
      %v5312 = vsel %vm2029, %v5181, 0
      %v5315 = vsel %vm2029, %v5190, 0
      %v5318 = vsel %vm2029, %v5199, 0
      %v5321 = vsel %vm2029, %v5208, 0
      %v5324 = vsel %vm2029, %v5217, 0
      %v5327 = vsel %vm2029, %v5226, 0
      %v5330 = vsel %vm2029, %v5235, 0
      %v5333 = vsel %vm2029, %v5244, 0
      %v5336 = vsel %vm2029, %v5253, 0
      %v5339 = vsel %vm2029, %v5262, 0
      %v5342 = vsel %vm2029, %v5271, 0
      %v5345 = vsel %vm2029, %v5280, 0
      %v5348 = vsel %vm2029, %v5289, 0
      %v5351 = vsel %vm2029, %v5298, 0
      %v5354 = vsel %vm2029, %v5307, 0
      %v5357 = vsel %vm2078, %v5072, 0
      %5359 = vmatprep.subr.bf16.mxu0 0
      %5360 = vmatpush1.bf16.msra.mxu0 0
      %5361 = vmatprep.subr.bf16.mxu0 0
      %5362 = vmatpush1.bf16.msra.mxu0 0
      %5363 = vmatprep.subr.bf16.mxu0 0
      %5364 = vmatpush1.bf16.msra.mxu0 0
      %5365 = vmatprep.subr.bf16.mxu0 0
      %5366 = vmatpush1.bf16.msra.mxu0 0
      %5367 = vmatprep.subr.bf16.mxu0 0
      %5368 = vmatpush1.bf16.msra.mxu0 0
      %5369 = vmatprep.subr.bf16.mxu0 0
      %5370 = vmatpush1.bf16.msra.mxu0 0
      %5371 = vmatprep.subr.bf16.mxu0 0
      %5372 = vmatpush1.bf16.msra.mxu0 0
      %5373 = vmatprep.subr.bf16.mxu0 0
      %5374 = vmatpush1.bf16.msra.mxu0 %v5357
      %5375 = vmatprep.subr.bf16.mxu0 0
      %5376 = vmatpush2.bf16.msra.mxu0 0
      %5377 = vmatprep.subr.bf16.mxu0 0
      %5378 = vmatpush2.bf16.msra.mxu0 0
      %5379 = vmatprep.subr.bf16.mxu0 0
      %5380 = vmatpush2.bf16.msra.mxu0 0
      %5381 = vmatprep.subr.bf16.mxu0 0
      %5382 = vmatpush2.bf16.msra.mxu0 0
      %5383 = vmatprep.subr.bf16.mxu0 0
      %5384 = vmatpush2.bf16.msra.mxu0 0
      %5385 = vmatprep.subr.bf16.mxu0 0
      %5386 = vmatpush2.bf16.msra.mxu0 0
      %5387 = vmatprep.subr.bf16.mxu0 0
      %5388 = vmatpush2.bf16.msra.mxu0 0
      %5389 = vmatprep.subr.bf16.mxu0 0
      %5390 = vmatpush2.bf16.msra.mxu0 0
      %5391 = vmatprep.mubr.bf16.mxu0 0
      %5392 = vmatmul.mubr.bf16.gmra.mxu0 %v5309
      %v5393 = vpop.f32.mrf.mxu0
      %v5394 = vadd.f32 0.0, %v5393
      %v5395 = vpop.f32.mrf.mxu0
      %v5396 = vpop.f32.mrf.mxu0
      %v5397 = vadd.f32 0.0, %v5396
      %v5398 = vpop.f32.mrf.mxu0
      %5399 = vmatprep.mubr.bf16.mxu0 0
      %5400 = vmatmul.mubr.bf16.gmra.mxu0 %v5312
      %v5401 = vpop.f32.mrf.mxu0
      %v5402 = vadd.f32 0.0, %v5401
      %v5403 = vpop.f32.mrf.mxu0
      %v5404 = vpop.f32.mrf.mxu0
      %v5405 = vadd.f32 0.0, %v5404
      %v5406 = vpop.f32.mrf.mxu0
      %5407 = vmatprep.mubr.bf16.mxu0 0
      %5408 = vmatmul.mubr.bf16.gmra.mxu0 %v5315
      %v5409 = vpop.f32.mrf.mxu0
      %v5410 = vadd.f32 0.0, %v5409
      %v5411 = vpop.f32.mrf.mxu0
      %v5412 = vpop.f32.mrf.mxu0
      %v5413 = vadd.f32 0.0, %v5412
      %v5414 = vpop.f32.mrf.mxu0
      %5415 = vmatprep.mubr.bf16.mxu0 0
      %5416 = vmatmul.mubr.bf16.gmra.mxu0 %v5318
      %v5417 = vpop.f32.mrf.mxu0
      %v5418 = vadd.f32 0.0, %v5417
      %v5419 = vpop.f32.mrf.mxu0
      %v5420 = vpop.f32.mrf.mxu0
      %v5421 = vadd.f32 0.0, %v5420
      %v5422 = vpop.f32.mrf.mxu0
      %5423 = vmatprep.mubr.bf16.mxu0 0
      %5424 = vmatmul.mubr.bf16.gmra.mxu0 %v5321
      %v5425 = vpop.f32.mrf.mxu0
      %v5426 = vadd.f32 0.0, %v5425
      %v5427 = vpop.f32.mrf.mxu0
      %v5428 = vpop.f32.mrf.mxu0
      %v5429 = vadd.f32 0.0, %v5428
      %v5430 = vpop.f32.mrf.mxu0
      %5431 = vmatprep.mubr.bf16.mxu0 0
      %5432 = vmatmul.mubr.bf16.gmra.mxu0 %v5324
      %v5433 = vpop.f32.mrf.mxu0
      %v5434 = vadd.f32 0.0, %v5433
      %v5435 = vpop.f32.mrf.mxu0
      %v5436 = vpop.f32.mrf.mxu0
      %v5437 = vadd.f32 0.0, %v5436
      %v5438 = vpop.f32.mrf.mxu0
      %5439 = vmatprep.mubr.bf16.mxu0 0
      %5440 = vmatmul.mubr.bf16.gmra.mxu0 %v5327
      %v5441 = vpop.f32.mrf.mxu0
      %v5442 = vadd.f32 0.0, %v5441
      %v5443 = vpop.f32.mrf.mxu0
      %v5444 = vpop.f32.mrf.mxu0
      %v5445 = vadd.f32 0.0, %v5444
      %v5446 = vpop.f32.mrf.mxu0
      %5447 = vmatprep.mubr.bf16.mxu0 0
      %5448 = vmatmul.mubr.bf16.gmra.mxu0 %v5330
      %v5449 = vpop.f32.mrf.mxu0
      %v5450 = vadd.f32 0.0, %v5449
      %v5451 = vpop.f32.mrf.mxu0
      %v5452 = vpop.f32.mrf.mxu0
      %v5453 = vadd.f32 0.0, %v5452
      %v5454 = vpop.f32.mrf.mxu0
      %5455 = vmatprep.mubr.bf16.mxu0 0
      %5456 = vmatmul.mubr.bf16.gmra.mxu0 %v5333
      %v5457 = vpop.f32.mrf.mxu0
      %v5458 = vadd.f32 0.0, %v5457
      %v5459 = vpop.f32.mrf.mxu0
      %v5460 = vpop.f32.mrf.mxu0
      %v5461 = vadd.f32 0.0, %v5460
      %v5462 = vpop.f32.mrf.mxu0
      %5463 = vmatprep.mubr.bf16.mxu0 0
      %5464 = vmatmul.mubr.bf16.gmra.mxu0 %v5336
      %v5465 = vpop.f32.mrf.mxu0
      %v5466 = vadd.f32 0.0, %v5465
      %v5467 = vpop.f32.mrf.mxu0
      %v5468 = vpop.f32.mrf.mxu0
      %v5469 = vadd.f32 0.0, %v5468
      %v5470 = vpop.f32.mrf.mxu0
      %5471 = vmatprep.mubr.bf16.mxu0 0
      %5472 = vmatmul.mubr.bf16.gmra.mxu0 %v5339
      %v5473 = vpop.f32.mrf.mxu0
      %v5474 = vadd.f32 0.0, %v5473
      %v5475 = vpop.f32.mrf.mxu0
      %v5476 = vpop.f32.mrf.mxu0
      %v5477 = vadd.f32 0.0, %v5476
      %v5478 = vpop.f32.mrf.mxu0
      %5479 = vmatprep.mubr.bf16.mxu0 0
      %5480 = vmatmul.mubr.bf16.gmra.mxu0 %v5342
      %v5481 = vpop.f32.mrf.mxu0
      %v5482 = vadd.f32 0.0, %v5481
      %v5483 = vpop.f32.mrf.mxu0
      %v5484 = vpop.f32.mrf.mxu0
      %v5485 = vadd.f32 0.0, %v5484
      %v5486 = vpop.f32.mrf.mxu0
      %5487 = vmatprep.mubr.bf16.mxu0 0
      %5488 = vmatmul.mubr.bf16.gmra.mxu0 %v5345
      %v5489 = vpop.f32.mrf.mxu0
      %v5490 = vadd.f32 0.0, %v5489
      %v5491 = vpop.f32.mrf.mxu0
      %v5492 = vpop.f32.mrf.mxu0
      %v5493 = vadd.f32 0.0, %v5492
      %v5494 = vpop.f32.mrf.mxu0
      %5495 = vmatprep.mubr.bf16.mxu0 0
      %5496 = vmatmul.mubr.bf16.gmra.mxu0 %v5348
      %v5497 = vpop.f32.mrf.mxu0
      %v5498 = vadd.f32 0.0, %v5497
      %v5499 = vpop.f32.mrf.mxu0
      %v5500 = vpop.f32.mrf.mxu0
      %v5501 = vadd.f32 0.0, %v5500
      %v5502 = vpop.f32.mrf.mxu0
      %5503 = vmatprep.mubr.bf16.mxu0 0
      %5504 = vmatmul.mubr.bf16.gmra.mxu0 %v5351
      %v5505 = vpop.f32.mrf.mxu0
      %v5506 = vadd.f32 0.0, %v5505
      %v5507 = vpop.f32.mrf.mxu0
      %v5508 = vpop.f32.mrf.mxu0
      %v5509 = vadd.f32 0.0, %v5508
      %v5510 = vpop.f32.mrf.mxu0
      %5511 = vmatprep.mubr.bf16.mxu0 0
      %5512 = vmatmul.mubr.bf16.gmra.mxu0 %v5354
      %v5513 = vpop.f32.mrf.mxu0
      %v5514 = vadd.f32 0.0, %v5513
      %v5515 = vpop.f32.mrf.mxu0
      %v5516 = vpop.f32.mrf.mxu0
      %v5517 = vadd.f32 0.0, %v5516
      %v5518 = vpop.f32.mrf.mxu0
      %5519 = vdwg.mxu0
      %v5520 = vadd.f32 %v4973, %v5394
      %v5521 = vadd.f32 %v4974, %v5397
      %v5522 = vadd.f32 %v4975, %v5402
      %v5523 = vadd.f32 %v4976, %v5405
      %v5524 = vadd.f32 %v4977, %v5410
      %v5525 = vadd.f32 %v4978, %v5413
      %v5526 = vadd.f32 %v4979, %v5418
      %v5527 = vadd.f32 %v4980, %v5421
      %v5528 = vadd.f32 %v4981, %v5426
      %v5529 = vadd.f32 %v4982, %v5429
      %v5530 = vadd.f32 %v4983, %v5434
      %v5531 = vadd.f32 %v4984, %v5437
      %v5532 = vadd.f32 %v4985, %v5442
      %v5533 = vadd.f32 %v4986, %v5445
      %v5534 = vadd.f32 %v4987, %v5450
      %v5535 = vadd.f32 %v4988, %v5453
      %v5536 = vadd.f32 %v4989, %v5458
      %v5537 = vadd.f32 %v4990, %v5461
      %v5538 = vadd.f32 %v4991, %v5466
      %v5539 = vadd.f32 %v4992, %v5469
      %v5540 = vadd.f32 %v4993, %v5474
      %v5541 = vadd.f32 %v4994, %v5477
      %v5542 = vadd.f32 %v4995, %v5482
      %v5543 = vadd.f32 %v4996, %v5485
      %v5544 = vadd.f32 %v4997, %v5490
      %v5545 = vadd.f32 %v4998, %v5493
      %v5546 = vadd.f32 %v4999, %v5498
      %v5547 = vadd.f32 %v5000, %v5501
      %v5548 = vadd.f32 %v5001, %v5506
      %v5549 = vadd.f32 %v5002, %v5509
      %v5550 = vadd.f32 %v5003, %v5514
      %v5551 = vadd.f32 %v5004, %v5517
      %s5552 = scalar_lea.vmem %s2, 14
      %v5553 = vld [vmem:[%s5552] sm:$0x3]
      %v5586 = vunpack.c.l.b16 %v5006
      %v5587 = vunpack.c.l.b16 %v5007
      %v5588 = vunpack.c.l.b16 %v5008
      %v5589 = vunpack.c.l.b16 %v5009
      %v5590 = vunpack.c.l.b16 %v5010
      %v5591 = vunpack.c.l.b16 %v5011
      %v5592 = vunpack.c.l.b16 %v5012
      %v5593 = vunpack.c.l.b16 %v5013
      %v5594 = vunpack.c.l.b16 %v5014
      %v5595 = vunpack.c.l.b16 %v5015
      %v5596 = vunpack.c.l.b16 %v5016
      %v5597 = vunpack.c.l.b16 %v5017
      %v5598 = vunpack.c.l.b16 %v5018
      %v5599 = vunpack.c.l.b16 %v5019
      %v5600 = vunpack.c.l.b16 %v5020
      %v5601 = vunpack.c.l.b16 %v5021
      %v5602 = vunpack.c.l.b16 %v5022
      %v5603 = vunpack.c.l.b16 %v5023
      %v5604 = vunpack.c.l.b16 %v5024
      %v5605 = vunpack.c.l.b16 %v5025
      %v5606 = vunpack.c.l.b16 %v5026
      %v5607 = vunpack.c.l.b16 %v5027
      %v5608 = vunpack.c.l.b16 %v5028
      %v5609 = vunpack.c.l.b16 %v5029
      %v5610 = vunpack.c.l.b16 %v5030
      %v5611 = vunpack.c.l.b16 %v5031
      %v5612 = vunpack.c.l.b16 %v5032
      %v5613 = vunpack.c.l.b16 %v5033
      %v5614 = vunpack.c.l.b16 %v5034
      %v5615 = vunpack.c.l.b16 %v5035
      %v5616 = vunpack.c.l.b16 %v5036
      %v5617 = vunpack.c.l.b16 %v5037
      %v5618 = vpack.c.b16 %v5587, %v5586
      %v5619 = vpack.c.b16 %v5589, %v5588
      %v5620 = vpack.c.b16 %v5591, %v5590
      %v5621 = vpack.c.b16 %v5593, %v5592
      %v5622 = vpack.c.b16 %v5595, %v5594
      %v5623 = vpack.c.b16 %v5597, %v5596
      %v5624 = vpack.c.b16 %v5599, %v5598
      %v5625 = vpack.c.b16 %v5601, %v5600
      %v5626 = vpack.c.b16 %v5603, %v5602
      %v5627 = vpack.c.b16 %v5605, %v5604
      %v5628 = vpack.c.b16 %v5607, %v5606
      %v5629 = vpack.c.b16 %v5609, %v5608
      %v5630 = vpack.c.b16 %v5611, %v5610
      %v5631 = vpack.c.b16 %v5613, %v5612
      %v5632 = vpack.c.b16 %v5615, %v5614
      %v5633 = vpack.c.b16 %v5617, %v5616
      %v5635 = vsel %vm2029, %v5618, 0
      %v5638 = vsel %vm2029, %v5619, 0
      %v5641 = vsel %vm2029, %v5620, 0
      %v5644 = vsel %vm2029, %v5621, 0
      %v5647 = vsel %vm2029, %v5622, 0
      %v5650 = vsel %vm2029, %v5623, 0
      %v5653 = vsel %vm2029, %v5624, 0
      %v5656 = vsel %vm2029, %v5625, 0
      %v5659 = vsel %vm2029, %v5626, 0
      %v5662 = vsel %vm2029, %v5627, 0
      %v5665 = vsel %vm2029, %v5628, 0
      %v5668 = vsel %vm2029, %v5629, 0
      %v5671 = vsel %vm2029, %v5630, 0
      %v5674 = vsel %vm2029, %v5631, 0
      %v5677 = vsel %vm2029, %v5632, 0
      %v5680 = vsel %vm2029, %v5633, 0
      %v5683 = vsel %vm2078, %v5553, 0
      %5685 = vmatprep.subr.bf16.mxu0 0
      %5686 = vmatpush1.bf16.msra.mxu0 0
      %5687 = vmatprep.subr.bf16.mxu0 0
      %5688 = vmatpush1.bf16.msra.mxu0 0
      %5689 = vmatprep.subr.bf16.mxu0 0
      %5690 = vmatpush1.bf16.msra.mxu0 0
      %5691 = vmatprep.subr.bf16.mxu0 0
      %5692 = vmatpush1.bf16.msra.mxu0 0
      %5693 = vmatprep.subr.bf16.mxu0 0
      %5694 = vmatpush1.bf16.msra.mxu0 0
      %5695 = vmatprep.subr.bf16.mxu0 0
      %5696 = vmatpush1.bf16.msra.mxu0 0
      %5697 = vmatprep.subr.bf16.mxu0 0
      %5698 = vmatpush1.bf16.msra.mxu0 0
      %5699 = vmatprep.subr.bf16.mxu0 0
      %5700 = vmatpush1.bf16.msra.mxu0 %v5683
      %5701 = vmatprep.subr.bf16.mxu0 0
      %5702 = vmatpush2.bf16.msra.mxu0 0
      %5703 = vmatprep.subr.bf16.mxu0 0
      %5704 = vmatpush2.bf16.msra.mxu0 0
      %5705 = vmatprep.subr.bf16.mxu0 0
      %5706 = vmatpush2.bf16.msra.mxu0 0
      %5707 = vmatprep.subr.bf16.mxu0 0
      %5708 = vmatpush2.bf16.msra.mxu0 0
      %5709 = vmatprep.subr.bf16.mxu0 0
      %5710 = vmatpush2.bf16.msra.mxu0 0
      %5711 = vmatprep.subr.bf16.mxu0 0
      %5712 = vmatpush2.bf16.msra.mxu0 0
      %5713 = vmatprep.subr.bf16.mxu0 0
      %5714 = vmatpush2.bf16.msra.mxu0 0
      %5715 = vmatprep.subr.bf16.mxu0 0
      %5716 = vmatpush2.bf16.msra.mxu0 0
      %5717 = vmatprep.mubr.bf16.mxu0 0
      %5718 = vmatmul.mubr.bf16.gmra.mxu0 %v5635
      %v5719 = vpop.f32.mrf.mxu0
      %v5720 = vadd.f32 0.0, %v5719
      %v5721 = vpop.f32.mrf.mxu0
      %v5722 = vpop.f32.mrf.mxu0
      %v5723 = vadd.f32 0.0, %v5722
      %v5724 = vpop.f32.mrf.mxu0
      %5725 = vmatprep.mubr.bf16.mxu0 0
      %5726 = vmatmul.mubr.bf16.gmra.mxu0 %v5638
      %v5727 = vpop.f32.mrf.mxu0
      %v5728 = vadd.f32 0.0, %v5727
      %v5729 = vpop.f32.mrf.mxu0
      %v5730 = vpop.f32.mrf.mxu0
      %v5731 = vadd.f32 0.0, %v5730
      %v5732 = vpop.f32.mrf.mxu0
      %5733 = vmatprep.mubr.bf16.mxu0 0
      %5734 = vmatmul.mubr.bf16.gmra.mxu0 %v5641
      %v5735 = vpop.f32.mrf.mxu0
      %v5736 = vadd.f32 0.0, %v5735
      %v5737 = vpop.f32.mrf.mxu0
      %v5738 = vpop.f32.mrf.mxu0
      %v5739 = vadd.f32 0.0, %v5738
      %v5740 = vpop.f32.mrf.mxu0
      %5741 = vmatprep.mubr.bf16.mxu0 0
      %5742 = vmatmul.mubr.bf16.gmra.mxu0 %v5644
      %v5743 = vpop.f32.mrf.mxu0
      %v5744 = vadd.f32 0.0, %v5743
      %v5745 = vpop.f32.mrf.mxu0
      %v5746 = vpop.f32.mrf.mxu0
      %v5747 = vadd.f32 0.0, %v5746
      %v5748 = vpop.f32.mrf.mxu0
      %5749 = vmatprep.mubr.bf16.mxu0 0
      %5750 = vmatmul.mubr.bf16.gmra.mxu0 %v5647
      %v5751 = vpop.f32.mrf.mxu0
      %v5752 = vadd.f32 0.0, %v5751
      %v5753 = vpop.f32.mrf.mxu0
      %v5754 = vpop.f32.mrf.mxu0
      %v5755 = vadd.f32 0.0, %v5754
      %v5756 = vpop.f32.mrf.mxu0
      %5757 = vmatprep.mubr.bf16.mxu0 0
      %5758 = vmatmul.mubr.bf16.gmra.mxu0 %v5650
      %v5759 = vpop.f32.mrf.mxu0
      %v5760 = vadd.f32 0.0, %v5759
      %v5761 = vpop.f32.mrf.mxu0
      %v5762 = vpop.f32.mrf.mxu0
      %v5763 = vadd.f32 0.0, %v5762
      %v5764 = vpop.f32.mrf.mxu0
      %5765 = vmatprep.mubr.bf16.mxu0 0
      %5766 = vmatmul.mubr.bf16.gmra.mxu0 %v5653
      %v5767 = vpop.f32.mrf.mxu0
      %v5768 = vadd.f32 0.0, %v5767
      %v5769 = vpop.f32.mrf.mxu0
      %v5770 = vpop.f32.mrf.mxu0
      %v5771 = vadd.f32 0.0, %v5770
      %v5772 = vpop.f32.mrf.mxu0
      %5773 = vmatprep.mubr.bf16.mxu0 0
      %5774 = vmatmul.mubr.bf16.gmra.mxu0 %v5656
      %v5775 = vpop.f32.mrf.mxu0
      %v5776 = vadd.f32 0.0, %v5775
      %v5777 = vpop.f32.mrf.mxu0
      %v5778 = vpop.f32.mrf.mxu0
      %v5779 = vadd.f32 0.0, %v5778
      %v5780 = vpop.f32.mrf.mxu0
      %5781 = vmatprep.mubr.bf16.mxu0 0
      %5782 = vmatmul.mubr.bf16.gmra.mxu0 %v5659
      %v5783 = vpop.f32.mrf.mxu0
      %v5784 = vadd.f32 0.0, %v5783
      %v5785 = vpop.f32.mrf.mxu0
      %v5786 = vpop.f32.mrf.mxu0
      %v5787 = vadd.f32 0.0, %v5786
      %v5788 = vpop.f32.mrf.mxu0
      %5789 = vmatprep.mubr.bf16.mxu0 0
      %5790 = vmatmul.mubr.bf16.gmra.mxu0 %v5662
      %v5791 = vpop.f32.mrf.mxu0
      %v5792 = vadd.f32 0.0, %v5791
      %v5793 = vpop.f32.mrf.mxu0
      %v5794 = vpop.f32.mrf.mxu0
      %v5795 = vadd.f32 0.0, %v5794
      %v5796 = vpop.f32.mrf.mxu0
      %5797 = vmatprep.mubr.bf16.mxu0 0
      %5798 = vmatmul.mubr.bf16.gmra.mxu0 %v5665
      %v5799 = vpop.f32.mrf.mxu0
      %v5800 = vadd.f32 0.0, %v5799
      %v5801 = vpop.f32.mrf.mxu0
      %v5802 = vpop.f32.mrf.mxu0
      %v5803 = vadd.f32 0.0, %v5802
      %v5804 = vpop.f32.mrf.mxu0
      %5805 = vmatprep.mubr.bf16.mxu0 0
      %5806 = vmatmul.mubr.bf16.gmra.mxu0 %v5668
      %v5807 = vpop.f32.mrf.mxu0
      %v5808 = vadd.f32 0.0, %v5807
      %v5809 = vpop.f32.mrf.mxu0
      %v5810 = vpop.f32.mrf.mxu0
      %v5811 = vadd.f32 0.0, %v5810
      %v5812 = vpop.f32.mrf.mxu0
      %5813 = vmatprep.mubr.bf16.mxu0 0
      %5814 = vmatmul.mubr.bf16.gmra.mxu0 %v5671
      %v5815 = vpop.f32.mrf.mxu0
      %v5816 = vadd.f32 0.0, %v5815
      %v5817 = vpop.f32.mrf.mxu0
      %v5818 = vpop.f32.mrf.mxu0
      %v5819 = vadd.f32 0.0, %v5818
      %v5820 = vpop.f32.mrf.mxu0
      %5821 = vmatprep.mubr.bf16.mxu0 0
      %5822 = vmatmul.mubr.bf16.gmra.mxu0 %v5674
      %v5823 = vpop.f32.mrf.mxu0
      %v5824 = vadd.f32 0.0, %v5823
      %v5825 = vpop.f32.mrf.mxu0
      %v5826 = vpop.f32.mrf.mxu0
      %v5827 = vadd.f32 0.0, %v5826
      %v5828 = vpop.f32.mrf.mxu0
      %5829 = vmatprep.mubr.bf16.mxu0 0
      %5830 = vmatmul.mubr.bf16.gmra.mxu0 %v5677
      %v5831 = vpop.f32.mrf.mxu0
      %v5832 = vadd.f32 0.0, %v5831
      %v5833 = vpop.f32.mrf.mxu0
      %v5834 = vpop.f32.mrf.mxu0
      %v5835 = vadd.f32 0.0, %v5834
      %v5836 = vpop.f32.mrf.mxu0
      %5837 = vmatprep.mubr.bf16.mxu0 0
      %5838 = vmatmul.mubr.bf16.gmra.mxu0 %v5680
      %v5839 = vpop.f32.mrf.mxu0
      %v5840 = vadd.f32 0.0, %v5839
      %v5841 = vpop.f32.mrf.mxu0
      %v5842 = vpop.f32.mrf.mxu0
      %v5843 = vadd.f32 0.0, %v5842
      %v5844 = vpop.f32.mrf.mxu0
      %5845 = vdwg.mxu0
      %v5846 = vadd.f32 %v5520, %v5720
      %v5847 = vadd.f32 %v5521, %v5723
      %v5848 = vadd.f32 %v5522, %v5728
      %v5849 = vadd.f32 %v5523, %v5731
      %v5850 = vadd.f32 %v5524, %v5736
      %v5851 = vadd.f32 %v5525, %v5739
      %v5852 = vadd.f32 %v5526, %v5744
      %v5853 = vadd.f32 %v5527, %v5747
      %v5854 = vadd.f32 %v5528, %v5752
      %v5855 = vadd.f32 %v5529, %v5755
      %v5856 = vadd.f32 %v5530, %v5760
      %v5857 = vadd.f32 %v5531, %v5763
      %v5858 = vadd.f32 %v5532, %v5768
      %v5859 = vadd.f32 %v5533, %v5771
      %v5860 = vadd.f32 %v5534, %v5776
      %v5861 = vadd.f32 %v5535, %v5779
      %v5862 = vadd.f32 %v5536, %v5784
      %v5863 = vadd.f32 %v5537, %v5787
      %v5864 = vadd.f32 %v5538, %v5792
      %v5865 = vadd.f32 %v5539, %v5795
      %v5866 = vadd.f32 %v5540, %v5800
      %v5867 = vadd.f32 %v5541, %v5803
      %v5868 = vadd.f32 %v5542, %v5808
      %v5869 = vadd.f32 %v5543, %v5811
      %v5870 = vadd.f32 %v5544, %v5816
      %v5871 = vadd.f32 %v5545, %v5819
      %v5872 = vadd.f32 %v5546, %v5824
      %v5873 = vadd.f32 %v5547, %v5827
      %v5874 = vadd.f32 %v5548, %v5832
      %v5875 = vadd.f32 %v5549, %v5835
      %v5876 = vadd.f32 %v5550, %v5840
      %v5877 = vadd.f32 %v5551, %v5843
      %v5878 = vld [vmem:[#allocation2 + $0x14] sm:$0xf]
      %v5879 = vld [vmem:[#allocation2 + $0x18] sm:$0xf]
      %v5880 = vld [vmem:[#allocation2 + $0x1c] sm:$0xf]
      %v5881 = vld [vmem:[#allocation2 + $0x20] sm:$0xf]
      %v5882 = vld [vmem:[#allocation2 + $0x24] sm:$0xf]
      %v5883 = vld [vmem:[#allocation2 + $0x28] sm:$0xf]
      %v5884 = vld [vmem:[#allocation2 + $0x2c] sm:$0xf]
      %v5885 = vld [vmem:[#allocation2 + $0x30] sm:$0xf]
      %v5886 = vld [vmem:[#allocation2 + $0x34] sm:$0xf]
      %v5887 = vld [vmem:[#allocation2 + $0x38] sm:$0xf]
      %v5888 = vld [vmem:[#allocation2 + $0x3c] sm:$0xf]
      %v5889 = vld [vmem:[#allocation2 + $0x40] sm:$0xf]
      %v5890 = vld [vmem:[#allocation2 + $0x44] sm:$0xf]
      %v5891 = vld [vmem:[#allocation2 + $0x48] sm:$0xf]
      %v5892 = vld [vmem:[#allocation2 + $0x4c] sm:$0xf]
      %v5893 = vld [vmem:[#allocation2 + $0x50] sm:$0xf]
      %v5894 = vld [vmem:[#allocation2 + $0x54] sm:$0xf]
      %v5895 = vld [vmem:[#allocation2 + $0x58] sm:$0xf]
      %v5896 = vld [vmem:[#allocation2 + $0x5c] sm:$0xf]
      %v5897 = vld [vmem:[#allocation2 + $0x60] sm:$0xf]
      %v5898 = vld [vmem:[#allocation2 + $0x64] sm:$0xf]
      %v5899 = vld [vmem:[#allocation2 + $0x68] sm:$0xf]
      %v5900 = vld [vmem:[#allocation2 + $0x6c] sm:$0xf]
      %v5901 = vld [vmem:[#allocation2 + $0x70] sm:$0xf]
      %v5902 = vld [vmem:[#allocation2 + $0x74] sm:$0xf]
      %v5903 = vld [vmem:[#allocation2 + $0x78] sm:$0xf]
      %v5904 = vld [vmem:[#allocation2 + $0x7c] sm:$0xf]
      %v5905 = vld [vmem:[#allocation2 + $0x80] sm:$0xf]
      %v5906 = vld [vmem:[#allocation2 + $0x84] sm:$0xf]
      %v5907 = vld [vmem:[#allocation2 + $0x88] sm:$0xf]
      %v5908 = vld [vmem:[#allocation2 + $0x8c] sm:$0xf]
      %v5909 = vld [vmem:[#allocation2 + $0x90] sm:$0xf]
      %v5910 = vld [vmem:[#allocation2 + $0x94] sm:$0x1]
      %v5911 = vsel %vm3077, %v5878, 0
      %v5912 = vsel %vm3078, %v5879, 0
      %v5913 = vsel %vm3079, %v5880, 0
      %v5914 = vsel %vm3080, %v5881, 0
      %v5915 = vsel %vm3081, %v5882, 0
      %v5916 = vsel %vm3082, %v5883, 0
      %v5917 = vsel %vm3083, %v5884, 0
      %v5918 = vsel %vm3084, %v5885, 0
      %v5919 = vsel %vm3085, %v5886, 0
      %v5920 = vsel %vm3086, %v5887, 0
      %v5921 = vsel %vm3087, %v5888, 0
      %v5922 = vsel %vm3088, %v5889, 0
      %v5923 = vsel %vm3089, %v5890, 0
      %v5924 = vsel %vm3090, %v5891, 0
      %v5925 = vsel %vm3091, %v5892, 0
      %v5926 = vsel %vm3092, %v5893, 0
      %v5927 = vsel %vm3093, %v5894, 0
      %v5928 = vsel %vm3094, %v5895, 0
      %v5929 = vsel %vm3095, %v5896, 0
      %v5930 = vsel %vm3096, %v5897, 0
      %v5931 = vsel %vm3097, %v5898, 0
      %v5932 = vsel %vm3098, %v5899, 0
      %v5933 = vsel %vm3099, %v5900, 0
      %v5934 = vsel %vm3100, %v5901, 0
      %v5935 = vsel %vm3101, %v5902, 0
      %v5936 = vsel %vm3102, %v5903, 0
      %v5937 = vsel %vm3103, %v5904, 0
      %v5938 = vsel %vm3104, %v5905, 0
      %v5939 = vsel %vm3105, %v5906, 0
      %v5940 = vsel %vm3106, %v5907, 0
      %v5941 = vsel %vm3107, %v5908, 0
      %v5942 = vsel %vm3108, %v5909, 0
      %v5943 = vsel %vm3109, %v5910, 0
      %s5944 = scalar_lea.vmem %s2, 16
      %v5945 = vld [vmem:[%s5944] sm:$0x3]
      %v5979 = vunpack.c.l.b16 %v5911
      %v5980 = vunpack.c.l.b16 %v5912
      %v5981 = vunpack.c.l.b16 %v5913
      %v5982 = vunpack.c.l.b16 %v5914
      %v5983 = vunpack.c.l.b16 %v5915
      %v5984 = vunpack.c.l.b16 %v5916
      %v5985 = vunpack.c.l.b16 %v5917
      %v5986 = vunpack.c.l.b16 %v5918
      %v5987 = vunpack.c.l.b16 %v5919
      %v5988 = vunpack.c.l.b16 %v5920
      %v5989 = vunpack.c.l.b16 %v5921
      %v5990 = vunpack.c.l.b16 %v5922
      %v5991 = vunpack.c.l.b16 %v5923
      %v5992 = vunpack.c.l.b16 %v5924
      %v5993 = vunpack.c.l.b16 %v5925
      %v5994 = vunpack.c.l.b16 %v5926
      %v5995 = vunpack.c.l.b16 %v5927
      %v5996 = vunpack.c.l.b16 %v5928
      %v5997 = vunpack.c.l.b16 %v5929
      %v5998 = vunpack.c.l.b16 %v5930
      %v5999 = vunpack.c.l.b16 %v5931
      %v6000 = vunpack.c.l.b16 %v5932
      %v6001 = vunpack.c.l.b16 %v5933
      %v6002 = vunpack.c.l.b16 %v5934
      %v6003 = vunpack.c.l.b16 %v5935
      %v6004 = vunpack.c.l.b16 %v5936
      %v6005 = vunpack.c.l.b16 %v5937
      %v6006 = vunpack.c.l.b16 %v5938
      %v6007 = vunpack.c.l.b16 %v5939
      %v6008 = vunpack.c.l.b16 %v5940
      %v6009 = vunpack.c.l.b16 %v5941
      %v6010 = vunpack.c.l.b16 %v5942
      %v6011 = vunpack.c.l.b16 %v5943
      %v6012 = vpack.c.b16 %v5980, %v5979
      %v6013 = vpack.c.b16 %v5982, %v5981
      %v6014 = vpack.c.b16 %v5984, %v5983
      %v6015 = vpack.c.b16 %v5986, %v5985
      %v6016 = vpack.c.b16 %v5988, %v5987
      %v6017 = vpack.c.b16 %v5990, %v5989
      %v6018 = vpack.c.b16 %v5992, %v5991
      %v6019 = vpack.c.b16 %v5994, %v5993
      %v6020 = vpack.c.b16 %v5996, %v5995
      %v6021 = vpack.c.b16 %v5998, %v5997
      %v6022 = vpack.c.b16 %v6000, %v5999
      %v6023 = vpack.c.b16 %v6002, %v6001
      %v6024 = vpack.c.b16 %v6004, %v6003
      %v6025 = vpack.c.b16 %v6006, %v6005
      %v6026 = vpack.c.b16 %v6008, %v6007
      %v6027 = vpack.c.b16 %v6010, %v6009
      %v6028 = vpack.c.b16 %v6011, %v6011
      %v6030 = vshrl.u32 %v6012, 16
      %v6032 = vshll.u32 %v6012, 16
      %v6034 = vrot.slane %v6032, 1
      %v6035 = vor.u32 %v6030, %v6034
      %v6037 = vshll.u32 %v6013, 16
      %v6039 = vrot.slane %v6037, 1
      %v6040 = vsel %vm3228, %v6035, %v6039
      %v6041 = vshrl.u32 %v6013, 16
      %v6043 = vor.u32 %v6041, %v6039
      %v6045 = vshll.u32 %v6014, 16
      %v6047 = vrot.slane %v6045, 1
      %v6048 = vsel %vm3228, %v6043, %v6047
      %v6049 = vshrl.u32 %v6014, 16
      %v6051 = vor.u32 %v6049, %v6047
      %v6053 = vshll.u32 %v6015, 16
      %v6055 = vrot.slane %v6053, 1
      %v6056 = vsel %vm3228, %v6051, %v6055
      %v6057 = vshrl.u32 %v6015, 16
      %v6059 = vor.u32 %v6057, %v6055
      %v6061 = vshll.u32 %v6016, 16
      %v6063 = vrot.slane %v6061, 1
      %v6064 = vsel %vm3228, %v6059, %v6063
      %v6065 = vshrl.u32 %v6016, 16
      %v6067 = vor.u32 %v6065, %v6063
      %v6069 = vshll.u32 %v6017, 16
      %v6071 = vrot.slane %v6069, 1
      %v6072 = vsel %vm3228, %v6067, %v6071
      %v6073 = vshrl.u32 %v6017, 16
      %v6075 = vor.u32 %v6073, %v6071
      %v6077 = vshll.u32 %v6018, 16
      %v6079 = vrot.slane %v6077, 1
      %v6080 = vsel %vm3228, %v6075, %v6079
      %v6081 = vshrl.u32 %v6018, 16
      %v6083 = vor.u32 %v6081, %v6079
      %v6085 = vshll.u32 %v6019, 16
      %v6087 = vrot.slane %v6085, 1
      %v6088 = vsel %vm3228, %v6083, %v6087
      %v6089 = vshrl.u32 %v6019, 16
      %v6091 = vor.u32 %v6089, %v6087
      %v6093 = vshll.u32 %v6020, 16
      %v6095 = vrot.slane %v6093, 1
      %v6096 = vsel %vm3228, %v6091, %v6095
      %v6097 = vshrl.u32 %v6020, 16
      %v6099 = vor.u32 %v6097, %v6095
      %v6101 = vshll.u32 %v6021, 16
      %v6103 = vrot.slane %v6101, 1
      %v6104 = vsel %vm3228, %v6099, %v6103
      %v6105 = vshrl.u32 %v6021, 16
      %v6107 = vor.u32 %v6105, %v6103
      %v6109 = vshll.u32 %v6022, 16
      %v6111 = vrot.slane %v6109, 1
      %v6112 = vsel %vm3228, %v6107, %v6111
      %v6113 = vshrl.u32 %v6022, 16
      %v6115 = vor.u32 %v6113, %v6111
      %v6117 = vshll.u32 %v6023, 16
      %v6119 = vrot.slane %v6117, 1
      %v6120 = vsel %vm3228, %v6115, %v6119
      %v6121 = vshrl.u32 %v6023, 16
      %v6123 = vor.u32 %v6121, %v6119
      %v6125 = vshll.u32 %v6024, 16
      %v6127 = vrot.slane %v6125, 1
      %v6128 = vsel %vm3228, %v6123, %v6127
      %v6129 = vshrl.u32 %v6024, 16
      %v6131 = vor.u32 %v6129, %v6127
      %v6133 = vshll.u32 %v6025, 16
      %v6135 = vrot.slane %v6133, 1
      %v6136 = vsel %vm3228, %v6131, %v6135
      %v6137 = vshrl.u32 %v6025, 16
      %v6139 = vor.u32 %v6137, %v6135
      %v6141 = vshll.u32 %v6026, 16
      %v6143 = vrot.slane %v6141, 1
      %v6144 = vsel %vm3228, %v6139, %v6143
      %v6145 = vshrl.u32 %v6026, 16
      %v6147 = vor.u32 %v6145, %v6143
      %v6149 = vshll.u32 %v6027, 16
      %v6151 = vrot.slane %v6149, 1
      %v6152 = vsel %vm3228, %v6147, %v6151
      %v6153 = vshrl.u32 %v6027, 16
      %v6155 = vor.u32 %v6153, %v6151
      %v6157 = vshll.u32 %v6028, 16
      %v6159 = vrot.slane %v6157, 1
      %v6160 = vsel %vm3228, %v6155, %v6159
      %v6162 = vsel %vm2029, %v6040, 0
      %v6165 = vsel %vm2029, %v6048, 0
      %v6168 = vsel %vm2029, %v6056, 0
      %v6171 = vsel %vm2029, %v6064, 0
      %v6174 = vsel %vm2029, %v6072, 0
      %v6177 = vsel %vm2029, %v6080, 0
      %v6180 = vsel %vm2029, %v6088, 0
      %v6183 = vsel %vm2029, %v6096, 0
      %v6186 = vsel %vm2029, %v6104, 0
      %v6189 = vsel %vm2029, %v6112, 0
      %v6192 = vsel %vm2029, %v6120, 0
      %v6195 = vsel %vm2029, %v6128, 0
      %v6198 = vsel %vm2029, %v6136, 0
      %v6201 = vsel %vm2029, %v6144, 0
      %v6204 = vsel %vm2029, %v6152, 0
      %v6207 = vsel %vm2029, %v6160, 0
      %v6210 = vsel %vm2078, %v5945, 0
      %6212 = vmatprep.subr.bf16.mxu0 0
      %6213 = vmatpush1.bf16.msra.mxu0 0
      %6214 = vmatprep.subr.bf16.mxu0 0
      %6215 = vmatpush1.bf16.msra.mxu0 0
      %6216 = vmatprep.subr.bf16.mxu0 0
      %6217 = vmatpush1.bf16.msra.mxu0 0
      %6218 = vmatprep.subr.bf16.mxu0 0
      %6219 = vmatpush1.bf16.msra.mxu0 0
      %6220 = vmatprep.subr.bf16.mxu0 0
      %6221 = vmatpush1.bf16.msra.mxu0 0
      %6222 = vmatprep.subr.bf16.mxu0 0
      %6223 = vmatpush1.bf16.msra.mxu0 0
      %6224 = vmatprep.subr.bf16.mxu0 0
      %6225 = vmatpush1.bf16.msra.mxu0 0
      %6226 = vmatprep.subr.bf16.mxu0 0
      %6227 = vmatpush1.bf16.msra.mxu0 %v6210
      %6228 = vmatprep.subr.bf16.mxu0 0
      %6229 = vmatpush2.bf16.msra.mxu0 0
      %6230 = vmatprep.subr.bf16.mxu0 0
      %6231 = vmatpush2.bf16.msra.mxu0 0
      %6232 = vmatprep.subr.bf16.mxu0 0
      %6233 = vmatpush2.bf16.msra.mxu0 0
      %6234 = vmatprep.subr.bf16.mxu0 0
      %6235 = vmatpush2.bf16.msra.mxu0 0
      %6236 = vmatprep.subr.bf16.mxu0 0
      %6237 = vmatpush2.bf16.msra.mxu0 0
      %6238 = vmatprep.subr.bf16.mxu0 0
      %6239 = vmatpush2.bf16.msra.mxu0 0
      %6240 = vmatprep.subr.bf16.mxu0 0
      %6241 = vmatpush2.bf16.msra.mxu0 0
      %6242 = vmatprep.subr.bf16.mxu0 0
      %6243 = vmatpush2.bf16.msra.mxu0 0
      %6244 = vmatprep.mubr.bf16.mxu0 0
      %6245 = vmatmul.mubr.bf16.gmra.mxu0 %v6162
      %v6246 = vpop.f32.mrf.mxu0
      %v6247 = vadd.f32 0.0, %v6246
      %v6248 = vpop.f32.mrf.mxu0
      %v6249 = vpop.f32.mrf.mxu0
      %v6250 = vadd.f32 0.0, %v6249
      %v6251 = vpop.f32.mrf.mxu0
      %6252 = vmatprep.mubr.bf16.mxu0 0
      %6253 = vmatmul.mubr.bf16.gmra.mxu0 %v6165
      %v6254 = vpop.f32.mrf.mxu0
      %v6255 = vadd.f32 0.0, %v6254
      %v6256 = vpop.f32.mrf.mxu0
      %v6257 = vpop.f32.mrf.mxu0
      %v6258 = vadd.f32 0.0, %v6257
      %v6259 = vpop.f32.mrf.mxu0
      %6260 = vmatprep.mubr.bf16.mxu0 0
      %6261 = vmatmul.mubr.bf16.gmra.mxu0 %v6168
      %v6262 = vpop.f32.mrf.mxu0
      %v6263 = vadd.f32 0.0, %v6262
      %v6264 = vpop.f32.mrf.mxu0
      %v6265 = vpop.f32.mrf.mxu0
      %v6266 = vadd.f32 0.0, %v6265
      %v6267 = vpop.f32.mrf.mxu0
      %6268 = vmatprep.mubr.bf16.mxu0 0
      %6269 = vmatmul.mubr.bf16.gmra.mxu0 %v6171
      %v6270 = vpop.f32.mrf.mxu0
      %v6271 = vadd.f32 0.0, %v6270
      %v6272 = vpop.f32.mrf.mxu0
      %v6273 = vpop.f32.mrf.mxu0
      %v6274 = vadd.f32 0.0, %v6273
      %v6275 = vpop.f32.mrf.mxu0
      %6276 = vmatprep.mubr.bf16.mxu0 0
      %6277 = vmatmul.mubr.bf16.gmra.mxu0 %v6174
      %v6278 = vpop.f32.mrf.mxu0
      %v6279 = vadd.f32 0.0, %v6278
      %v6280 = vpop.f32.mrf.mxu0
      %v6281 = vpop.f32.mrf.mxu0
      %v6282 = vadd.f32 0.0, %v6281
      %v6283 = vpop.f32.mrf.mxu0
      %6284 = vmatprep.mubr.bf16.mxu0 0
      %6285 = vmatmul.mubr.bf16.gmra.mxu0 %v6177
      %v6286 = vpop.f32.mrf.mxu0
      %v6287 = vadd.f32 0.0, %v6286
      %v6288 = vpop.f32.mrf.mxu0
      %v6289 = vpop.f32.mrf.mxu0
      %v6290 = vadd.f32 0.0, %v6289
      %v6291 = vpop.f32.mrf.mxu0
      %6292 = vmatprep.mubr.bf16.mxu0 0
      %6293 = vmatmul.mubr.bf16.gmra.mxu0 %v6180
      %v6294 = vpop.f32.mrf.mxu0
      %v6295 = vadd.f32 0.0, %v6294
      %v6296 = vpop.f32.mrf.mxu0
      %v6297 = vpop.f32.mrf.mxu0
      %v6298 = vadd.f32 0.0, %v6297
      %v6299 = vpop.f32.mrf.mxu0
      %6300 = vmatprep.mubr.bf16.mxu0 0
      %6301 = vmatmul.mubr.bf16.gmra.mxu0 %v6183
      %v6302 = vpop.f32.mrf.mxu0
      %v6303 = vadd.f32 0.0, %v6302
      %v6304 = vpop.f32.mrf.mxu0
      %v6305 = vpop.f32.mrf.mxu0
      %v6306 = vadd.f32 0.0, %v6305
      %v6307 = vpop.f32.mrf.mxu0
      %6308 = vmatprep.mubr.bf16.mxu0 0
      %6309 = vmatmul.mubr.bf16.gmra.mxu0 %v6186
      %v6310 = vpop.f32.mrf.mxu0
      %v6311 = vadd.f32 0.0, %v6310
      %v6312 = vpop.f32.mrf.mxu0
      %v6313 = vpop.f32.mrf.mxu0
      %v6314 = vadd.f32 0.0, %v6313
      %v6315 = vpop.f32.mrf.mxu0
      %6316 = vmatprep.mubr.bf16.mxu0 0
      %6317 = vmatmul.mubr.bf16.gmra.mxu0 %v6189
      %v6318 = vpop.f32.mrf.mxu0
      %v6319 = vadd.f32 0.0, %v6318
      %v6320 = vpop.f32.mrf.mxu0
      %v6321 = vpop.f32.mrf.mxu0
      %v6322 = vadd.f32 0.0, %v6321
      %v6323 = vpop.f32.mrf.mxu0
      %6324 = vmatprep.mubr.bf16.mxu0 0
      %6325 = vmatmul.mubr.bf16.gmra.mxu0 %v6192
      %v6326 = vpop.f32.mrf.mxu0
      %v6327 = vadd.f32 0.0, %v6326
      %v6328 = vpop.f32.mrf.mxu0
      %v6329 = vpop.f32.mrf.mxu0
      %v6330 = vadd.f32 0.0, %v6329
      %v6331 = vpop.f32.mrf.mxu0
      %6332 = vmatprep.mubr.bf16.mxu0 0
      %6333 = vmatmul.mubr.bf16.gmra.mxu0 %v6195
      %v6334 = vpop.f32.mrf.mxu0
      %v6335 = vadd.f32 0.0, %v6334
      %v6336 = vpop.f32.mrf.mxu0
      %v6337 = vpop.f32.mrf.mxu0
      %v6338 = vadd.f32 0.0, %v6337
      %v6339 = vpop.f32.mrf.mxu0
      %6340 = vmatprep.mubr.bf16.mxu0 0
      %6341 = vmatmul.mubr.bf16.gmra.mxu0 %v6198
      %v6342 = vpop.f32.mrf.mxu0
      %v6343 = vadd.f32 0.0, %v6342
      %v6344 = vpop.f32.mrf.mxu0
      %v6345 = vpop.f32.mrf.mxu0
      %v6346 = vadd.f32 0.0, %v6345
      %v6347 = vpop.f32.mrf.mxu0
      %6348 = vmatprep.mubr.bf16.mxu0 0
      %6349 = vmatmul.mubr.bf16.gmra.mxu0 %v6201
      %v6350 = vpop.f32.mrf.mxu0
      %v6351 = vadd.f32 0.0, %v6350
      %v6352 = vpop.f32.mrf.mxu0
      %v6353 = vpop.f32.mrf.mxu0
      %v6354 = vadd.f32 0.0, %v6353
      %v6355 = vpop.f32.mrf.mxu0
      %6356 = vmatprep.mubr.bf16.mxu0 0
      %6357 = vmatmul.mubr.bf16.gmra.mxu0 %v6204
      %v6358 = vpop.f32.mrf.mxu0
      %v6359 = vadd.f32 0.0, %v6358
      %v6360 = vpop.f32.mrf.mxu0
      %v6361 = vpop.f32.mrf.mxu0
      %v6362 = vadd.f32 0.0, %v6361
      %v6363 = vpop.f32.mrf.mxu0
      %6364 = vmatprep.mubr.bf16.mxu0 0
      %6365 = vmatmul.mubr.bf16.gmra.mxu0 %v6207
      %v6366 = vpop.f32.mrf.mxu0
      %v6367 = vadd.f32 0.0, %v6366
      %v6368 = vpop.f32.mrf.mxu0
      %v6369 = vpop.f32.mrf.mxu0
      %v6370 = vadd.f32 0.0, %v6369
      %v6371 = vpop.f32.mrf.mxu0
      %6372 = vdwg.mxu0
      %v6373 = vadd.f32 %v5846, %v6247
      %v6374 = vadd.f32 %v5847, %v6250
      %v6375 = vadd.f32 %v5848, %v6255
      %v6376 = vadd.f32 %v5849, %v6258
      %v6377 = vadd.f32 %v5850, %v6263
      %v6378 = vadd.f32 %v5851, %v6266
      %v6379 = vadd.f32 %v5852, %v6271
      %v6380 = vadd.f32 %v5853, %v6274
      %v6381 = vadd.f32 %v5854, %v6279
      %v6382 = vadd.f32 %v5855, %v6282
      %v6383 = vadd.f32 %v5856, %v6287
      %v6384 = vadd.f32 %v5857, %v6290
      %v6385 = vadd.f32 %v5858, %v6295
      %v6386 = vadd.f32 %v5859, %v6298
      %v6387 = vadd.f32 %v5860, %v6303
      %v6388 = vadd.f32 %v5861, %v6306
      %v6389 = vadd.f32 %v5862, %v6311
      %v6390 = vadd.f32 %v5863, %v6314
      %v6391 = vadd.f32 %v5864, %v6319
      %v6392 = vadd.f32 %v5865, %v6322
      %v6393 = vadd.f32 %v5866, %v6327
      %v6394 = vadd.f32 %v5867, %v6330
      %v6395 = vadd.f32 %v5868, %v6335
      %v6396 = vadd.f32 %v5869, %v6338
      %v6397 = vadd.f32 %v5870, %v6343
      %v6398 = vadd.f32 %v5871, %v6346
      %v6399 = vadd.f32 %v5872, %v6351
      %v6400 = vadd.f32 %v5873, %v6354
      %v6401 = vadd.f32 %v5874, %v6359
      %v6402 = vadd.f32 %v5875, %v6362
      %v6403 = vadd.f32 %v5876, %v6367
      %v6404 = vadd.f32 %v5877, %v6370
      %v6405 = vld [vmem:[%s6] sm:$0x1]
      %v6407 = vlaneseq
      %v6408 = vshrl.u32 %v6407, 7
      %v6409 = vsub.s32 0, %v6408
      %v6410 = vrot.slane %v6405, %v6409
      %v6412 = vmul.f32 %v6373, %v6410
      %v6413 = vmul.f32 %v6374, %v6410
      %v6414 = vmul.f32 %v6375, %v6410
      %v6415 = vmul.f32 %v6376, %v6410
      %v6416 = vmul.f32 %v6377, %v6410
      %v6417 = vmul.f32 %v6378, %v6410
      %v6418 = vmul.f32 %v6379, %v6410
      %v6419 = vmul.f32 %v6380, %v6410
      %v6420 = vmul.f32 %v6381, %v6410
      %v6421 = vmul.f32 %v6382, %v6410
      %v6422 = vmul.f32 %v6383, %v6410
      %v6423 = vmul.f32 %v6384, %v6410
      %v6424 = vmul.f32 %v6385, %v6410
      %v6425 = vmul.f32 %v6386, %v6410
      %v6426 = vmul.f32 %v6387, %v6410
      %v6427 = vmul.f32 %v6388, %v6410
      %v6428 = vmul.f32 %v6389, %v6410
      %v6429 = vmul.f32 %v6390, %v6410
      %v6430 = vmul.f32 %v6391, %v6410
      %v6431 = vmul.f32 %v6392, %v6410
      %v6432 = vmul.f32 %v6393, %v6410
      %v6433 = vmul.f32 %v6394, %v6410
      %v6434 = vmul.f32 %v6395, %v6410
      %v6435 = vmul.f32 %v6396, %v6410
      %v6436 = vmul.f32 %v6397, %v6410
      %v6437 = vmul.f32 %v6398, %v6410
      %v6438 = vmul.f32 %v6399, %v6410
      %v6439 = vmul.f32 %v6400, %v6410
      %v6440 = vmul.f32 %v6401, %v6410
      %v6441 = vmul.f32 %v6402, %v6410
      %v6442 = vmul.f32 %v6403, %v6410
      %v6443 = vmul.f32 %v6404, %v6410
      %v6444 = vld [vmem:[%s7] sm:$0x1]
      %v6446 = vlaneseq
      %v6447 = vshrl.u32 %v6446, 7
      %v6448 = vsub.s32 0, %v6447
      %v6449 = vrot.slane %v6444, %v6448
      %v6451 = vadd.f32 %v6412, %v6449
      %v6452 = vadd.f32 %v6413, %v6449
      %v6453 = vadd.f32 %v6414, %v6449
      %v6454 = vadd.f32 %v6415, %v6449
      %v6455 = vadd.f32 %v6416, %v6449
      %v6456 = vadd.f32 %v6417, %v6449
      %v6457 = vadd.f32 %v6418, %v6449
      %v6458 = vadd.f32 %v6419, %v6449
      %v6459 = vadd.f32 %v6420, %v6449
      %v6460 = vadd.f32 %v6421, %v6449
      %v6461 = vadd.f32 %v6422, %v6449
      %v6462 = vadd.f32 %v6423, %v6449
      %v6463 = vadd.f32 %v6424, %v6449
      %v6464 = vadd.f32 %v6425, %v6449
      %v6465 = vadd.f32 %v6426, %v6449
      %v6466 = vadd.f32 %v6427, %v6449
      %v6467 = vadd.f32 %v6428, %v6449
      %v6468 = vadd.f32 %v6429, %v6449
      %v6469 = vadd.f32 %v6430, %v6449
      %v6470 = vadd.f32 %v6431, %v6449
      %v6471 = vadd.f32 %v6432, %v6449
      %v6472 = vadd.f32 %v6433, %v6449
      %v6473 = vadd.f32 %v6434, %v6449
      %v6474 = vadd.f32 %v6435, %v6449
      %v6475 = vadd.f32 %v6436, %v6449
      %v6476 = vadd.f32 %v6437, %v6449
      %v6477 = vadd.f32 %v6438, %v6449
      %v6478 = vadd.f32 %v6439, %v6449
      %v6479 = vadd.f32 %v6440, %v6449
      %v6480 = vadd.f32 %v6441, %v6449
      %v6481 = vadd.f32 %v6442, %v6449
      %v6482 = vadd.f32 %v6443, %v6449
      %v6483 = vmax.f32 %v6451, 0.0
      %v6484 = vmax.f32 %v6452, 0.0
      %v6485 = vmax.f32 %v6453, 0.0
      %v6486 = vmax.f32 %v6454, 0.0
      %v6487 = vmax.f32 %v6455, 0.0
      %v6488 = vmax.f32 %v6456, 0.0
      %v6489 = vmax.f32 %v6457, 0.0
      %v6490 = vmax.f32 %v6458, 0.0
      %v6491 = vmax.f32 %v6459, 0.0
      %v6492 = vmax.f32 %v6460, 0.0
      %v6493 = vmax.f32 %v6461, 0.0
      %v6494 = vmax.f32 %v6462, 0.0
      %v6495 = vmax.f32 %v6463, 0.0
      %v6496 = vmax.f32 %v6464, 0.0
      %v6497 = vmax.f32 %v6465, 0.0
      %v6498 = vmax.f32 %v6466, 0.0
      %v6499 = vmax.f32 %v6467, 0.0
      %v6500 = vmax.f32 %v6468, 0.0
      %v6501 = vmax.f32 %v6469, 0.0
      %v6502 = vmax.f32 %v6470, 0.0
      %v6503 = vmax.f32 %v6471, 0.0
      %v6504 = vmax.f32 %v6472, 0.0
      %v6505 = vmax.f32 %v6473, 0.0
      %v6506 = vmax.f32 %v6474, 0.0
      %v6507 = vmax.f32 %v6475, 0.0
      %v6508 = vmax.f32 %v6476, 0.0
      %v6509 = vmax.f32 %v6477, 0.0
      %v6510 = vmax.f32 %v6478, 0.0
      %v6511 = vmax.f32 %v6479, 0.0
      %v6512 = vmax.f32 %v6480, 0.0
      %v6513 = vmax.f32 %v6481, 0.0
      %v6514 = vmax.f32 %v6482, 0.0
      %v6515 = vpack.c.bf16 %v6484, %v6483
      %v6516 = vpack.c.bf16 %v6486, %v6485
      %v6517 = vpack.c.bf16 %v6488, %v6487
      %v6518 = vpack.c.bf16 %v6490, %v6489
      %v6519 = vpack.c.bf16 %v6492, %v6491
      %v6520 = vpack.c.bf16 %v6494, %v6493
      %v6521 = vpack.c.bf16 %v6496, %v6495
      %v6522 = vpack.c.bf16 %v6498, %v6497
      %v6523 = vpack.c.bf16 %v6500, %v6499
      %v6524 = vpack.c.bf16 %v6502, %v6501
      %v6525 = vpack.c.bf16 %v6504, %v6503
      %v6526 = vpack.c.bf16 %v6506, %v6505
      %v6527 = vpack.c.bf16 %v6508, %v6507
      %v6528 = vpack.c.bf16 %v6510, %v6509
      %v6529 = vpack.c.bf16 %v6512, %v6511
      %v6530 = vpack.c.bf16 %v6514, %v6513
      %v6531 = vld [vmem:[%s3] sm:$0x3]
      %v6533 = vsel %vm2029, %v6515, 0
      %v6536 = vsel %vm2029, %v6516, 0
      %v6539 = vsel %vm2029, %v6517, 0
      %v6542 = vsel %vm2029, %v6518, 0
      %v6545 = vsel %vm2029, %v6519, 0
      %v6548 = vsel %vm2029, %v6520, 0
      %v6551 = vsel %vm2029, %v6521, 0
      %v6554 = vsel %vm2029, %v6522, 0
      %v6557 = vsel %vm2029, %v6523, 0
      %v6560 = vsel %vm2029, %v6524, 0
      %v6563 = vsel %vm2029, %v6525, 0
      %v6566 = vsel %vm2029, %v6526, 0
      %v6569 = vsel %vm2029, %v6527, 0
      %v6572 = vsel %vm2029, %v6528, 0
      %v6575 = vsel %vm2029, %v6529, 0
      %v6578 = vsel %vm2029, %v6530, 0
      %v6581 = vsel %vm2078, %v6531, 0
      %6583 = vmatprep.subr.bf16.mxu0 0
      %6584 = vmatpush1.bf16.msra.mxu0 0
      %6585 = vmatprep.subr.bf16.mxu0 0
      %6586 = vmatpush1.bf16.msra.mxu0 0
      %6587 = vmatprep.subr.bf16.mxu0 0
      %6588 = vmatpush1.bf16.msra.mxu0 0
      %6589 = vmatprep.subr.bf16.mxu0 0
      %6590 = vmatpush1.bf16.msra.mxu0 0
      %6591 = vmatprep.subr.bf16.mxu0 0
      %6592 = vmatpush1.bf16.msra.mxu0 0
      %6593 = vmatprep.subr.bf16.mxu0 0
      %6594 = vmatpush1.bf16.msra.mxu0 0
      %6595 = vmatprep.subr.bf16.mxu0 0
      %6596 = vmatpush1.bf16.msra.mxu0 0
      %6597 = vmatprep.subr.bf16.mxu0 0
      %6598 = vmatpush1.bf16.msra.mxu0 %v6581
      %6599 = vmatprep.subr.bf16.mxu0 0
      %6600 = vmatpush2.bf16.msra.mxu0 0
      %6601 = vmatprep.subr.bf16.mxu0 0
      %6602 = vmatpush2.bf16.msra.mxu0 0
      %6603 = vmatprep.subr.bf16.mxu0 0
      %6604 = vmatpush2.bf16.msra.mxu0 0
      %6605 = vmatprep.subr.bf16.mxu0 0
      %6606 = vmatpush2.bf16.msra.mxu0 0
      %6607 = vmatprep.subr.bf16.mxu0 0
      %6608 = vmatpush2.bf16.msra.mxu0 0
      %6609 = vmatprep.subr.bf16.mxu0 0
      %6610 = vmatpush2.bf16.msra.mxu0 0
      %6611 = vmatprep.subr.bf16.mxu0 0
      %6612 = vmatpush2.bf16.msra.mxu0 0
      %6613 = vmatprep.subr.bf16.mxu0 0
      %6614 = vmatpush2.bf16.msra.mxu0 0
      %6615 = vmatprep.mubr.bf16.mxu0 0
      %6616 = vmatmul.mubr.bf16.gmra.mxu0 %v6533
      %v6617 = vpop.f32.mrf.mxu0
      %v6618 = vadd.f32 0.0, %v6617
      %v6619 = vpop.f32.mrf.mxu0
      %v6620 = vpop.f32.mrf.mxu0
      %v6621 = vadd.f32 0.0, %v6620
      %v6622 = vpop.f32.mrf.mxu0
      %6623 = vmatprep.mubr.bf16.mxu0 0
      %6624 = vmatmul.mubr.bf16.gmra.mxu0 %v6536
      %v6625 = vpop.f32.mrf.mxu0
      %v6626 = vadd.f32 0.0, %v6625
      %v6627 = vpop.f32.mrf.mxu0
      %v6628 = vpop.f32.mrf.mxu0
      %v6629 = vadd.f32 0.0, %v6628
      %v6630 = vpop.f32.mrf.mxu0
      %6631 = vmatprep.mubr.bf16.mxu0 0
      %6632 = vmatmul.mubr.bf16.gmra.mxu0 %v6539
      %v6633 = vpop.f32.mrf.mxu0
      %v6634 = vadd.f32 0.0, %v6633
      %v6635 = vpop.f32.mrf.mxu0
      %v6636 = vpop.f32.mrf.mxu0
      %v6637 = vadd.f32 0.0, %v6636
      %v6638 = vpop.f32.mrf.mxu0
      %6639 = vmatprep.mubr.bf16.mxu0 0
      %6640 = vmatmul.mubr.bf16.gmra.mxu0 %v6542
      %v6641 = vpop.f32.mrf.mxu0
      %v6642 = vadd.f32 0.0, %v6641
      %v6643 = vpop.f32.mrf.mxu0
      %v6644 = vpop.f32.mrf.mxu0
      %v6645 = vadd.f32 0.0, %v6644
      %v6646 = vpop.f32.mrf.mxu0
      %6647 = vmatprep.mubr.bf16.mxu0 0
      %6648 = vmatmul.mubr.bf16.gmra.mxu0 %v6545
      %v6649 = vpop.f32.mrf.mxu0
      %v6650 = vadd.f32 0.0, %v6649
      %v6651 = vpop.f32.mrf.mxu0
      %v6652 = vpop.f32.mrf.mxu0
      %v6653 = vadd.f32 0.0, %v6652
      %v6654 = vpop.f32.mrf.mxu0
      %6655 = vmatprep.mubr.bf16.mxu0 0
      %6656 = vmatmul.mubr.bf16.gmra.mxu0 %v6548
      %v6657 = vpop.f32.mrf.mxu0
      %v6658 = vadd.f32 0.0, %v6657
      %v6659 = vpop.f32.mrf.mxu0
      %v6660 = vpop.f32.mrf.mxu0
      %v6661 = vadd.f32 0.0, %v6660
      %v6662 = vpop.f32.mrf.mxu0
      %6663 = vmatprep.mubr.bf16.mxu0 0
      %6664 = vmatmul.mubr.bf16.gmra.mxu0 %v6551
      %v6665 = vpop.f32.mrf.mxu0
      %v6666 = vadd.f32 0.0, %v6665
      %v6667 = vpop.f32.mrf.mxu0
      %v6668 = vpop.f32.mrf.mxu0
      %v6669 = vadd.f32 0.0, %v6668
      %v6670 = vpop.f32.mrf.mxu0
      %6671 = vmatprep.mubr.bf16.mxu0 0
      %6672 = vmatmul.mubr.bf16.gmra.mxu0 %v6554
      %v6673 = vpop.f32.mrf.mxu0
      %v6674 = vadd.f32 0.0, %v6673
      %v6675 = vpop.f32.mrf.mxu0
      %v6676 = vpop.f32.mrf.mxu0
      %v6677 = vadd.f32 0.0, %v6676
      %v6678 = vpop.f32.mrf.mxu0
      %6679 = vmatprep.mubr.bf16.mxu0 0
      %6680 = vmatmul.mubr.bf16.gmra.mxu0 %v6557
      %v6681 = vpop.f32.mrf.mxu0
      %v6682 = vadd.f32 0.0, %v6681
      %v6683 = vpop.f32.mrf.mxu0
      %v6684 = vpop.f32.mrf.mxu0
      %v6685 = vadd.f32 0.0, %v6684
      %v6686 = vpop.f32.mrf.mxu0
      %6687 = vmatprep.mubr.bf16.mxu0 0
      %6688 = vmatmul.mubr.bf16.gmra.mxu0 %v6560
      %v6689 = vpop.f32.mrf.mxu0
      %v6690 = vadd.f32 0.0, %v6689
      %v6691 = vpop.f32.mrf.mxu0
      %v6692 = vpop.f32.mrf.mxu0
      %v6693 = vadd.f32 0.0, %v6692
      %v6694 = vpop.f32.mrf.mxu0
      %6695 = vmatprep.mubr.bf16.mxu0 0
      %6696 = vmatmul.mubr.bf16.gmra.mxu0 %v6563
      %v6697 = vpop.f32.mrf.mxu0
      %v6698 = vadd.f32 0.0, %v6697
      %v6699 = vpop.f32.mrf.mxu0
      %v6700 = vpop.f32.mrf.mxu0
      %v6701 = vadd.f32 0.0, %v6700
      %v6702 = vpop.f32.mrf.mxu0
      %6703 = vmatprep.mubr.bf16.mxu0 0
      %6704 = vmatmul.mubr.bf16.gmra.mxu0 %v6566
      %v6705 = vpop.f32.mrf.mxu0
      %v6706 = vadd.f32 0.0, %v6705
      %v6707 = vpop.f32.mrf.mxu0
      %v6708 = vpop.f32.mrf.mxu0
      %v6709 = vadd.f32 0.0, %v6708
      %v6710 = vpop.f32.mrf.mxu0
      %6711 = vmatprep.mubr.bf16.mxu0 0
      %6712 = vmatmul.mubr.bf16.gmra.mxu0 %v6569
      %v6713 = vpop.f32.mrf.mxu0
      %v6714 = vadd.f32 0.0, %v6713
      %v6715 = vpop.f32.mrf.mxu0
      %v6716 = vpop.f32.mrf.mxu0
      %v6717 = vadd.f32 0.0, %v6716
      %v6718 = vpop.f32.mrf.mxu0
      %6719 = vmatprep.mubr.bf16.mxu0 0
      %6720 = vmatmul.mubr.bf16.gmra.mxu0 %v6572
      %v6721 = vpop.f32.mrf.mxu0
      %v6722 = vadd.f32 0.0, %v6721
      %v6723 = vpop.f32.mrf.mxu0
      %v6724 = vpop.f32.mrf.mxu0
      %v6725 = vadd.f32 0.0, %v6724
      %v6726 = vpop.f32.mrf.mxu0
      %6727 = vmatprep.mubr.bf16.mxu0 0
      %6728 = vmatmul.mubr.bf16.gmra.mxu0 %v6575
      %v6729 = vpop.f32.mrf.mxu0
      %v6730 = vadd.f32 0.0, %v6729
      %v6731 = vpop.f32.mrf.mxu0
      %v6732 = vpop.f32.mrf.mxu0
      %v6733 = vadd.f32 0.0, %v6732
      %v6734 = vpop.f32.mrf.mxu0
      %6735 = vmatprep.mubr.bf16.mxu0 0
      %6736 = vmatmul.mubr.bf16.gmra.mxu0 %v6578
      %v6737 = vpop.f32.mrf.mxu0
      %v6738 = vadd.f32 0.0, %v6737
      %v6739 = vpop.f32.mrf.mxu0
      %v6740 = vpop.f32.mrf.mxu0
      %v6741 = vadd.f32 0.0, %v6740
      %v6742 = vpop.f32.mrf.mxu0
      %6743 = vdwg.mxu0
      %v6744 = vld [vmem:[%s8] sm:$0x1]
      %v6746 = vlaneseq
      %v6747 = vshrl.u32 %v6746, 7
      %v6748 = vsub.s32 0, %v6747
      %v6749 = vrot.slane %v6744, %v6748
      %v6751 = vmul.f32 %v6618, %v6749
      %v6752 = vmul.f32 %v6621, %v6749
      %v6753 = vmul.f32 %v6626, %v6749
      %v6754 = vmul.f32 %v6629, %v6749
      %v6755 = vmul.f32 %v6634, %v6749
      %v6756 = vmul.f32 %v6637, %v6749
      %v6757 = vmul.f32 %v6642, %v6749
      %v6758 = vmul.f32 %v6645, %v6749
      %v6759 = vmul.f32 %v6650, %v6749
      %v6760 = vmul.f32 %v6653, %v6749
      %v6761 = vmul.f32 %v6658, %v6749
      %v6762 = vmul.f32 %v6661, %v6749
      %v6763 = vmul.f32 %v6666, %v6749
      %v6764 = vmul.f32 %v6669, %v6749
      %v6765 = vmul.f32 %v6674, %v6749
      %v6766 = vmul.f32 %v6677, %v6749
      %v6767 = vmul.f32 %v6682, %v6749
      %v6768 = vmul.f32 %v6685, %v6749
      %v6769 = vmul.f32 %v6690, %v6749
      %v6770 = vmul.f32 %v6693, %v6749
      %v6771 = vmul.f32 %v6698, %v6749
      %v6772 = vmul.f32 %v6701, %v6749
      %v6773 = vmul.f32 %v6706, %v6749
      %v6774 = vmul.f32 %v6709, %v6749
      %v6775 = vmul.f32 %v6714, %v6749
      %v6776 = vmul.f32 %v6717, %v6749
      %v6777 = vmul.f32 %v6722, %v6749
      %v6778 = vmul.f32 %v6725, %v6749
      %v6779 = vmul.f32 %v6730, %v6749
      %v6780 = vmul.f32 %v6733, %v6749
      %v6781 = vmul.f32 %v6738, %v6749
      %v6782 = vmul.f32 %v6741, %v6749
      %v6783 = vld [vmem:[%s9] sm:$0x1]
      %v6785 = vlaneseq
      %v6786 = vshrl.u32 %v6785, 7
      %v6787 = vsub.s32 0, %v6786
      %v6788 = vrot.slane %v6783, %v6787
      %v6790 = vadd.f32 %v6751, %v6788
      %v6791 = vadd.f32 %v6752, %v6788
      %v6792 = vadd.f32 %v6753, %v6788
      %v6793 = vadd.f32 %v6754, %v6788
      %v6794 = vadd.f32 %v6755, %v6788
      %v6795 = vadd.f32 %v6756, %v6788
      %v6796 = vadd.f32 %v6757, %v6788
      %v6797 = vadd.f32 %v6758, %v6788
      %v6798 = vadd.f32 %v6759, %v6788
      %v6799 = vadd.f32 %v6760, %v6788
      %v6800 = vadd.f32 %v6761, %v6788
      %v6801 = vadd.f32 %v6762, %v6788
      %v6802 = vadd.f32 %v6763, %v6788
      %v6803 = vadd.f32 %v6764, %v6788
      %v6804 = vadd.f32 %v6765, %v6788
      %v6805 = vadd.f32 %v6766, %v6788
      %v6806 = vadd.f32 %v6767, %v6788
      %v6807 = vadd.f32 %v6768, %v6788
      %v6808 = vadd.f32 %v6769, %v6788
      %v6809 = vadd.f32 %v6770, %v6788
      %v6810 = vadd.f32 %v6771, %v6788
      %v6811 = vadd.f32 %v6772, %v6788
      %v6812 = vadd.f32 %v6773, %v6788
      %v6813 = vadd.f32 %v6774, %v6788
      %v6814 = vadd.f32 %v6775, %v6788
      %v6815 = vadd.f32 %v6776, %v6788
      %v6816 = vadd.f32 %v6777, %v6788
      %v6817 = vadd.f32 %v6778, %v6788
      %v6818 = vadd.f32 %v6779, %v6788
      %v6819 = vadd.f32 %v6780, %v6788
      %v6820 = vadd.f32 %v6781, %v6788
      %v6821 = vadd.f32 %v6782, %v6788
      %v6822 = vld [vmem:[%s354] sm:$0xf]
      %v6823 = vld [vmem:[%s354 + $0x4] sm:$0xf]
      %v6824 = vld [vmem:[%s354 + $0x8] sm:$0xf]
      %v6825 = vld [vmem:[%s354 + $0xc] sm:$0xf]
      %v6826 = vld [vmem:[%s354 + $0x10] sm:$0xf]
      %v6827 = vld [vmem:[%s354 + $0x14] sm:$0xf]
      %v6828 = vld [vmem:[%s354 + $0x18] sm:$0xf]
      %v6829 = vld [vmem:[%s354 + $0x1c] sm:$0xf]
      %v6830 = vld [vmem:[%s354 + $0x20] sm:$0xf]
      %v6831 = vld [vmem:[%s354 + $0x24] sm:$0xf]
      %v6832 = vld [vmem:[%s354 + $0x28] sm:$0xf]
      %v6833 = vld [vmem:[%s354 + $0x2c] sm:$0xf]
      %v6834 = vld [vmem:[%s354 + $0x30] sm:$0xf]
      %v6835 = vld [vmem:[%s354 + $0x34] sm:$0xf]
      %v6836 = vld [vmem:[%s354 + $0x38] sm:$0xf]
      %v6837 = vld [vmem:[%s354 + $0x3c] sm:$0xf]
      %v6838 = vld [vmem:[%s354 + $0x40] sm:$0xf]
      %v6839 = vld [vmem:[%s354 + $0x44] sm:$0xf]
      %v6840 = vld [vmem:[%s354 + $0x48] sm:$0xf]
      %v6841 = vld [vmem:[%s354 + $0x4c] sm:$0xf]
      %v6842 = vld [vmem:[%s354 + $0x50] sm:$0xf]
      %v6843 = vld [vmem:[%s354 + $0x54] sm:$0xf]
      %v6844 = vld [vmem:[%s354 + $0x58] sm:$0xf]
      %v6845 = vld [vmem:[%s354 + $0x5c] sm:$0xf]
      %v6846 = vld [vmem:[%s354 + $0x60] sm:$0xf]
      %v6847 = vld [vmem:[%s354 + $0x64] sm:$0xf]
      %v6848 = vld [vmem:[%s354 + $0x68] sm:$0xf]
      %v6849 = vld [vmem:[%s354 + $0x6c] sm:$0xf]
      %v6850 = vld [vmem:[%s354 + $0x70] sm:$0xf]
      %v6851 = vld [vmem:[%s354 + $0x74] sm:$0xf]
      %v6852 = vld [vmem:[%s354 + $0x78] sm:$0xf]
      %v6853 = vld [vmem:[%s354 + $0x7c] sm:$0xf]
      %v6854 = vunpack.c.l.bf16 %v6822
      %v6855 = vunpack.c.l.bf16 %v6823
      %v6856 = vunpack.c.l.bf16 %v6824
      %v6857 = vunpack.c.l.bf16 %v6825
      %v6858 = vunpack.c.l.bf16 %v6826
      %v6859 = vunpack.c.l.bf16 %v6827
      %v6860 = vunpack.c.l.bf16 %v6828
      %v6861 = vunpack.c.l.bf16 %v6829
      %v6862 = vunpack.c.l.bf16 %v6830
      %v6863 = vunpack.c.l.bf16 %v6831
      %v6864 = vunpack.c.l.bf16 %v6832
      %v6865 = vunpack.c.l.bf16 %v6833
      %v6866 = vunpack.c.l.bf16 %v6834
      %v6867 = vunpack.c.l.bf16 %v6835
      %v6868 = vunpack.c.l.bf16 %v6836
      %v6869 = vunpack.c.l.bf16 %v6837
      %v6870 = vunpack.c.l.bf16 %v6838
      %v6871 = vunpack.c.l.bf16 %v6839
      %v6872 = vunpack.c.l.bf16 %v6840
      %v6873 = vunpack.c.l.bf16 %v6841
      %v6874 = vunpack.c.l.bf16 %v6842
      %v6875 = vunpack.c.l.bf16 %v6843
      %v6876 = vunpack.c.l.bf16 %v6844
      %v6877 = vunpack.c.l.bf16 %v6845
      %v6878 = vunpack.c.l.bf16 %v6846
      %v6879 = vunpack.c.l.bf16 %v6847
      %v6880 = vunpack.c.l.bf16 %v6848
      %v6881 = vunpack.c.l.bf16 %v6849
      %v6882 = vunpack.c.l.bf16 %v6850
      %v6883 = vunpack.c.l.bf16 %v6851
      %v6884 = vunpack.c.l.bf16 %v6852
      %v6885 = vunpack.c.l.bf16 %v6853
      %v6886 = vadd.f32 %v6790, %v6854
      %v6887 = vadd.f32 %v6791, %v6855
      %v6888 = vadd.f32 %v6792, %v6856
      %v6889 = vadd.f32 %v6793, %v6857
      %v6890 = vadd.f32 %v6794, %v6858
      %v6891 = vadd.f32 %v6795, %v6859
      %v6892 = vadd.f32 %v6796, %v6860
      %v6893 = vadd.f32 %v6797, %v6861
      %v6894 = vadd.f32 %v6798, %v6862
      %v6895 = vadd.f32 %v6799, %v6863
      %v6896 = vadd.f32 %v6800, %v6864
      %v6897 = vadd.f32 %v6801, %v6865
      %v6898 = vadd.f32 %v6802, %v6866
      %v6899 = vadd.f32 %v6803, %v6867
      %v6900 = vadd.f32 %v6804, %v6868
      %v6901 = vadd.f32 %v6805, %v6869
      %v6902 = vadd.f32 %v6806, %v6870
      %v6903 = vadd.f32 %v6807, %v6871
      %v6904 = vadd.f32 %v6808, %v6872
      %v6905 = vadd.f32 %v6809, %v6873
      %v6906 = vadd.f32 %v6810, %v6874
      %v6907 = vadd.f32 %v6811, %v6875
      %v6908 = vadd.f32 %v6812, %v6876
      %v6909 = vadd.f32 %v6813, %v6877
      %v6910 = vadd.f32 %v6814, %v6878
      %v6911 = vadd.f32 %v6815, %v6879
      %v6912 = vadd.f32 %v6816, %v6880
      %v6913 = vadd.f32 %v6817, %v6881
      %v6914 = vadd.f32 %v6818, %v6882
      %v6915 = vadd.f32 %v6819, %v6883
      %v6916 = vadd.f32 %v6820, %v6884
      %v6917 = vadd.f32 %v6821, %v6885
      %v6918 = vmax.f32 %v6886, 0.0
      %v6919 = vmax.f32 %v6887, 0.0
      %v6920 = vmax.f32 %v6888, 0.0
      %v6921 = vmax.f32 %v6889, 0.0
      %v6922 = vmax.f32 %v6890, 0.0
      %v6923 = vmax.f32 %v6891, 0.0
      %v6924 = vmax.f32 %v6892, 0.0
      %v6925 = vmax.f32 %v6893, 0.0
      %v6926 = vmax.f32 %v6894, 0.0
      %v6927 = vmax.f32 %v6895, 0.0
      %v6928 = vmax.f32 %v6896, 0.0
      %v6929 = vmax.f32 %v6897, 0.0
      %v6930 = vmax.f32 %v6898, 0.0
      %v6931 = vmax.f32 %v6899, 0.0
      %v6932 = vmax.f32 %v6900, 0.0
      %v6933 = vmax.f32 %v6901, 0.0
      %v6934 = vmax.f32 %v6902, 0.0
      %v6935 = vmax.f32 %v6903, 0.0
      %v6936 = vmax.f32 %v6904, 0.0
      %v6937 = vmax.f32 %v6905, 0.0
      %v6938 = vmax.f32 %v6906, 0.0
      %v6939 = vmax.f32 %v6907, 0.0
      %v6940 = vmax.f32 %v6908, 0.0
      %v6941 = vmax.f32 %v6909, 0.0
      %v6942 = vmax.f32 %v6910, 0.0
      %v6943 = vmax.f32 %v6911, 0.0
      %v6944 = vmax.f32 %v6912, 0.0
      %v6945 = vmax.f32 %v6913, 0.0
      %v6946 = vmax.f32 %v6914, 0.0
      %v6947 = vmax.f32 %v6915, 0.0
      %v6948 = vmax.f32 %v6916, 0.0
      %v6949 = vmax.f32 %v6917, 0.0
      %v6950 = vpack.c.bf16 %v6919, %v6918
      %v6951 = vpack.c.bf16 %v6921, %v6920
      %v6952 = vpack.c.bf16 %v6923, %v6922
      %v6953 = vpack.c.bf16 %v6925, %v6924
      %v6954 = vpack.c.bf16 %v6927, %v6926
      %v6955 = vpack.c.bf16 %v6929, %v6928
      %v6956 = vpack.c.bf16 %v6931, %v6930
      %v6957 = vpack.c.bf16 %v6933, %v6932
      %v6958 = vpack.c.bf16 %v6935, %v6934
      %v6959 = vpack.c.bf16 %v6937, %v6936
      %v6960 = vpack.c.bf16 %v6939, %v6938
      %v6961 = vpack.c.bf16 %v6941, %v6940
      %v6962 = vpack.c.bf16 %v6943, %v6942
      %v6963 = vpack.c.bf16 %v6945, %v6944
      %v6964 = vpack.c.bf16 %v6947, %v6946
      %v6965 = vpack.c.bf16 %v6949, %v6948
      %v6982 = vunpack.c.l.b16 %v6950
      %v6983 = vunpack.c.h.b16 %v6950
      %v6984 = vunpack.c.l.b16 %v6951
      %v6985 = vunpack.c.h.b16 %v6951
      %v6986 = vunpack.c.l.b16 %v6952
      %v6987 = vunpack.c.h.b16 %v6952
      %v6988 = vunpack.c.l.b16 %v6953
      %v6989 = vunpack.c.h.b16 %v6953
      %v6990 = vunpack.c.l.b16 %v6954
      %v6991 = vunpack.c.h.b16 %v6954
      %v6992 = vunpack.c.l.b16 %v6955
      %v6993 = vunpack.c.h.b16 %v6955
      %v6994 = vunpack.c.l.b16 %v6956
      %v6995 = vunpack.c.h.b16 %v6956
      %v6996 = vunpack.c.l.b16 %v6957
      %v6997 = vunpack.c.h.b16 %v6957
      %v6998 = vunpack.c.l.b16 %v6958
      %v6999 = vunpack.c.h.b16 %v6958
      %v7000 = vunpack.c.l.b16 %v6959
      %v7001 = vunpack.c.h.b16 %v6959
      %v7002 = vunpack.c.l.b16 %v6960
      %v7003 = vunpack.c.h.b16 %v6960
      %v7004 = vunpack.c.l.b16 %v6961
      %v7005 = vunpack.c.h.b16 %v6961
      %v7006 = vunpack.c.l.b16 %v6962
      %v7007 = vunpack.c.h.b16 %v6962
      %v7008 = vunpack.c.l.b16 %v6963
      %v7009 = vunpack.c.h.b16 %v6963
      %v7010 = vunpack.c.l.b16 %v6964
      %v7011 = vunpack.c.h.b16 %v6964
      %v7012 = vunpack.c.l.b16 %v6965
      %v7013 = vunpack.c.h.b16 %v6965
      %v7014 = vpack.c.b16 %v6982, %v6982
      %v7015 = vpack.c.b16 %v6983, %v6983
      %v7016 = vpack.c.b16 %v6984, %v6984
      %v7017 = vpack.c.b16 %v6985, %v6985
      %v7018 = vpack.c.b16 %v6986, %v6986
      %v7019 = vpack.c.b16 %v6987, %v6987
      %v7020 = vpack.c.b16 %v6988, %v6988
      %v7021 = vpack.c.b16 %v6989, %v6989
      %v7022 = vpack.c.b16 %v6990, %v6990
      %v7023 = vpack.c.b16 %v6991, %v6991
      %v7024 = vpack.c.b16 %v6992, %v6992
      %v7025 = vpack.c.b16 %v6993, %v6993
      %v7026 = vpack.c.b16 %v6994, %v6994
      %v7027 = vpack.c.b16 %v6995, %v6995
      %v7028 = vpack.c.b16 %v6996, %v6996
      %v7029 = vpack.c.b16 %v6997, %v6997
      %v7030 = vpack.c.b16 %v6998, %v6998
      %v7031 = vpack.c.b16 %v6999, %v6999
      %v7032 = vpack.c.b16 %v7000, %v7000
      %v7033 = vpack.c.b16 %v7001, %v7001
      %v7034 = vpack.c.b16 %v7002, %v7002
      %v7035 = vpack.c.b16 %v7003, %v7003
      %v7036 = vpack.c.b16 %v7004, %v7004
      %v7037 = vpack.c.b16 %v7005, %v7005
      %v7038 = vpack.c.b16 %v7006, %v7006
      %v7039 = vpack.c.b16 %v7007, %v7007
      %v7040 = vpack.c.b16 %v7008, %v7008
      %v7041 = vpack.c.b16 %v7009, %v7009
      %v7042 = vpack.c.b16 %v7010, %v7010
      %v7043 = vpack.c.b16 %v7011, %v7011
      %v7044 = vpack.c.b16 %v7012, %v7012
      %v7045 = vpack.c.b16 %v7013, %v7013
      %vm7078 = vcmask 125952
      %7079 = vst.msk [vmem:[%s359] sm:$0xf] %vm7078, %v7014
      %7080 = vst.msk [vmem:[%s359 + $0x4] sm:$0xf] %vm7078, %v7015
      %7081 = vst.msk [vmem:[%s359 + $0x8] sm:$0xf] %vm7078, %v7016
      %7082 = vst.msk [vmem:[%s359 + $0xc] sm:$0xf] %vm7078, %v7017
      %7083 = vst.msk [vmem:[%s359 + $0x10] sm:$0xf] %vm7078, %v7018
      %7084 = vst.msk [vmem:[%s359 + $0x14] sm:$0xf] %vm7078, %v7019
      %7085 = vst.msk [vmem:[%s359 + $0x18] sm:$0xf] %vm7078, %v7020
      %7086 = vst.msk [vmem:[%s359 + $0x1c] sm:$0xf] %vm7078, %v7021
      %7087 = vst.msk [vmem:[%s359 + $0x20] sm:$0xf] %vm7078, %v7022
      %7088 = vst.msk [vmem:[%s359 + $0x24] sm:$0xf] %vm7078, %v7023
      %7089 = vst.msk [vmem:[%s359 + $0x28] sm:$0xf] %vm7078, %v7024
      %7090 = vst.msk [vmem:[%s359 + $0x2c] sm:$0xf] %vm7078, %v7025
      %7091 = vst.msk [vmem:[%s359 + $0x30] sm:$0xf] %vm7078, %v7026
      %7092 = vst.msk [vmem:[%s359 + $0x34] sm:$0xf] %vm7078, %v7027
      %7093 = vst.msk [vmem:[%s359 + $0x38] sm:$0xf] %vm7078, %v7028
      %7094 = vst.msk [vmem:[%s359 + $0x3c] sm:$0xf] %vm7078, %v7029
      %7095 = vst.msk [vmem:[%s359 + $0x40] sm:$0xf] %vm7078, %v7030
      %7096 = vst.msk [vmem:[%s359 + $0x44] sm:$0xf] %vm7078, %v7031
      %7097 = vst.msk [vmem:[%s359 + $0x48] sm:$0xf] %vm7078, %v7032
      %7098 = vst.msk [vmem:[%s359 + $0x4c] sm:$0xf] %vm7078, %v7033
      %7099 = vst.msk [vmem:[%s359 + $0x50] sm:$0xf] %vm7078, %v7034
      %7100 = vst.msk [vmem:[%s359 + $0x54] sm:$0xf] %vm7078, %v7035
      %7101 = vst.msk [vmem:[%s359 + $0x58] sm:$0xf] %vm7078, %v7036
      %7102 = vst.msk [vmem:[%s359 + $0x5c] sm:$0xf] %vm7078, %v7037
      %7103 = vst.msk [vmem:[%s359 + $0x60] sm:$0xf] %vm7078, %v7038
      %7104 = vst.msk [vmem:[%s359 + $0x64] sm:$0xf] %vm7078, %v7039
      %7105 = vst.msk [vmem:[%s359 + $0x68] sm:$0xf] %vm7078, %v7040
      %7106 = vst.msk [vmem:[%s359 + $0x6c] sm:$0xf] %vm7078, %v7041
      %7107 = vst.msk [vmem:[%s359 + $0x70] sm:$0xf] %vm7078, %v7042
      %7108 = vst.msk [vmem:[%s359 + $0x74] sm:$0xf] %vm7078, %v7043
      %7109 = vst.msk [vmem:[%s359 + $0x78] sm:$0xf] %vm7078, %v7044
      %7110 = vst.msk [vmem:[%s359 + $0x7c] sm:$0xf] %vm7078, %v7045
      %p7111 = scmp.lt.s32.totalorder %s21, 1
      %s7112 = scalar_select %p7111, %s21, 1
      %s7113 = smul.addr %s7112, 32
      %s7114 = smul.addr %s7113, 4
      %s7115 = scalar_lea.vmem %s10, %s7114
      // Predicated region
      $region61: #{bottleneck_forward.1} parent=59 // pred_check
        %p7116 = pneg %p254
      $region62: #{bottleneck_forward.1} parent=59 // pred_check_branch
        %7118 = sbr.rel (%p7116) target = $region64
      $region63: #{bottleneck_forward.1} parent=59 // pred_region
        _
      $region64: #{bottleneck_forward.1} parent=59 // pred_fallthru
        _
    $region60: #{bottleneck_forward.1} parent=5 // pred_fallthru
      _
    %p7119 = scmp.le.s32.totalorder 2, %s16
    // Predicated region
    $region65: #{bottleneck_forward.1} parent=5 // pred_check
      %p7120 = pneg %p7119
    $region66: #{bottleneck_forward.1} parent=5 // pred_check_branch
      %7122 = sbr.rel (%p7120) target = $region68
    $region67: #{bottleneck_forward.1} parent=5 // pred_region
      %s7123 = ssub.s32 %s16, 2
      // Predicated region
      $region69: #{bottleneck_forward.1} parent=67 // pred_check
        %p7124 = pneg %p260
      $region70: #{bottleneck_forward.1} parent=67 // pred_check_branch
        %7126 = sbr.rel (%p7124) target = $region72
      $region71: #{bottleneck_forward.1} parent=67 // pred_region
        %p7127 = scmp.lt.s32.totalorder %s22, 1
        %s7128 = scalar_select %p7127, %s22, 1
        %s7129 = smul.addr %s7128, 32
        %s7130 = smul.addr %s7129, 4
        %s7131 = scalar_lea.vmem %s10, %s7130
      $region72: #{bottleneck_forward.1} parent=67 // pred_fallthru
        _
    $region68: #{bottleneck_forward.1} parent=5 // pred_fallthru
      _
  $region6: #{bottleneck_forward.1} parent=0 // loop_footer
    %s20 = sadd.s32 1, %s16
  $region7: #{bottleneck_forward.1} parent=0 // loop_footer_branch
    %15 = sbr.rel target = $region3
  $region8: #{bottleneck_forward.1} parent=0 // loop_exit
    _

</llo_original>
